<compile_context>
chip_gen: v7x
topology: tpu7x:2x2x1
jax: 0.10.0
libtpu: 0.0.40
codegen_flags: <defaults>
</compile_context>

<pallas_src>
import math
import functools

import jax
import jax.numpy as jnp
from jax import lax
from jax.experimental import pallas as pl
from jax.experimental.pallas import tpu as pltpu

BN_EPS = 1e-5

# Left halo offset inside the VMEM padded scratches.  16 is a multiple of the
# bf16 sublane tile, so the interior scratch stores start tile-aligned.
_PADL = 16


# ----------------------------------------------------------------------------
# Fused BasicBlock kernel
# ----------------------------------------------------------------------------
def _make_fused_block_kernel(*, H, W, Cin, Cmid, Cout, stride, has_ds):
    """Builds the fused kernel body for one image per grid step.

    refs = (x-inputs..., w1_9, b1, w2_9, b2, [ds_w, ds_b], out, scratch...)
      stride==1 : x-inputs = (x,)                 (1, H, W, Cin)       bf16
                  scratch  = (xpad, apad)         VMEM, zero-padded copies
      stride==2 : x-inputs = 4 space-to-depth phases of the padded input
                  scratch  = (apad,)
      w1_9 : (9, Cin, Cmid) bf16 (BN1 scale folded in);  b1 : (1, Cmid) f32
      w2_9 : (9, Cmid, Cout) bf16 (BN2 scale folded in); b2 : (1, Cout) f32
      ds_w : (Cin, Cout) bf16; ds_b : (1, Cout) f32      (optional)
      out  : (1, Ho*Wo, Cout) bf16   (row-major identical to NHWC)
    """
    Ho = (H - 1) // stride + 1
    Wo = (W - 1) // stride + 1
    n_x = 1 if stride == 1 else 4

    def kernel(*refs):
        i = 0
        x_refs = refs[i:i + n_x]; i += n_x
        w1_ref = refs[i]; i += 1
        b1_ref = refs[i]; i += 1
        w2_ref = refs[i]; i += 1
        b2_ref = refs[i]; i += 1
        if has_ds:
            dsw_ref = refs[i]; i += 1
            dsb_ref = refs[i]; i += 1
        o_ref = refs[i]; i += 1
        scratch = refs[i:]
        if stride == 1:
            xpad_ref, apad_ref = scratch
        else:
            (apad_ref,) = scratch

        phases = None

        # ------------------------------------------------------------------
        # conv1 (3x3, stride s, pad 1) + folded-BN bias + ReLU  — implicit GEMM
        # ------------------------------------------------------------------
        if stride == 1:
            xv = x_refs[0][0]                                  # (H, W, Cin) bf16
            # In-VMEM zero padding: zero the scratch (cheap, megacore-safe),
            # then store the interior at a tile-aligned sublane offset.
            xpad_ref[...] = jnp.zeros_like(xpad_ref)
            xpad_ref[1:H + 1, _PADL:_PADL + W, :] = xv
            xp = xpad_ref[...]
            taps1 = [xp[dy:dy + Ho, _PADL - 1 + dx:_PADL - 1 + dx + Wo, :]
                     for dy in range(3) for dx in range(3)]
        else:
            # 4 space-to-depth phases of the padded input: every tap slice is
            # unit-stride.
            phases = [x_refs[p][0] for p in range(4)]          # (Ho+1, Wo+1, Cin)
            taps1 = [phases[2 * (dy % 2) + (dx % 2)]
                     [dy // 2:dy // 2 + Ho, dx // 2:dx // 2 + Wo, :]
                     for dy in range(3) for dx in range(3)]

        # Hoist slice/reshape work above the dot chain so the 9 tap matmuls
        # accumulate back-to-back into one f32 accumulator (v7x MRB friendly).
        taps1 = [t.reshape(Ho * Wo, Cin) for t in taps1]
        acc1 = jnp.dot(taps1[0], w1_ref[0], preferred_element_type=jnp.float32)
        for t in range(1, 9):
            acc1 = acc1 + jnp.dot(taps1[t], w1_ref[t],
                                  preferred_element_type=jnp.float32)
        a1 = jnp.maximum(acc1 + b1_ref[...], 0.0).astype(jnp.bfloat16)

        # ------------------------------------------------------------------
        # residual path (fused 1x1 conv + folded BN, or identity)
        # ------------------------------------------------------------------
        if has_ds:
            if stride == 1:
                xs = x_refs[0][0].reshape(H * W, Cin)
            else:
                # phase (1,1) of the padded input is exactly x[::2, ::2, :]
                xs = phases[3][0:Ho, 0:Wo, :].reshape(Ho * Wo, Cin)
            res = jnp.dot(xs, dsw_ref[...], preferred_element_type=jnp.float32)
            res = res + dsb_ref[...]
        else:
            res = x_refs[0][0].reshape(Ho * Wo, Cout).astype(jnp.float32)

        # ------------------------------------------------------------------
        # conv2 (3x3, stride 1, pad 1) + bn2 + residual + ReLU
        # conv1 activation stays in VMEM (zero-padded scratch) — no HBM trip.
        # ------------------------------------------------------------------
        apad_ref[...] = jnp.zeros_like(apad_ref)
        apad_ref[1:Ho + 1, _PADL:_PADL + Wo, :] = a1.reshape(Ho, Wo, Cmid)
        ap = apad_ref[...]
        taps2 = [ap[dy:dy + Ho, _PADL - 1 + dx:_PADL - 1 + dx + Wo, :]
                 .reshape(Ho * Wo, Cmid)
                 for dy in range(3) for dx in range(3)]
        acc2 = jnp.dot(taps2[0], w2_ref[0], preferred_element_type=jnp.float32)
        for t in range(1, 9):
            acc2 = acc2 + jnp.dot(taps2[t], w2_ref[t],
                                  preferred_element_type=jnp.float32)
        out = jnp.maximum(acc2 + b2_ref[...] + res, 0.0)

        # TODO(synk): lane-dense (Ho, Wo*Cout) output packing for Cout < 128.
        o_ref[0] = out.astype(o_ref.dtype)

    return kernel


# ----------------------------------------------------------------------------
# Wrapper: one fused pallas_call per BasicBlock
# ----------------------------------------------------------------------------
def basic_block_pallas(x, params):
    """x: (N, H, W, Cin) bf16 NHWC.  Mirrors PyTorch BasicBlock.forward."""
    N, H, W, Cin = x.shape
    stride = params['stride']
    w1 = params['conv1_w']
    w2 = params['conv2_w']
    Cmid = w1.shape[-1]
    Cout = w2.shape[-1]
    has_ds = params['ds_w'] is not None
    Ho = (H - 1) // stride + 1
    Wo = (W - 1) // stride + 1

    w1_9 = w1.reshape(9, Cin, Cmid)
    w2_9 = w2.reshape(9, Cmid, Cout)
    b1 = params['conv1_b'].reshape(1, Cmid).astype(jnp.float32)
    b2 = params['conv2_b'].reshape(1, Cout).astype(jnp.float32)

    args, in_specs = [], []
    if stride == 1:
        args.append(x)
        in_specs.append(pl.BlockSpec((1, H, W, Cin), lambda n: (n, 0, 0, 0)))
        scratch_shapes = [
            pltpu.VMEM((H + 2, W + 2 * _PADL, Cin), jnp.bfloat16),     # xpad
            pltpu.VMEM((Ho + 2, Wo + 2 * _PADL, Cmid), jnp.bfloat16),  # apad
        ]
    elif stride == 2:
        # 1-px halo + space-to-depth phase split (total bytes ~= input bytes);
        # every in-kernel tap slice is unit-stride and phase (1,1) doubles as
        # the 1x1 downsample input (no separate strided gather / extra call).
        # TODO(synk): move the pad + phase split in-kernel (strided VMEM reads)
        # to drop the remaining HBM-side gather for the stride-2 path.
        xp = jnp.pad(x, ((0, 0), (1, 1), (1, 1), (0, 0)))
        for p in (0, 1):
            for q in (0, 1):
                ph = xp[:, p::2, q::2, :]
                args.append(ph)
                in_specs.append(pl.BlockSpec((1,) + tuple(ph.shape[1:]),
                                             lambda n: (n, 0, 0, 0)))
        scratch_shapes = [
            pltpu.VMEM((Ho + 2, Wo + 2 * _PADL, Cmid), jnp.bfloat16),  # apad
        ]
    else:
        raise NotImplementedError("basic_block_pallas supports stride 1 or 2")

    args += [w1_9, b1, w2_9, b2]
    in_specs += [
        pl.BlockSpec((9, Cin, Cmid), lambda n: (0, 0, 0)),
        pl.BlockSpec((1, Cmid), lambda n: (0, 0)),
        pl.BlockSpec((9, Cmid, Cout), lambda n: (0, 0, 0)),
        pl.BlockSpec((1, Cout), lambda n: (0, 0)),
    ]
    if has_ds:
        dsw = params['ds_w'].reshape(Cin, Cout)
        dsb = params['ds_b'].reshape(1, Cout).astype(jnp.float32)
        args += [dsw, dsb]
        in_specs += [pl.BlockSpec((Cin, Cout), lambda n: (0, 0)),
                     pl.BlockSpec((1, Cout), lambda n: (0, 0))]

    kernel = _make_fused_block_kernel(H=H, W=W, Cin=Cin, Cmid=Cmid, Cout=Cout,
                                      stride=stride, has_ds=has_ds)

    flops = 2 * N * Ho * Wo * (9 * Cin * Cmid + 9 * Cmid * Cout
                               + (Cin * Cout if has_ds else 0))
    bytes_accessed = sum(int(a.size) * a.dtype.itemsize for a in args)
    bytes_accessed += N * Ho * Wo * Cout * 2

    out = pl.pallas_call(
        kernel,
        out_shape=jax.ShapeDtypeStruct((N, Ho * Wo, Cout), jnp.bfloat16),
        grid=(N,),
        in_specs=in_specs,
        out_specs=pl.BlockSpec((1, Ho * Wo, Cout), lambda n: (n, 0, 0)),
        scratch_shapes=scratch_shapes,
        compiler_params=pltpu.CompilerParams(
            dimension_semantics=("parallel",)),
        cost_estimate=pl.CostEstimate(flops=int(flops), transcendentals=0,
                                      bytes_accessed=int(bytes_accessed)),
    )(*args)

    # (N, Ho*Wo, Cout) is row-major identical to NHWC — free layout reshape.
    return out.reshape(N, Ho, Wo, Cout)


# ----------------------------------------------------------------------------
# Pure-JAX reference (mirrors the kernel's bf16 storage points)
# ----------------------------------------------------------------------------
def basic_block_ref(x, params):
    f32 = jnp.float32

    def conv(inp, w, stride, pad):
        return lax.conv_general_dilated(
            inp, w.astype(f32), (stride, stride), ((pad, pad), (pad, pad)),
            dimension_numbers=('NHWC', 'HWIO', 'NHWC'),
            precision=lax.Precision.HIGHEST)

    s = params['stride']
    xf = x.astype(f32)

    out = conv(xf, params['conv1_w'], s, 1) + params['conv1_b']
    out = jnp.maximum(out, 0.0)
    out = out.astype(jnp.bfloat16).astype(f32)   # conv1 act held as bf16 in VMEM

    if params['ds_w'] is not None:
        ident = conv(xf, params['ds_w'], s, 0) + params['ds_b']  # stays f32 (fused)
    else:
        ident = xf

    out = conv(out, params['conv2_w'], 1, 1) + params['conv2_b']
    out = jnp.maximum(out + ident, 0.0)
    return out.astype(jnp.bfloat16)


# ----------------------------------------------------------------------------
# Parameter construction (BN scale folded into bf16 conv weights host-side)
# ----------------------------------------------------------------------------
def _conv_w(key, kh, kw, cin, cout):
    std = math.sqrt(2.0 / (kh * kw * cout))
    return std * jax.random.normal(key, (kh, kw, cin, cout), jnp.float32)


def _bn_fold(key, c):
    k1, k2, k3, k4 = jax.random.split(key, 4)
    gamma = 1.0 + 0.1 * jax.random.normal(k1, (c,), jnp.float32)
    beta = 0.1 * jax.random.normal(k2, (c,), jnp.float32)
    mean = 0.1 * jax.random.normal(k3, (c,), jnp.float32)
    var = 1.0 + 0.1 * jax.random.uniform(k4, (c,), jnp.float32)
    scale = gamma * lax.rsqrt(var + BN_EPS)
    return scale, beta - mean * scale


def make_basic_block_params(key, inplanes, planes, stride, use_downsample):
    ks = jax.random.split(key, 6)
    w1 = _conv_w(ks[0], 3, 3, inplanes, planes)
    s1, b1 = _bn_fold(ks[1], planes)
    w2 = _conv_w(ks[2], 3, 3, planes, planes)
    s2, b2 = _bn_fold(ks[3], planes)
    params = {
        'stride': stride,
        'conv1_w': (w1 * s1).astype(jnp.bfloat16), 'conv1_b': b1,
        'conv2_w': (w2 * s2).astype(jnp.bfloat16), 'conv2_b': b2,
        'ds_w': None, 'ds_b': None,
    }
    if use_downsample:
        wd = _conv_w(ks[4], 1, 1, inplanes, planes)
        sd, bd = _bn_fold(ks[5], planes)
        params['ds_w'] = (wd * sd).astype(jnp.bfloat16)
        params['ds_b'] = bd
    return params


# ----------------------------------------------------------------------------
# Main
# ----------------------------------------------------------------------------
if __name__ == "__main__":
    key = jax.random.PRNGKey(0)

    configs = [
        # (batch, spatial, inplanes, planes, stride, downsample)
        dict(batch=2, spatial=16, inplanes=64, planes=128, stride=2, ds=True),
        dict(batch=2, spatial=16, inplanes=64, planes=64, stride=1, ds=False),
    ]

    for cfg in configs:
        key, kx, kp = jax.random.split(key, 3)
        params = make_basic_block_params(kp, cfg['inplanes'], cfg['planes'],
                                         cfg['stride'], cfg['ds'])

        # PyTorch-style NCHW input -> NHWC bf16 at the boundary.
        x_nchw = jax.random.normal(
            kx, (cfg['batch'], cfg['inplanes'], cfg['spatial'], cfg['spatial']),
            jnp.float32)
        x = jnp.transpose(x_nchw, (0, 2, 3, 1)).astype(jnp.bfloat16)

        fwd = jax.jit(functools.partial(basic_block_pallas, params=params))
        out = fwd(x)
        jax.block_until_ready(out)

        Ho = (cfg['spatial'] - 1) // cfg['stride'] + 1
        assert out.shape == (cfg['batch'], Ho, Ho, cfg['planes']), out.shape

        ref = basic_block_ref(x, params)
        ok = jnp.allclose(out.astype(jnp.float32), ref.astype(jnp.float32),
                          rtol=5e-2, atol=5e-2)
        assert bool(ok), "Pallas BasicBlock output mismatch vs JAX reference"

    print("KERNEL_OK")
</pallas_src>

<mosaic_0001>
module attributes {stable_mosaic.version = 11 : i64} {
  func.func @kernel(%arg0: i32, %arg1: memref<1x9x9x64xbf16, #tpu.memory_space<vmem>>, %arg2: memref<1x9x9x64xbf16, #tpu.memory_space<vmem>>, %arg3: memref<1x9x9x64xbf16, #tpu.memory_space<vmem>>, %arg4: memref<1x9x9x64xbf16, #tpu.memory_space<vmem>>, %arg5: memref<9x64x128xbf16, #tpu.memory_space<vmem>>, %arg6: memref<1x128xf32, #tpu.memory_space<vmem>>, %arg7: memref<9x128x128xbf16, #tpu.memory_space<vmem>>, %arg8: memref<1x128xf32, #tpu.memory_space<vmem>>, %arg9: memref<64x128xbf16, #tpu.memory_space<vmem>>, %arg10: memref<1x128xf32, #tpu.memory_space<vmem>>, %arg11: memref<1x64x128xbf16, #tpu.memory_space<vmem>>, %arg12: memref<10x40x128xbf16, #tpu.memory_space<vmem>>) attributes {dimension_semantics = [#tpu.dimension_semantics<parallel>], iteration_bounds = array<i64: 2>, scalar_prefetch = 0 : i64, scratch_operands = 1 : i64, tpu.core_type = #tpu.core_type<tc>, window_params = [{transform_indices = @transform_0, window_bounds = array<i64: 1, 9, 9, 64>}, {transform_indices = @transform_1, window_bounds = array<i64: 1, 9, 9, 64>}, {transform_indices = @transform_2, window_bounds = array<i64: 1, 9, 9, 64>}, {transform_indices = @transform_3, window_bounds = array<i64: 1, 9, 9, 64>}, {pipeline_mode = #tpu.pipeline_mode<synchronous>, transform_indices = @transform_4, window_bounds = array<i64: 9, 64, 128>}, {pipeline_mode = #tpu.pipeline_mode<synchronous>, transform_indices = @transform_5, window_bounds = array<i64: 1, 128>}, {pipeline_mode = #tpu.pipeline_mode<synchronous>, transform_indices = @transform_6, window_bounds = array<i64: 9, 128, 128>}, {pipeline_mode = #tpu.pipeline_mode<synchronous>, transform_indices = @transform_7, window_bounds = array<i64: 1, 128>}, {pipeline_mode = #tpu.pipeline_mode<synchronous>, transform_indices = @transform_8, window_bounds = array<i64: 64, 128>}, {pipeline_mode = #tpu.pipeline_mode<synchronous>, transform_indices = @transform_9, window_bounds = array<i64: 1, 128>}, {transform_indices = @transform_10, window_bounds = array<i64: 1, 64, 128>}]} {
    %c0 = arith.constant 0 : index
    %c0_0 = arith.constant 0 : index
    %c0_1 = arith.constant 0 : index
    %c0_2 = arith.constant 0 : index
    %0 = vector.load %arg1[%c0, %c0_0, %c0_1, %c0_2] : memref<1x9x9x64xbf16, #tpu.memory_space<vmem>>, vector<1x9x9x64xbf16>
    %1 = vector.shape_cast %0 : vector<1x9x9x64xbf16> to vector<9x9x64xbf16>
    %c0_3 = arith.constant 0 : index
    %c0_4 = arith.constant 0 : index
    %c0_5 = arith.constant 0 : index
    %c0_6 = arith.constant 0 : index
    %2 = vector.load %arg2[%c0_3, %c0_4, %c0_5, %c0_6] : memref<1x9x9x64xbf16, #tpu.memory_space<vmem>>, vector<1x9x9x64xbf16>
    %3 = vector.shape_cast %2 : vector<1x9x9x64xbf16> to vector<9x9x64xbf16>
    %c0_7 = arith.constant 0 : index
    %c0_8 = arith.constant 0 : index
    %c0_9 = arith.constant 0 : index
    %c0_10 = arith.constant 0 : index
    %4 = vector.load %arg3[%c0_7, %c0_8, %c0_9, %c0_10] : memref<1x9x9x64xbf16, #tpu.memory_space<vmem>>, vector<1x9x9x64xbf16>
    %5 = vector.shape_cast %4 : vector<1x9x9x64xbf16> to vector<9x9x64xbf16>
    %c0_11 = arith.constant 0 : index
    %c0_12 = arith.constant 0 : index
    %c0_13 = arith.constant 0 : index
    %c0_14 = arith.constant 0 : index
    %6 = vector.load %arg4[%c0_11, %c0_12, %c0_13, %c0_14] : memref<1x9x9x64xbf16, #tpu.memory_space<vmem>>, vector<1x9x9x64xbf16>
    %7 = vector.shape_cast %6 : vector<1x9x9x64xbf16> to vector<9x9x64xbf16>
    %8 = vector.extract_strided_slice %1 {offsets = [0, 0, 0], sizes = [8, 8, 64], strides = [1, 1, 1]} : vector<9x9x64xbf16> to vector<8x8x64xbf16>
    %9 = vector.extract_strided_slice %3 {offsets = [0, 0, 0], sizes = [8, 8, 64], strides = [1, 1, 1]} : vector<9x9x64xbf16> to vector<8x8x64xbf16>
    %10 = vector.extract_strided_slice %1 {offsets = [0, 1, 0], sizes = [8, 8, 64], strides = [1, 1, 1]} : vector<9x9x64xbf16> to vector<8x8x64xbf16>
    %11 = vector.extract_strided_slice %5 {offsets = [0, 0, 0], sizes = [8, 8, 64], strides = [1, 1, 1]} : vector<9x9x64xbf16> to vector<8x8x64xbf16>
    %12 = vector.extract_strided_slice %7 {offsets = [0, 0, 0], sizes = [8, 8, 64], strides = [1, 1, 1]} : vector<9x9x64xbf16> to vector<8x8x64xbf16>
    %13 = vector.extract_strided_slice %5 {offsets = [0, 1, 0], sizes = [8, 8, 64], strides = [1, 1, 1]} : vector<9x9x64xbf16> to vector<8x8x64xbf16>
    %14 = vector.extract_strided_slice %1 {offsets = [1, 0, 0], sizes = [8, 8, 64], strides = [1, 1, 1]} : vector<9x9x64xbf16> to vector<8x8x64xbf16>
    %15 = vector.extract_strided_slice %3 {offsets = [1, 0, 0], sizes = [8, 8, 64], strides = [1, 1, 1]} : vector<9x9x64xbf16> to vector<8x8x64xbf16>
    %16 = vector.extract_strided_slice %1 {offsets = [1, 1, 0], sizes = [8, 8, 64], strides = [1, 1, 1]} : vector<9x9x64xbf16> to vector<8x8x64xbf16>
    %17 = vector.shape_cast %8 : vector<8x8x64xbf16> to vector<64x64xbf16>
    %18 = vector.shape_cast %9 : vector<8x8x64xbf16> to vector<64x64xbf16>
    %19 = vector.shape_cast %10 : vector<8x8x64xbf16> to vector<64x64xbf16>
    %20 = vector.shape_cast %11 : vector<8x8x64xbf16> to vector<64x64xbf16>
    %21 = vector.shape_cast %12 : vector<8x8x64xbf16> to vector<64x64xbf16>
    %22 = vector.shape_cast %13 : vector<8x8x64xbf16> to vector<64x64xbf16>
    %23 = vector.shape_cast %14 : vector<8x8x64xbf16> to vector<64x64xbf16>
    %24 = vector.shape_cast %15 : vector<8x8x64xbf16> to vector<64x64xbf16>
    %25 = vector.shape_cast %16 : vector<8x8x64xbf16> to vector<64x64xbf16>
    %c0_15 = arith.constant 0 : index
    %c0_16 = arith.constant 0 : index
    %c0_17 = arith.constant 0 : index
    %26 = vector.load %arg5[%c0_15, %c0_16, %c0_17] : memref<9x64x128xbf16, #tpu.memory_space<vmem>>, vector<1x64x128xbf16>
    %27 = vector.shape_cast %26 : vector<1x64x128xbf16> to vector<64x128xbf16>
    %cst = arith.constant dense<0.000000e+00> : vector<64x128xf32>
    %28 = tpu.matmul %17, %27, %cst {dimension_numbers = #tpu.dot_dimension_numbers<[1], [0], [0], [1], [0, 0, 1, 1], [], []>} : vector<64x64xbf16>, vector<64x128xbf16>, vector<64x128xf32> -> vector<64x128xf32>
    %c1 = arith.constant 1 : index
    %c0_18 = arith.constant 0 : index
    %c0_19 = arith.constant 0 : index
    %29 = vector.load %arg5[%c1, %c0_18, %c0_19] : memref<9x64x128xbf16, #tpu.memory_space<vmem>>, vector<1x64x128xbf16>
    %30 = vector.shape_cast %29 : vector<1x64x128xbf16> to vector<64x128xbf16>
    %cst_20 = arith.constant dense<0.000000e+00> : vector<64x128xf32>
    %31 = tpu.matmul %18, %30, %cst_20 {dimension_numbers = #tpu.dot_dimension_numbers<[1], [0], [0], [1], [0, 0, 1, 1], [], []>} : vector<64x64xbf16>, vector<64x128xbf16>, vector<64x128xf32> -> vector<64x128xf32>
    %32 = arith.addf %28, %31 : vector<64x128xf32>
    %c2 = arith.constant 2 : index
    %c0_21 = arith.constant 0 : index
    %c0_22 = arith.constant 0 : index
    %33 = vector.load %arg5[%c2, %c0_21, %c0_22] : memref<9x64x128xbf16, #tpu.memory_space<vmem>>, vector<1x64x128xbf16>
    %34 = vector.shape_cast %33 : vector<1x64x128xbf16> to vector<64x128xbf16>
    %cst_23 = arith.constant dense<0.000000e+00> : vector<64x128xf32>
    %35 = tpu.matmul %19, %34, %cst_23 {dimension_numbers = #tpu.dot_dimension_numbers<[1], [0], [0], [1], [0, 0, 1, 1], [], []>} : vector<64x64xbf16>, vector<64x128xbf16>, vector<64x128xf32> -> vector<64x128xf32>
    %36 = arith.addf %32, %35 : vector<64x128xf32>
    %c3 = arith.constant 3 : index
    %c0_24 = arith.constant 0 : index
    %c0_25 = arith.constant 0 : index
    %37 = vector.load %arg5[%c3, %c0_24, %c0_25] : memref<9x64x128xbf16, #tpu.memory_space<vmem>>, vector<1x64x128xbf16>
    %38 = vector.shape_cast %37 : vector<1x64x128xbf16> to vector<64x128xbf16>
    %cst_26 = arith.constant dense<0.000000e+00> : vector<64x128xf32>
    %39 = tpu.matmul %20, %38, %cst_26 {dimension_numbers = #tpu.dot_dimension_numbers<[1], [0], [0], [1], [0, 0, 1, 1], [], []>} : vector<64x64xbf16>, vector<64x128xbf16>, vector<64x128xf32> -> vector<64x128xf32>
    %40 = arith.addf %36, %39 : vector<64x128xf32>
    %c4 = arith.constant 4 : index
    %c0_27 = arith.constant 0 : index
    %c0_28 = arith.constant 0 : index
    %41 = vector.load %arg5[%c4, %c0_27, %c0_28] : memref<9x64x128xbf16, #tpu.memory_space<vmem>>, vector<1x64x128xbf16>
    %42 = vector.shape_cast %41 : vector<1x64x128xbf16> to vector<64x128xbf16>
    %cst_29 = arith.constant dense<0.000000e+00> : vector<64x128xf32>
    %43 = tpu.matmul %21, %42, %cst_29 {dimension_numbers = #tpu.dot_dimension_numbers<[1], [0], [0], [1], [0, 0, 1, 1], [], []>} : vector<64x64xbf16>, vector<64x128xbf16>, vector<64x128xf32> -> vector<64x128xf32>
    %44 = arith.addf %40, %43 : vector<64x128xf32>
    %c5 = arith.constant 5 : index
    %c0_30 = arith.constant 0 : index
    %c0_31 = arith.constant 0 : index
    %45 = vector.load %arg5[%c5, %c0_30, %c0_31] : memref<9x64x128xbf16, #tpu.memory_space<vmem>>, vector<1x64x128xbf16>
    %46 = vector.shape_cast %45 : vector<1x64x128xbf16> to vector<64x128xbf16>
    %cst_32 = arith.constant dense<0.000000e+00> : vector<64x128xf32>
    %47 = tpu.matmul %22, %46, %cst_32 {dimension_numbers = #tpu.dot_dimension_numbers<[1], [0], [0], [1], [0, 0, 1, 1], [], []>} : vector<64x64xbf16>, vector<64x128xbf16>, vector<64x128xf32> -> vector<64x128xf32>
    %48 = arith.addf %44, %47 : vector<64x128xf32>
    %c6 = arith.constant 6 : index
    %c0_33 = arith.constant 0 : index
    %c0_34 = arith.constant 0 : index
    %49 = vector.load %arg5[%c6, %c0_33, %c0_34] : memref<9x64x128xbf16, #tpu.memory_space<vmem>>, vector<1x64x128xbf16>
    %50 = vector.shape_cast %49 : vector<1x64x128xbf16> to vector<64x128xbf16>
    %cst_35 = arith.constant dense<0.000000e+00> : vector<64x128xf32>
    %51 = tpu.matmul %23, %50, %cst_35 {dimension_numbers = #tpu.dot_dimension_numbers<[1], [0], [0], [1], [0, 0, 1, 1], [], []>} : vector<64x64xbf16>, vector<64x128xbf16>, vector<64x128xf32> -> vector<64x128xf32>
    %52 = arith.addf %48, %51 : vector<64x128xf32>
    %c7 = arith.constant 7 : index
    %c0_36 = arith.constant 0 : index
    %c0_37 = arith.constant 0 : index
    %53 = vector.load %arg5[%c7, %c0_36, %c0_37] : memref<9x64x128xbf16, #tpu.memory_space<vmem>>, vector<1x64x128xbf16>
    %54 = vector.shape_cast %53 : vector<1x64x128xbf16> to vector<64x128xbf16>
    %cst_38 = arith.constant dense<0.000000e+00> : vector<64x128xf32>
    %55 = tpu.matmul %24, %54, %cst_38 {dimension_numbers = #tpu.dot_dimension_numbers<[1], [0], [0], [1], [0, 0, 1, 1], [], []>} : vector<64x64xbf16>, vector<64x128xbf16>, vector<64x128xf32> -> vector<64x128xf32>
    %56 = arith.addf %52, %55 : vector<64x128xf32>
    %c8 = arith.constant 8 : index
    %c0_39 = arith.constant 0 : index
    %c0_40 = arith.constant 0 : index
    %57 = vector.load %arg5[%c8, %c0_39, %c0_40] : memref<9x64x128xbf16, #tpu.memory_space<vmem>>, vector<1x64x128xbf16>
    %58 = vector.shape_cast %57 : vector<1x64x128xbf16> to vector<64x128xbf16>
    %cst_41 = arith.constant dense<0.000000e+00> : vector<64x128xf32>
    %59 = tpu.matmul %25, %58, %cst_41 {dimension_numbers = #tpu.dot_dimension_numbers<[1], [0], [0], [1], [0, 0, 1, 1], [], []>} : vector<64x64xbf16>, vector<64x128xbf16>, vector<64x128xf32> -> vector<64x128xf32>
    %60 = arith.addf %56, %59 : vector<64x128xf32>
    %c0_42 = arith.constant 0 : index
    %c0_43 = arith.constant 0 : index
    %61 = vector.load %arg6[%c0_42, %c0_43] : memref<1x128xf32, #tpu.memory_space<vmem>>, vector<1x128xf32>
    %62 = vector.broadcast %61 : vector<1x128xf32> to vector<64x128xf32>
    %63 = arith.addf %60, %62 : vector<64x128xf32>
    %cst_44 = arith.constant 0.000000e+00 : f32
    %64 = vector.broadcast %cst_44 : f32 to vector<64x128xf32>
    %65 = arith.maximumf %63, %64 : vector<64x128xf32>
    %66 = arith.truncf %65 : vector<64x128xf32> to vector<64x128xbf16>
    %67 = vector.extract_strided_slice %7 {offsets = [0, 0, 0], sizes = [8, 8, 64], strides = [1, 1, 1]} : vector<9x9x64xbf16> to vector<8x8x64xbf16>
    %68 = vector.shape_cast %67 : vector<8x8x64xbf16> to vector<64x64xbf16>
    %c0_45 = arith.constant 0 : index
    %c0_46 = arith.constant 0 : index
    %69 = vector.load %arg9[%c0_45, %c0_46] : memref<64x128xbf16, #tpu.memory_space<vmem>>, vector<64x128xbf16>
    %cst_47 = arith.constant dense<0.000000e+00> : vector<64x128xf32>
    %70 = tpu.matmul %68, %69, %cst_47 {dimension_numbers = #tpu.dot_dimension_numbers<[1], [0], [0], [1], [0, 0, 1, 1], [], []>} : vector<64x64xbf16>, vector<64x128xbf16>, vector<64x128xf32> -> vector<64x128xf32>
    %c0_48 = arith.constant 0 : index
    %c0_49 = arith.constant 0 : index
    %71 = vector.load %arg10[%c0_48, %c0_49] : memref<1x128xf32, #tpu.memory_space<vmem>>, vector<1x128xf32>
    %72 = vector.broadcast %71 : vector<1x128xf32> to vector<64x128xf32>
    %73 = arith.addf %70, %72 : vector<64x128xf32>
    %cst_50 = arith.constant 0.000000e+00 : bf16
    %74 = vector.broadcast %cst_50 : bf16 to vector<10x40x128xbf16>
    %c0_51 = arith.constant 0 : index
    %c0_52 = arith.constant 0 : index
    %c0_53 = arith.constant 0 : index
    %75 = vector.load %arg12[%c0_51, %c0_52, %c0_53] : memref<10x40x128xbf16, #tpu.memory_space<vmem>>, vector<10x40x128xbf16>
    tpu.vector_store %arg12[%c0_51, %c0_52, %c0_53], %74 {strides = array<i32>} : memref<10x40x128xbf16, #tpu.memory_space<vmem>>, vector<10x40x128xbf16>,
    %76 = vector.shape_cast %66 : vector<64x128xbf16> to vector<8x8x128xbf16>
    %c1_54 = arith.constant 1 : index
    %c16 = arith.constant 16 : index
    %c0_55 = arith.constant 0 : index
    %77 = vector.load %arg12[%c1_54, %c16, %c0_55] : memref<10x40x128xbf16, #tpu.memory_space<vmem>>, vector<8x8x128xbf16>
    tpu.vector_store %arg12[%c1_54, %c16, %c0_55], %76 {strides = array<i32>} : memref<10x40x128xbf16, #tpu.memory_space<vmem>>, vector<8x8x128xbf16>,
    %c0_56 = arith.constant 0 : index
    %c0_57 = arith.constant 0 : index
    %c0_58 = arith.constant 0 : index
    %78 = vector.load %arg12[%c0_56, %c0_57, %c0_58] : memref<10x40x128xbf16, #tpu.memory_space<vmem>>, vector<10x40x128xbf16>
    %79 = vector.extract_strided_slice %78 {offsets = [0, 15, 0], sizes = [8, 8, 128], strides = [1, 1, 1]} : vector<10x40x128xbf16> to vector<8x8x128xbf16>
    %80 = vector.shape_cast %79 : vector<8x8x128xbf16> to vector<64x128xbf16>
    %81 = vector.extract_strided_slice %78 {offsets = [0, 16, 0], sizes = [8, 8, 128], strides = [1, 1, 1]} : vector<10x40x128xbf16> to vector<8x8x128xbf16>
    %82 = vector.shape_cast %81 : vector<8x8x128xbf16> to vector<64x128xbf16>
    %83 = vector.extract_strided_slice %78 {offsets = [0, 17, 0], sizes = [8, 8, 128], strides = [1, 1, 1]} : vector<10x40x128xbf16> to vector<8x8x128xbf16>
    %84 = vector.shape_cast %83 : vector<8x8x128xbf16> to vector<64x128xbf16>
    %85 = vector.extract_strided_slice %78 {offsets = [1, 15, 0], sizes = [8, 8, 128], strides = [1, 1, 1]} : vector<10x40x128xbf16> to vector<8x8x128xbf16>
    %86 = vector.shape_cast %85 : vector<8x8x128xbf16> to vector<64x128xbf16>
    %87 = vector.extract_strided_slice %78 {offsets = [1, 16, 0], sizes = [8, 8, 128], strides = [1, 1, 1]} : vector<10x40x128xbf16> to vector<8x8x128xbf16>
    %88 = vector.shape_cast %87 : vector<8x8x128xbf16> to vector<64x128xbf16>
    %89 = vector.extract_strided_slice %78 {offsets = [1, 17, 0], sizes = [8, 8, 128], strides = [1, 1, 1]} : vector<10x40x128xbf16> to vector<8x8x128xbf16>
    %90 = vector.shape_cast %89 : vector<8x8x128xbf16> to vector<64x128xbf16>
    %91 = vector.extract_strided_slice %78 {offsets = [2, 15, 0], sizes = [8, 8, 128], strides = [1, 1, 1]} : vector<10x40x128xbf16> to vector<8x8x128xbf16>
    %92 = vector.shape_cast %91 : vector<8x8x128xbf16> to vector<64x128xbf16>
    %93 = vector.extract_strided_slice %78 {offsets = [2, 16, 0], sizes = [8, 8, 128], strides = [1, 1, 1]} : vector<10x40x128xbf16> to vector<8x8x128xbf16>
    %94 = vector.shape_cast %93 : vector<8x8x128xbf16> to vector<64x128xbf16>
    %95 = vector.extract_strided_slice %78 {offsets = [2, 17, 0], sizes = [8, 8, 128], strides = [1, 1, 1]} : vector<10x40x128xbf16> to vector<8x8x128xbf16>
    %96 = vector.shape_cast %95 : vector<8x8x128xbf16> to vector<64x128xbf16>
    %c0_59 = arith.constant 0 : index
    %c0_60 = arith.constant 0 : index
    %c0_61 = arith.constant 0 : index
    %97 = vector.load %arg7[%c0_59, %c0_60, %c0_61] : memref<9x128x128xbf16, #tpu.memory_space<vmem>>, vector<1x128x128xbf16>
    %98 = vector.shape_cast %97 : vector<1x128x128xbf16> to vector<128x128xbf16>
    %cst_62 = arith.constant dense<0.000000e+00> : vector<64x128xf32>
    %99 = tpu.matmul %80, %98, %cst_62 {dimension_numbers = #tpu.dot_dimension_numbers<[1], [0], [0], [1], [0, 0, 1, 1], [], []>} : vector<64x128xbf16>, vector<128x128xbf16>, vector<64x128xf32> -> vector<64x128xf32>
    %c1_63 = arith.constant 1 : index
    %c0_64 = arith.constant 0 : index
    %c0_65 = arith.constant 0 : index
    %100 = vector.load %arg7[%c1_63, %c0_64, %c0_65] : memref<9x128x128xbf16, #tpu.memory_space<vmem>>, vector<1x128x128xbf16>
    %101 = vector.shape_cast %100 : vector<1x128x128xbf16> to vector<128x128xbf16>
    %cst_66 = arith.constant dense<0.000000e+00> : vector<64x128xf32>
    %102 = tpu.matmul %82, %101, %cst_66 {dimension_numbers = #tpu.dot_dimension_numbers<[1], [0], [0], [1], [0, 0, 1, 1], [], []>} : vector<64x128xbf16>, vector<128x128xbf16>, vector<64x128xf32> -> vector<64x128xf32>
    %103 = arith.addf %99, %102 : vector<64x128xf32>
    %c2_67 = arith.constant 2 : index
    %c0_68 = arith.constant 0 : index
    %c0_69 = arith.constant 0 : index
    %104 = vector.load %arg7[%c2_67, %c0_68, %c0_69] : memref<9x128x128xbf16, #tpu.memory_space<vmem>>, vector<1x128x128xbf16>
    %105 = vector.shape_cast %104 : vector<1x128x128xbf16> to vector<128x128xbf16>
    %cst_70 = arith.constant dense<0.000000e+00> : vector<64x128xf32>
    %106 = tpu.matmul %84, %105, %cst_70 {dimension_numbers = #tpu.dot_dimension_numbers<[1], [0], [0], [1], [0, 0, 1, 1], [], []>} : vector<64x128xbf16>, vector<128x128xbf16>, vector<64x128xf32> -> vector<64x128xf32>
    %107 = arith.addf %103, %106 : vector<64x128xf32>
    %c3_71 = arith.constant 3 : index
    %c0_72 = arith.constant 0 : index
    %c0_73 = arith.constant 0 : index
    %108 = vector.load %arg7[%c3_71, %c0_72, %c0_73] : memref<9x128x128xbf16, #tpu.memory_space<vmem>>, vector<1x128x128xbf16>
    %109 = vector.shape_cast %108 : vector<1x128x128xbf16> to vector<128x128xbf16>
    %cst_74 = arith.constant dense<0.000000e+00> : vector<64x128xf32>
    %110 = tpu.matmul %86, %109, %cst_74 {dimension_numbers = #tpu.dot_dimension_numbers<[1], [0], [0], [1], [0, 0, 1, 1], [], []>} : vector<64x128xbf16>, vector<128x128xbf16>, vector<64x128xf32> -> vector<64x128xf32>
    %111 = arith.addf %107, %110 : vector<64x128xf32>
    %c4_75 = arith.constant 4 : index
    %c0_76 = arith.constant 0 : index
    %c0_77 = arith.constant 0 : index
    %112 = vector.load %arg7[%c4_75, %c0_76, %c0_77] : memref<9x128x128xbf16, #tpu.memory_space<vmem>>, vector<1x128x128xbf16>
    %113 = vector.shape_cast %112 : vector<1x128x128xbf16> to vector<128x128xbf16>
    %cst_78 = arith.constant dense<0.000000e+00> : vector<64x128xf32>
    %114 = tpu.matmul %88, %113, %cst_78 {dimension_numbers = #tpu.dot_dimension_numbers<[1], [0], [0], [1], [0, 0, 1, 1], [], []>} : vector<64x128xbf16>, vector<128x128xbf16>, vector<64x128xf32> -> vector<64x128xf32>
    %115 = arith.addf %111, %114 : vector<64x128xf32>
    %c5_79 = arith.constant 5 : index
    %c0_80 = arith.constant 0 : index
    %c0_81 = arith.constant 0 : index
    %116 = vector.load %arg7[%c5_79, %c0_80, %c0_81] : memref<9x128x128xbf16, #tpu.memory_space<vmem>>, vector<1x128x128xbf16>
    %117 = vector.shape_cast %116 : vector<1x128x128xbf16> to vector<128x128xbf16>
    %cst_82 = arith.constant dense<0.000000e+00> : vector<64x128xf32>
    %118 = tpu.matmul %90, %117, %cst_82 {dimension_numbers = #tpu.dot_dimension_numbers<[1], [0], [0], [1], [0, 0, 1, 1], [], []>} : vector<64x128xbf16>, vector<128x128xbf16>, vector<64x128xf32> -> vector<64x128xf32>
    %119 = arith.addf %115, %118 : vector<64x128xf32>
    %c6_83 = arith.constant 6 : index
    %c0_84 = arith.constant 0 : index
    %c0_85 = arith.constant 0 : index
    %120 = vector.load %arg7[%c6_83, %c0_84, %c0_85] : memref<9x128x128xbf16, #tpu.memory_space<vmem>>, vector<1x128x128xbf16>
    %121 = vector.shape_cast %120 : vector<1x128x128xbf16> to vector<128x128xbf16>
    %cst_86 = arith.constant dense<0.000000e+00> : vector<64x128xf32>
    %122 = tpu.matmul %92, %121, %cst_86 {dimension_numbers = #tpu.dot_dimension_numbers<[1], [0], [0], [1], [0, 0, 1, 1], [], []>} : vector<64x128xbf16>, vector<128x128xbf16>, vector<64x128xf32> -> vector<64x128xf32>
    %123 = arith.addf %119, %122 : vector<64x128xf32>
    %c7_87 = arith.constant 7 : index
    %c0_88 = arith.constant 0 : index
    %c0_89 = arith.constant 0 : index
    %124 = vector.load %arg7[%c7_87, %c0_88, %c0_89] : memref<9x128x128xbf16, #tpu.memory_space<vmem>>, vector<1x128x128xbf16>
    %125 = vector.shape_cast %124 : vector<1x128x128xbf16> to vector<128x128xbf16>
    %cst_90 = arith.constant dense<0.000000e+00> : vector<64x128xf32>
    %126 = tpu.matmul %94, %125, %cst_90 {dimension_numbers = #tpu.dot_dimension_numbers<[1], [0], [0], [1], [0, 0, 1, 1], [], []>} : vector<64x128xbf16>, vector<128x128xbf16>, vector<64x128xf32> -> vector<64x128xf32>
    %127 = arith.addf %123, %126 : vector<64x128xf32>
    %c8_91 = arith.constant 8 : index
    %c0_92 = arith.constant 0 : index
    %c0_93 = arith.constant 0 : index
    %128 = vector.load %arg7[%c8_91, %c0_92, %c0_93] : memref<9x128x128xbf16, #tpu.memory_space<vmem>>, vector<1x128x128xbf16>
    %129 = vector.shape_cast %128 : vector<1x128x128xbf16> to vector<128x128xbf16>
    %cst_94 = arith.constant dense<0.000000e+00> : vector<64x128xf32>
    %130 = tpu.matmul %96, %129, %cst_94 {dimension_numbers = #tpu.dot_dimension_numbers<[1], [0], [0], [1], [0, 0, 1, 1], [], []>} : vector<64x128xbf16>, vector<128x128xbf16>, vector<64x128xf32> -> vector<64x128xf32>
    %131 = arith.addf %127, %130 : vector<64x128xf32>
    %c0_95 = arith.constant 0 : index
    %c0_96 = arith.constant 0 : index
    %132 = vector.load %arg8[%c0_95, %c0_96] : memref<1x128xf32, #tpu.memory_space<vmem>>, vector<1x128xf32>
    %133 = vector.broadcast %132 : vector<1x128xf32> to vector<64x128xf32>
    %134 = arith.addf %131, %133 : vector<64x128xf32>
    %135 = arith.addf %134, %73 : vector<64x128xf32>
    %cst_97 = arith.constant 0.000000e+00 : f32
    %136 = vector.broadcast %cst_97 : f32 to vector<64x128xf32>
    %137 = arith.maximumf %135, %136 : vector<64x128xf32>
    %138 = arith.truncf %137 : vector<64x128xf32> to vector<64x128xbf16>
    %c0_98 = arith.constant 0 : index
    %c0_99 = arith.constant 0 : index
    %c0_100 = arith.constant 0 : index
    %139 = vector.load %arg11[%c0_98, %c0_99, %c0_100] : memref<1x64x128xbf16, #tpu.memory_space<vmem>>, vector<1x64x128xbf16>
    %140 = vector.shape_cast %139 : vector<1x64x128xbf16> to vector<64x128xbf16>
    %141 = vector.shape_cast %138 : vector<64x128xbf16> to vector<1x64x128xbf16>
    tpu.vector_store %arg11[%c0_98, %c0_99, %c0_100], %141 {strides = array<i32>} : memref<1x64x128xbf16, #tpu.memory_space<vmem>>, vector<1x64x128xbf16>,
    return
  }
  func.func @transform_0(%arg0: i32) -> (i32, i32, i32, i32) {
    %c0_i32 = arith.constant 0 : i32
    %c0_i32_0 = arith.constant 0 : i32
    %c0_i32_1 = arith.constant 0 : i32
    %c0_i32_2 = arith.constant 0 : i32
    return %arg0, %c0_i32, %c0_i32_0, %c0_i32_1 : i32, i32, i32, i32
  }
  func.func @transform_1(%arg0: i32) -> (i32, i32, i32, i32) {
    %c0_i32 = arith.constant 0 : i32
    %c0_i32_0 = arith.constant 0 : i32
    %c0_i32_1 = arith.constant 0 : i32
    %c0_i32_2 = arith.constant 0 : i32
    return %arg0, %c0_i32, %c0_i32_0, %c0_i32_1 : i32, i32, i32, i32
  }
  func.func @transform_2(%arg0: i32) -> (i32, i32, i32, i32) {
    %c0_i32 = arith.constant 0 : i32
    %c0_i32_0 = arith.constant 0 : i32
    %c0_i32_1 = arith.constant 0 : i32
    %c0_i32_2 = arith.constant 0 : i32
    return %arg0, %c0_i32, %c0_i32_0, %c0_i32_1 : i32, i32, i32, i32
  }
  func.func @transform_3(%arg0: i32) -> (i32, i32, i32, i32) {
    %c0_i32 = arith.constant 0 : i32
    %c0_i32_0 = arith.constant 0 : i32
    %c0_i32_1 = arith.constant 0 : i32
    %c0_i32_2 = arith.constant 0 : i32
    return %arg0, %c0_i32, %c0_i32_0, %c0_i32_1 : i32, i32, i32, i32
  }
  func.func @transform_4(%arg0: i32) -> (i32, i32, i32) {
    %c0_i32 = arith.constant 0 : i32
    %c0_i32_0 = arith.constant 0 : i32
    %c0_i32_1 = arith.constant 0 : i32
    %c0_i32_2 = arith.constant 0 : i32
    return %c0_i32, %c0_i32_0, %c0_i32_1 : i32, i32, i32
  }
  func.func @transform_5(%arg0: i32) -> (i32, i32) {
    %c0_i32 = arith.constant 0 : i32
    %c0_i32_0 = arith.constant 0 : i32
    %c0_i32_1 = arith.constant 0 : i32
    return %c0_i32, %c0_i32_0 : i32, i32
  }
  func.func @transform_6(%arg0: i32) -> (i32, i32, i32) {
    %c0_i32 = arith.constant 0 : i32
    %c0_i32_0 = arith.constant 0 : i32
    %c0_i32_1 = arith.constant 0 : i32
    %c0_i32_2 = arith.constant 0 : i32
    return %c0_i32, %c0_i32_0, %c0_i32_1 : i32, i32, i32
  }
  func.func @transform_7(%arg0: i32) -> (i32, i32) {
    %c0_i32 = arith.constant 0 : i32
    %c0_i32_0 = arith.constant 0 : i32
    %c0_i32_1 = arith.constant 0 : i32
    return %c0_i32, %c0_i32_0 : i32, i32
  }
  func.func @transform_8(%arg0: i32) -> (i32, i32) {
    %c0_i32 = arith.constant 0 : i32
    %c0_i32_0 = arith.constant 0 : i32
    %c0_i32_1 = arith.constant 0 : i32
    return %c0_i32, %c0_i32_0 : i32, i32
  }
  func.func @transform_9(%arg0: i32) -> (i32, i32) {
    %c0_i32 = arith.constant 0 : i32
    %c0_i32_0 = arith.constant 0 : i32
    %c0_i32_1 = arith.constant 0 : i32
    return %c0_i32, %c0_i32_0 : i32, i32
  }
  func.func @transform_10(%arg0: i32) -> (i32, i32, i32) {
    %c0_i32 = arith.constant 0 : i32
    %c0_i32_0 = arith.constant 0 : i32
    %c0_i32_1 = arith.constant 0 : i32
    return %arg0, %c0_i32, %c0_i32_0 : i32, i32, i32
  }
}

</mosaic_0001>

<llo_original>
// kernel: basic_block_pallas.1
$region0: #{basic_block_pallas.1}
  #allocation0 [shape = 'u32[]', space=smem, size = 0x4, offset = 0x4, fixed_abs, tag = 'smem constant byte address 0x4 - core index']
  #allocation1 [shape = 'u32[144,128]{1,0:T(1,128)}', space=vmem, size = 0x12000, scoped, tag = 'internal scratch']
  #allocation2 [shape = 'bf16[10,40,128]{2,1,0:T(8,128)(2,1)}', space=vmem, size = 0x19000, scoped, tag = 'scratch operand']
  %s0 = inlined_call_operand.vmem [shape: bf16[2,9,9,64], index: 0, kind: input, shape index: {}]
  %s1 = inlined_call_operand.vmem [shape: bf16[2,9,9,64], index: 1, kind: input, shape index: {}]
  %s2 = inlined_call_operand.vmem [shape: bf16[2,9,9,64], index: 2, kind: input, shape index: {}]
  %s3 = inlined_call_operand.vmem [shape: bf16[2,9,9,64], index: 3, kind: input, shape index: {}]
  %s4 = inlined_call_operand.vmem [shape: bf16[9,64,128], index: 4, kind: input, shape index: {}]
  %s5 = inlined_call_operand.vmem [shape: f32[1,128], index: 5, kind: input, shape index: {}]
  %s6 = inlined_call_operand.vmem [shape: bf16[9,128,128], index: 6, kind: input, shape index: {}]
  %s7 = inlined_call_operand.vmem [shape: f32[1,128], index: 7, kind: input, shape index: {}]
  %s8 = inlined_call_operand.vmem [shape: bf16[64,128], index: 8, kind: input, shape index: {}]
  %s9 = inlined_call_operand.vmem [shape: f32[1,128], index: 9, kind: input, shape index: {}]
  %s10 = inlined_call_operand.hbm [shape: bf16[2,64,128], index: 10, kind: output, shape index: {}]
  %s11 = sld [smem:[#allocation0]]
  $region73: #{basic_block_pallas.1} parent=0
    _
  %s13 = ssub.s32 1, %s11
  %s14 = scalar_select 0, %s13, %s11
  $region1: #{basic_block_pallas.1} parent=0
    #allocation3 [shape = 'u8[32768]{0}', space=vmem, size = 0x8000, scoped, tag = 'output window, operand 0']
    #allocation4 [shape = 's32[2]{0}', space=sflag, size = 0x8, scoped, tag = 'scoped memory for basic_block_pallas.1']
    %15 = vsyncpa [#allocation4], 0
    %s16 = scalar_lea.sflag [#allocation4], 1
    %17 = vsyncpa %s16, 0
    loop: start=0, step=1, limit=4
    $region2: #{basic_block_pallas.1} parent=1 // loop_pre_header
      _
    $region3: #{basic_block_pallas.1} parent=1 // loop_header
      %s19 = sphi 0, %s23
      %p20 = scmp.ge.s32.totalorder %s19, 4
      %s29 = sphi 0, %s31
      %s32 = sphi 0, %s29
      %s33 = sphi 0, %s32
      %s49 = sphi 0, %s33
      %s55 = sphi 0, %s57
      %s58 = sphi 0, %s55
      %s59 = sphi 0, %s58
      %s75 = sphi 0, %s59
      %s81 = sphi 0, %s83
      %s84 = sphi 0, %s81
      %s85 = sphi 0, %s84
      %s101 = sphi 0, %s85
      %s107 = sphi 0, %s109
      %s110 = sphi 0, %s107
      %s111 = sphi 0, %s110
      %s127 = sphi 0, %s111
      %s131 = sphi 0, %s131
      %s133 = sphi 0, %s131
      %s134 = sphi 0, %s133
      %s148 = sphi 0, %s134
      %s152 = sphi 0, %s152
      %s154 = sphi 0, %s152
      %s155 = sphi 0, %s154
      %s169 = sphi 0, %s155
      %s173 = sphi 0, %s173
      %s175 = sphi 0, %s173
      %s176 = sphi 0, %s175
      %s190 = sphi 0, %s176
      %s194 = sphi 0, %s194
      %s196 = sphi 0, %s194
      %s197 = sphi 0, %s196
      %s211 = sphi 0, %s197
      %s215 = sphi 0, %s215
      %s217 = sphi 0, %s215
      %s218 = sphi 0, %s217
      %s232 = sphi 0, %s218
      %s236 = sphi 0, %s236
      %s238 = sphi 0, %s236
      %s239 = sphi 0, %s238
      %s253 = sphi 0, %s239
      %s259 = sphi 0, %s261
      %s262 = sphi 0, %s259
      %s263 = sphi 0, %s262
      %s279 = sphi 0, %s263
    $region4: #{basic_block_pallas.1} parent=1 // loop_header_branch
      %22 = sbr.rel (%p20) target = $region8
    $region5: #{basic_block_pallas.1} parent=1 // loop_body
      %s24 = ssub.s32 %s19, 1
      %s25 = ssub.s32 %s19, 2
      %s26 = sadd.s32 %s19, 1
      %s27 = ssub.s32 %s19, %s26
      %p28 = scmp.eq.s32.totalorder %s27, 0
      %s30 = sadd.s32 %s29, 1
      %s31 = scalar_select %p28, %s29, %s30
      %p34 = pneg %p28
      %p35 = scmp.eq.s32.totalorder %s19, 1
      %p36 = por %p34, %p35
      %p37 = scmp.ne.s32.totalorder %s29, %s32
      %p38 = scmp.eq.s32.totalorder %s19, 0
      %p39 = por %p37, %p38
      %p40 = scmp.ne.s32.totalorder %s29, %s32
      %p41 = scmp.eq.s32.totalorder %s24, 1
      %p42 = por %p40, %p41
      %p43 = scmp.ne.s32.totalorder %s32, %s33
      %p44 = scmp.eq.s32.totalorder %s24, 0
      %p45 = por %p43, %p44
      %p46 = scmp.ne.s32.totalorder %s32, %s33
      %p47 = scmp.eq.s32.totalorder %s25, 1
      %p48 = por %p46, %p47
      %p50 = scmp.ne.s32.totalorder %s33, %s49
      %p51 = scmp.eq.s32.totalorder %s25, 0
      %p52 = por %p50, %p51
      %s53 = ssub.s32 %s19, %s26
      %p54 = scmp.eq.s32.totalorder %s53, 0
      %s56 = sadd.s32 %s55, 1
      %s57 = scalar_select %p54, %s55, %s56
      %p60 = pneg %p54
      %p61 = scmp.eq.s32.totalorder %s19, 1
      %p62 = por %p60, %p61
      %p63 = scmp.ne.s32.totalorder %s55, %s58
      %p64 = scmp.eq.s32.totalorder %s19, 0
      %p65 = por %p63, %p64
      %p66 = scmp.ne.s32.totalorder %s55, %s58
      %p67 = scmp.eq.s32.totalorder %s24, 1
      %p68 = por %p66, %p67
      %p69 = scmp.ne.s32.totalorder %s58, %s59
      %p70 = scmp.eq.s32.totalorder %s24, 0
      %p71 = por %p69, %p70
      %p72 = scmp.ne.s32.totalorder %s58, %s59
      %p73 = scmp.eq.s32.totalorder %s25, 1
      %p74 = por %p72, %p73
      %p76 = scmp.ne.s32.totalorder %s59, %s75
      %p77 = scmp.eq.s32.totalorder %s25, 0
      %p78 = por %p76, %p77
      %s79 = ssub.s32 %s19, %s26
      %p80 = scmp.eq.s32.totalorder %s79, 0
      %s82 = sadd.s32 %s81, 1
      %s83 = scalar_select %p80, %s81, %s82
      %p86 = pneg %p80
      %p87 = scmp.eq.s32.totalorder %s19, 1
      %p88 = por %p86, %p87
      %p89 = scmp.ne.s32.totalorder %s81, %s84
      %p90 = scmp.eq.s32.totalorder %s19, 0
      %p91 = por %p89, %p90
      %p92 = scmp.ne.s32.totalorder %s81, %s84
      %p93 = scmp.eq.s32.totalorder %s24, 1
      %p94 = por %p92, %p93
      %p95 = scmp.ne.s32.totalorder %s84, %s85
      %p96 = scmp.eq.s32.totalorder %s24, 0
      %p97 = por %p95, %p96
      %p98 = scmp.ne.s32.totalorder %s84, %s85
      %p99 = scmp.eq.s32.totalorder %s25, 1
      %p100 = por %p98, %p99
      %p102 = scmp.ne.s32.totalorder %s85, %s101
      %p103 = scmp.eq.s32.totalorder %s25, 0
      %p104 = por %p102, %p103
      %s105 = ssub.s32 %s19, %s26
      %p106 = scmp.eq.s32.totalorder %s105, 0
      %s108 = sadd.s32 %s107, 1
      %s109 = scalar_select %p106, %s107, %s108
      %p112 = pneg %p106
      %p113 = scmp.eq.s32.totalorder %s19, 1
      %p114 = por %p112, %p113
      %p115 = scmp.ne.s32.totalorder %s107, %s110
      %p116 = scmp.eq.s32.totalorder %s19, 0
      %p117 = por %p115, %p116
      %p118 = scmp.ne.s32.totalorder %s107, %s110
      %p119 = scmp.eq.s32.totalorder %s24, 1
      %p120 = por %p118, %p119
      %p121 = scmp.ne.s32.totalorder %s110, %s111
      %p122 = scmp.eq.s32.totalorder %s24, 0
      %p123 = por %p121, %p122
      %p124 = scmp.ne.s32.totalorder %s110, %s111
      %p125 = scmp.eq.s32.totalorder %s25, 1
      %p126 = por %p124, %p125
      %p128 = scmp.ne.s32.totalorder %s111, %s127
      %p129 = scmp.eq.s32.totalorder %s25, 0
      %p130 = por %p128, %p129
      %s132 = sadd.s32 %s131, 1
      %p135 = scmp.eq.s32.totalorder %s19, 1
      %p136 = scmp.ne.s32.totalorder %s131, %s133
      %p137 = scmp.eq.s32.totalorder %s19, 0
      %p138 = por %p136, %p137
      %p139 = scmp.ne.s32.totalorder %s131, %s133
      %p140 = scmp.eq.s32.totalorder %s24, 1
      %p141 = por %p139, %p140
      %p142 = scmp.ne.s32.totalorder %s133, %s134
      %p143 = scmp.eq.s32.totalorder %s24, 0
      %p144 = por %p142, %p143
      %p145 = scmp.ne.s32.totalorder %s133, %s134
      %p146 = scmp.eq.s32.totalorder %s25, 1
      %p147 = por %p145, %p146
      %p149 = scmp.ne.s32.totalorder %s134, %s148
      %p150 = scmp.eq.s32.totalorder %s25, 0
      %p151 = por %p149, %p150
      %s153 = sadd.s32 %s152, 1
      %p156 = scmp.eq.s32.totalorder %s19, 1
      %p157 = scmp.ne.s32.totalorder %s152, %s154
      %p158 = scmp.eq.s32.totalorder %s19, 0
      %p159 = por %p157, %p158
      %p160 = scmp.ne.s32.totalorder %s152, %s154
      %p161 = scmp.eq.s32.totalorder %s24, 1
      %p162 = por %p160, %p161
      %p163 = scmp.ne.s32.totalorder %s154, %s155
      %p164 = scmp.eq.s32.totalorder %s24, 0
      %p165 = por %p163, %p164
      %p166 = scmp.ne.s32.totalorder %s154, %s155
      %p167 = scmp.eq.s32.totalorder %s25, 1
      %p168 = por %p166, %p167
      %p170 = scmp.ne.s32.totalorder %s155, %s169
      %p171 = scmp.eq.s32.totalorder %s25, 0
      %p172 = por %p170, %p171
      %s174 = sadd.s32 %s173, 1
      %p177 = scmp.eq.s32.totalorder %s19, 1
      %p178 = scmp.ne.s32.totalorder %s173, %s175
      %p179 = scmp.eq.s32.totalorder %s19, 0
      %p180 = por %p178, %p179
      %p181 = scmp.ne.s32.totalorder %s173, %s175
      %p182 = scmp.eq.s32.totalorder %s24, 1
      %p183 = por %p181, %p182
      %p184 = scmp.ne.s32.totalorder %s175, %s176
      %p185 = scmp.eq.s32.totalorder %s24, 0
      %p186 = por %p184, %p185
      %p187 = scmp.ne.s32.totalorder %s175, %s176
      %p188 = scmp.eq.s32.totalorder %s25, 1
      %p189 = por %p187, %p188
      %p191 = scmp.ne.s32.totalorder %s176, %s190
      %p192 = scmp.eq.s32.totalorder %s25, 0
      %p193 = por %p191, %p192
      %s195 = sadd.s32 %s194, 1
      %p198 = scmp.eq.s32.totalorder %s19, 1
      %p199 = scmp.ne.s32.totalorder %s194, %s196
      %p200 = scmp.eq.s32.totalorder %s19, 0
      %p201 = por %p199, %p200
      %p202 = scmp.ne.s32.totalorder %s194, %s196
      %p203 = scmp.eq.s32.totalorder %s24, 1
      %p204 = por %p202, %p203
      %p205 = scmp.ne.s32.totalorder %s196, %s197
      %p206 = scmp.eq.s32.totalorder %s24, 0
      %p207 = por %p205, %p206
      %p208 = scmp.ne.s32.totalorder %s196, %s197
      %p209 = scmp.eq.s32.totalorder %s25, 1
      %p210 = por %p208, %p209
      %p212 = scmp.ne.s32.totalorder %s197, %s211
      %p213 = scmp.eq.s32.totalorder %s25, 0
      %p214 = por %p212, %p213
      %s216 = sadd.s32 %s215, 1
      %p219 = scmp.eq.s32.totalorder %s19, 1
      %p220 = scmp.ne.s32.totalorder %s215, %s217
      %p221 = scmp.eq.s32.totalorder %s19, 0
      %p222 = por %p220, %p221
      %p223 = scmp.ne.s32.totalorder %s215, %s217
      %p224 = scmp.eq.s32.totalorder %s24, 1
      %p225 = por %p223, %p224
      %p226 = scmp.ne.s32.totalorder %s217, %s218
      %p227 = scmp.eq.s32.totalorder %s24, 0
      %p228 = por %p226, %p227
      %p229 = scmp.ne.s32.totalorder %s217, %s218
      %p230 = scmp.eq.s32.totalorder %s25, 1
      %p231 = por %p229, %p230
      %p233 = scmp.ne.s32.totalorder %s218, %s232
      %p234 = scmp.eq.s32.totalorder %s25, 0
      %p235 = por %p233, %p234
      %s237 = sadd.s32 %s236, 1
      %p240 = scmp.eq.s32.totalorder %s19, 1
      %p241 = scmp.ne.s32.totalorder %s236, %s238
      %p242 = scmp.eq.s32.totalorder %s19, 0
      %p243 = por %p241, %p242
      %p244 = scmp.ne.s32.totalorder %s236, %s238
      %p245 = scmp.eq.s32.totalorder %s24, 1
      %p246 = por %p244, %p245
      %p247 = scmp.ne.s32.totalorder %s238, %s239
      %p248 = scmp.eq.s32.totalorder %s24, 0
      %p249 = por %p247, %p248
      %p250 = scmp.ne.s32.totalorder %s238, %s239
      %p251 = scmp.eq.s32.totalorder %s25, 1
      %p252 = por %p250, %p251
      %p254 = scmp.ne.s32.totalorder %s239, %s253
      %p255 = scmp.eq.s32.totalorder %s25, 0
      %p256 = por %p254, %p255
      %s257 = ssub.s32 %s19, %s26
      %p258 = scmp.eq.s32.totalorder %s257, 0
      %s260 = sadd.s32 %s259, 1
      %s261 = scalar_select %p258, %s259, %s260
      %p264 = pneg %p258
      %p265 = scmp.eq.s32.totalorder %s19, 1
      %p266 = por %p264, %p265
      %p267 = scmp.ne.s32.totalorder %s259, %s262
      %p268 = scmp.eq.s32.totalorder %s19, 0
      %p269 = por %p267, %p268
      %p270 = scmp.ne.s32.totalorder %s259, %s262
      %p271 = scmp.eq.s32.totalorder %s24, 1
      %p272 = por %p270, %p271
      %p273 = scmp.ne.s32.totalorder %s262, %s263
      %p274 = scmp.eq.s32.totalorder %s24, 0
      %p275 = por %p273, %p274
      %p276 = scmp.ne.s32.totalorder %s262, %s263
      %p277 = scmp.eq.s32.totalorder %s25, 1
      %p278 = por %p276, %p277
      %p280 = scmp.ne.s32.totalorder %s263, %s279
      %p281 = scmp.eq.s32.totalorder %s25, 0
      %p282 = por %p280, %p281
      %p283 = scmp.le.s32.totalorder 1, %s19
      %p284 = scmp.lt.s32.totalorder %s19, 3
      %p285 = pnand %p283, %p284
      %p286 = pneg %p285
      // Predicated region
      $region9: #{basic_block_pallas.1} parent=5 // pred_check
        _
      $region10: #{basic_block_pallas.1} parent=5 // pred_check_branch
        %288 = sbr.rel (%p285) target = $region12
      $region11: #{basic_block_pallas.1} parent=5 // pred_region
        %s289 = ssub.s32 %s19, 1
        // Predicated region
        $region13: #{basic_block_pallas.1} parent=11 // pred_check
          %p290 = pneg %p144
        $region14: #{basic_block_pallas.1} parent=11 // pred_check_branch
          %292 = sbr.rel (%p290) target = $region16
        $region15: #{basic_block_pallas.1} parent=11 // pred_region
          _
        $region16: #{basic_block_pallas.1} parent=11 // pred_fallthru
          _
        // Predicated region
        $region17: #{basic_block_pallas.1} parent=11 // pred_check
          %p293 = pneg %p165
        $region18: #{basic_block_pallas.1} parent=11 // pred_check_branch
          %295 = sbr.rel (%p293) target = $region20
        $region19: #{basic_block_pallas.1} parent=11 // pred_region
          _
        $region20: #{basic_block_pallas.1} parent=11 // pred_fallthru
          _
        // Predicated region
        $region21: #{basic_block_pallas.1} parent=11 // pred_check
          %p296 = pneg %p186
        $region22: #{basic_block_pallas.1} parent=11 // pred_check_branch
          %298 = sbr.rel (%p296) target = $region24
        $region23: #{basic_block_pallas.1} parent=11 // pred_region
          _
        $region24: #{basic_block_pallas.1} parent=11 // pred_fallthru
          _
        // Predicated region
        $region25: #{basic_block_pallas.1} parent=11 // pred_check
          %p299 = pneg %p207
        $region26: #{basic_block_pallas.1} parent=11 // pred_check_branch
          %301 = sbr.rel (%p299) target = $region28
        $region27: #{basic_block_pallas.1} parent=11 // pred_region
          _
        $region28: #{basic_block_pallas.1} parent=11 // pred_fallthru
          _
        // Predicated region
        $region29: #{basic_block_pallas.1} parent=11 // pred_check
          %p302 = pneg %p228
        $region30: #{basic_block_pallas.1} parent=11 // pred_check_branch
          %304 = sbr.rel (%p302) target = $region32
        $region31: #{basic_block_pallas.1} parent=11 // pred_region
          _
        $region32: #{basic_block_pallas.1} parent=11 // pred_fallthru
          _
        // Predicated region
        $region33: #{basic_block_pallas.1} parent=11 // pred_check
          %p305 = pneg %p249
        $region34: #{basic_block_pallas.1} parent=11 // pred_check_branch
          %307 = sbr.rel (%p305) target = $region36
        $region35: #{basic_block_pallas.1} parent=11 // pred_region
          _
        $region36: #{basic_block_pallas.1} parent=11 // pred_fallthru
          _
      $region12: #{basic_block_pallas.1} parent=5 // pred_fallthru
        _
      %p308 = scmp.lt.s32.totalorder %s19, 2
      // Predicated region
      $region37: #{basic_block_pallas.1} parent=5 // pred_check
        %p309 = pneg %p308
      $region38: #{basic_block_pallas.1} parent=5 // pred_check_branch
        %311 = sbr.rel (%p309) target = $region40
      $region39: #{basic_block_pallas.1} parent=5 // pred_region
        // Predicated region
        $region41: #{basic_block_pallas.1} parent=39 // pred_check
          %p312 = pneg %p39
        $region42: #{basic_block_pallas.1} parent=39 // pred_check_branch
          %314 = sbr.rel (%p312) target = $region44
        $region43: #{basic_block_pallas.1} parent=39 // pred_region
          %p315 = scmp.lt.s32.totalorder %s19, 1
          %s316 = scalar_select %p315, %s19, 1
          %s317 = smul.addr %s316, 18
          %s318 = smul.addr %s317, 4
          %s319 = scalar_lea.vmem %s0, %s318
        $region44: #{basic_block_pallas.1} parent=39 // pred_fallthru
          _
        // Predicated region
        $region45: #{basic_block_pallas.1} parent=39 // pred_check
          %p320 = pneg %p65
        $region46: #{basic_block_pallas.1} parent=39 // pred_check_branch
          %322 = sbr.rel (%p320) target = $region48
        $region47: #{basic_block_pallas.1} parent=39 // pred_region
          %p323 = scmp.lt.s32.totalorder %s19, 1
          %s324 = scalar_select %p323, %s19, 1
          %s325 = smul.addr %s324, 18
          %s326 = smul.addr %s325, 4
          %s327 = scalar_lea.vmem %s1, %s326
        $region48: #{basic_block_pallas.1} parent=39 // pred_fallthru
          _
        // Predicated region
        $region49: #{basic_block_pallas.1} parent=39 // pred_check
          %p328 = pneg %p91
        $region50: #{basic_block_pallas.1} parent=39 // pred_check_branch
          %330 = sbr.rel (%p328) target = $region52
        $region51: #{basic_block_pallas.1} parent=39 // pred_region
          %p331 = scmp.lt.s32.totalorder %s19, 1
          %s332 = scalar_select %p331, %s19, 1
          %s333 = smul.addr %s332, 18
          %s334 = smul.addr %s333, 4
          %s335 = scalar_lea.vmem %s2, %s334
        $region52: #{basic_block_pallas.1} parent=39 // pred_fallthru
          _
        // Predicated region
        $region53: #{basic_block_pallas.1} parent=39 // pred_check
          %p336 = pneg %p117
        $region54: #{basic_block_pallas.1} parent=39 // pred_check_branch
          %338 = sbr.rel (%p336) target = $region56
        $region55: #{basic_block_pallas.1} parent=39 // pred_region
          %p339 = scmp.lt.s32.totalorder %s19, 1
          %s340 = scalar_select %p339, %s19, 1
          %s341 = smul.addr %s340, 18
          %s342 = smul.addr %s341, 4
          %s343 = scalar_lea.vmem %s3, %s342
        $region56: #{basic_block_pallas.1} parent=39 // pred_fallthru
          _
      $region40: #{basic_block_pallas.1} parent=5 // pred_fallthru
        _
      %p344 = scmp.le.s32.totalorder 1, %s19
      %p345 = scmp.lt.s32.totalorder %s19, 3
      %p346 = pnand %p344, %p345
      %p347 = pneg %p346
      // Predicated region
      $region57: #{basic_block_pallas.1} parent=5 // pred_check
        _
      $region58: #{basic_block_pallas.1} parent=5 // pred_check_branch
        %349 = sbr.rel (%p346) target = $region60
      $region59: #{basic_block_pallas.1} parent=5 // pred_region
        %s350 = ssub.s32 %s19, 1
        %p351 = scmp.lt.s32.totalorder %s24, 1
        %s352 = scalar_select %p351, %s24, 1
        %s353 = smul.addr %s352, 18
        %s354 = smul.addr %s353, 4
        %s355 = scalar_lea.vmem %s0, %s354
        %p356 = pneg %p45
        %p357 = pneg %p42
        %p358 = scmp.lt.s32.totalorder %s24, 1
        %s359 = scalar_select %p358, %s24, 1
        %s360 = smul.addr %s359, 18
        %s361 = smul.addr %s360, 4
        %s362 = scalar_lea.vmem %s1, %s361
        %p363 = pneg %p71
        %p364 = pneg %p68
        %p365 = scmp.lt.s32.totalorder %s24, 1
        %s366 = scalar_select %p365, %s24, 1
        %s367 = smul.addr %s366, 18
        %s368 = smul.addr %s367, 4
        %s369 = scalar_lea.vmem %s2, %s368
        %p370 = pneg %p97
        %p371 = pneg %p94
        %p372 = scmp.lt.s32.totalorder %s24, 1
        %s373 = scalar_select %p372, %s24, 1
        %s374 = smul.addr %s373, 18
        %s375 = smul.addr %s374, 4
        %s376 = scalar_lea.vmem %s3, %s375
        %p377 = pneg %p123
        %p378 = pneg %p120
        %p379 = pneg %p144
        %p380 = pneg %p141
        %p381 = pneg %p165
        %p382 = pneg %p162
        %p383 = pneg %p186
        %p384 = pneg %p183
        %p385 = pneg %p207
        %p386 = pneg %p204
        %p387 = pneg %p228
        %p388 = pneg %p225
        %p389 = pneg %p249
        %p390 = pneg %p246
        %p391 = pneg %p275
        %p392 = pneg %p272
        %s393 = sand.u32 %s262, 1
        %s394 = scalar_lea.sflag [#allocation4], %s393
        %s395 = sand.u32 %s262, 1
        %s396 = smul.addr %s395, 32
        %s397 = scalar_lea.vmem [#allocation3], %s396
        %p398 = scmp.lt.s32.totalorder %s24, 1
        %s399 = scalar_select %p398, %s24, 1
        %s400 = smul.addr %s399, 18
        %s401 = smul.addr %s400, 4
        %s402 = scalar_lea.vmem %s0, %s401
        %p403 = scmp.lt.s32.totalorder %s24, 1
        %s404 = scalar_select %p403, %s24, 1
        %s405 = smul.addr %s404, 18
        %s406 = smul.addr %s405, 4
        %s407 = scalar_lea.vmem %s1, %s406
        %p408 = scmp.lt.s32.totalorder %s24, 1
        %s409 = scalar_select %p408, %s24, 1
        %s410 = smul.addr %s409, 18
        %s411 = smul.addr %s410, 4
        %s412 = scalar_lea.vmem %s2, %s411
        %p413 = scmp.lt.s32.totalorder %s24, 1
        %s414 = scalar_select %p413, %s24, 1
        %s415 = smul.addr %s414, 18
        %s416 = smul.addr %s415, 4
        %s417 = scalar_lea.vmem %s3, %s416
        %v419 = vld [vmem:[%s402] sm:$0xf]
        %v420 = vld [vmem:[%s402 + $0x4] sm:$0x1]
        %v421 = vld [vmem:[%s402 + $0x8] sm:$0xf]
        %v422 = vld [vmem:[%s402 + $0xc] sm:$0x1]
        %v423 = vld [vmem:[%s402 + $0x10] sm:$0xf]
        %v424 = vld [vmem:[%s402 + $0x14] sm:$0x1]
        %v425 = vld [vmem:[%s402 + $0x18] sm:$0xf]
        %v426 = vld [vmem:[%s402 + $0x1c] sm:$0x1]
        %v427 = vld [vmem:[%s402 + $0x20] sm:$0xf]
        %v428 = vld [vmem:[%s402 + $0x24] sm:$0x1]
        %v429 = vld [vmem:[%s402 + $0x28] sm:$0xf]
        %v430 = vld [vmem:[%s402 + $0x2c] sm:$0x1]
        %v431 = vld [vmem:[%s402 + $0x30] sm:$0xf]
        %v432 = vld [vmem:[%s402 + $0x34] sm:$0x1]
        %v433 = vld [vmem:[%s402 + $0x38] sm:$0xf]
        %v434 = vld [vmem:[%s402 + $0x3c] sm:$0x1]
        %v435 = vld [vmem:[%s402 + $0x40] sm:$0xf]
        %v436 = vld [vmem:[%s402 + $0x44] sm:$0x1]
        %v437 = vld [vmem:[%s407] sm:$0xf]
        %v438 = vld [vmem:[%s407 + $0x8] sm:$0xf]
        %v439 = vld [vmem:[%s407 + $0x10] sm:$0xf]
        %v440 = vld [vmem:[%s407 + $0x18] sm:$0xf]
        %v441 = vld [vmem:[%s407 + $0x20] sm:$0xf]
        %v442 = vld [vmem:[%s407 + $0x28] sm:$0xf]
        %v443 = vld [vmem:[%s407 + $0x30] sm:$0xf]
        %v444 = vld [vmem:[%s407 + $0x38] sm:$0xf]
        %v445 = vld [vmem:[%s407 + $0x40] sm:$0xf]
        %v446 = vld [vmem:[%s412] sm:$0xf]
        %v447 = vld [vmem:[%s412 + $0x4] sm:$0x1]
        %v448 = vld [vmem:[%s412 + $0x8] sm:$0xf]
        %v449 = vld [vmem:[%s412 + $0xc] sm:$0x1]
        %v450 = vld [vmem:[%s412 + $0x10] sm:$0xf]
        %v451 = vld [vmem:[%s412 + $0x14] sm:$0x1]
        %v452 = vld [vmem:[%s412 + $0x18] sm:$0xf]
        %v453 = vld [vmem:[%s412 + $0x1c] sm:$0x1]
        %v454 = vld [vmem:[%s412 + $0x20] sm:$0xf]
        %v455 = vld [vmem:[%s412 + $0x24] sm:$0x1]
        %v456 = vld [vmem:[%s412 + $0x28] sm:$0xf]
        %v457 = vld [vmem:[%s412 + $0x2c] sm:$0x1]
        %v458 = vld [vmem:[%s412 + $0x30] sm:$0xf]
        %v459 = vld [vmem:[%s412 + $0x34] sm:$0x1]
        %v460 = vld [vmem:[%s412 + $0x38] sm:$0xf]
        %v461 = vld [vmem:[%s412 + $0x3c] sm:$0x1]
        %v462 = vld [vmem:[%s417] sm:$0xf]
        %v463 = vld [vmem:[%s417 + $0x8] sm:$0xf]
        %v464 = vld [vmem:[%s417 + $0x10] sm:$0xf]
        %v465 = vld [vmem:[%s417 + $0x18] sm:$0xf]
        %v466 = vld [vmem:[%s417 + $0x20] sm:$0xf]
        %v467 = vld [vmem:[%s417 + $0x28] sm:$0xf]
        %v468 = vld [vmem:[%s417 + $0x30] sm:$0xf]
        %v469 = vld [vmem:[%s417 + $0x38] sm:$0xf]
        %vm470 = vsmask.f32 3328
        %vm471 = vsmask.f32 7440
        %vm472 = vmor %vm470, %vm471
        %v474 = vshrl.u32 %v419, 16
        %v476 = vrot.slane %v474, 4
        %v477 = vshll.u32 %v419, 16
        %v479 = vrot.slane %v477, 5
        %v480 = vor.u32 %v476, %v479
        %v481 = vrot.slane %v480, 4
        %v483 = vshll.u32 %v420, 16
        %v485 = vrot.slane %v483, 5
        %v486 = vsel %vm472, %v481, %v485
        %v488 = vshrl.u32 %v421, 16
        %v490 = vrot.slane %v488, 4
        %v491 = vshll.u32 %v421, 16
        %v493 = vrot.slane %v491, 5
        %v494 = vor.u32 %v490, %v493
        %v495 = vrot.slane %v494, 4
        %v497 = vshll.u32 %v422, 16
        %v499 = vrot.slane %v497, 5
        %v500 = vsel %vm472, %v495, %v499
        %v502 = vshrl.u32 %v423, 16
        %v504 = vrot.slane %v502, 4
        %v505 = vshll.u32 %v423, 16
        %v507 = vrot.slane %v505, 5
        %v508 = vor.u32 %v504, %v507
        %v509 = vrot.slane %v508, 4
        %v511 = vshll.u32 %v424, 16
        %v513 = vrot.slane %v511, 5
        %v514 = vsel %vm472, %v509, %v513
        %v516 = vshrl.u32 %v425, 16
        %v518 = vrot.slane %v516, 4
        %v519 = vshll.u32 %v425, 16
        %v521 = vrot.slane %v519, 5
        %v522 = vor.u32 %v518, %v521
        %v523 = vrot.slane %v522, 4
        %v525 = vshll.u32 %v426, 16
        %v527 = vrot.slane %v525, 5
        %v528 = vsel %vm472, %v523, %v527
        %v530 = vshrl.u32 %v427, 16
        %v532 = vrot.slane %v530, 4
        %v533 = vshll.u32 %v427, 16
        %v535 = vrot.slane %v533, 5
        %v536 = vor.u32 %v532, %v535
        %v537 = vrot.slane %v536, 4
        %v539 = vshll.u32 %v428, 16
        %v541 = vrot.slane %v539, 5
        %v542 = vsel %vm472, %v537, %v541
        %v544 = vshrl.u32 %v429, 16
        %v546 = vrot.slane %v544, 4
        %v547 = vshll.u32 %v429, 16
        %v549 = vrot.slane %v547, 5
        %v550 = vor.u32 %v546, %v549
        %v551 = vrot.slane %v550, 4
        %v553 = vshll.u32 %v430, 16
        %v555 = vrot.slane %v553, 5
        %v556 = vsel %vm472, %v551, %v555
        %v558 = vshrl.u32 %v431, 16
        %v560 = vrot.slane %v558, 4
        %v561 = vshll.u32 %v431, 16
        %v563 = vrot.slane %v561, 5
        %v564 = vor.u32 %v560, %v563
        %v565 = vrot.slane %v564, 4
        %v567 = vshll.u32 %v432, 16
        %v569 = vrot.slane %v567, 5
        %v570 = vsel %vm472, %v565, %v569
        %v572 = vshrl.u32 %v433, 16
        %v574 = vrot.slane %v572, 4
        %v575 = vshll.u32 %v433, 16
        %v577 = vrot.slane %v575, 5
        %v578 = vor.u32 %v574, %v577
        %v579 = vrot.slane %v578, 4
        %v581 = vshll.u32 %v434, 16
        %v583 = vrot.slane %v581, 5
        %v584 = vsel %vm472, %v579, %v583
        %v586 = vshrl.u32 %v446, 16
        %v588 = vrot.slane %v586, 4
        %v589 = vshll.u32 %v446, 16
        %v591 = vrot.slane %v589, 5
        %v592 = vor.u32 %v588, %v591
        %v593 = vrot.slane %v592, 4
        %v595 = vshll.u32 %v447, 16
        %v597 = vrot.slane %v595, 5
        %v598 = vsel %vm472, %v593, %v597
        %v600 = vshrl.u32 %v448, 16
        %v602 = vrot.slane %v600, 4
        %v603 = vshll.u32 %v448, 16
        %v605 = vrot.slane %v603, 5
        %v606 = vor.u32 %v602, %v605
        %v607 = vrot.slane %v606, 4
        %v609 = vshll.u32 %v449, 16
        %v611 = vrot.slane %v609, 5
        %v612 = vsel %vm472, %v607, %v611
        %v614 = vshrl.u32 %v450, 16
        %v616 = vrot.slane %v614, 4
        %v617 = vshll.u32 %v450, 16
        %v619 = vrot.slane %v617, 5
        %v620 = vor.u32 %v616, %v619
        %v621 = vrot.slane %v620, 4
        %v623 = vshll.u32 %v451, 16
        %v625 = vrot.slane %v623, 5
        %v626 = vsel %vm472, %v621, %v625
        %v628 = vshrl.u32 %v452, 16
        %v630 = vrot.slane %v628, 4
        %v631 = vshll.u32 %v452, 16
        %v633 = vrot.slane %v631, 5
        %v634 = vor.u32 %v630, %v633
        %v635 = vrot.slane %v634, 4
        %v637 = vshll.u32 %v453, 16
        %v639 = vrot.slane %v637, 5
        %v640 = vsel %vm472, %v635, %v639
        %v642 = vshrl.u32 %v454, 16
        %v644 = vrot.slane %v642, 4
        %v645 = vshll.u32 %v454, 16
        %v647 = vrot.slane %v645, 5
        %v648 = vor.u32 %v644, %v647
        %v649 = vrot.slane %v648, 4
        %v651 = vshll.u32 %v455, 16
        %v653 = vrot.slane %v651, 5
        %v654 = vsel %vm472, %v649, %v653
        %v656 = vshrl.u32 %v456, 16
        %v658 = vrot.slane %v656, 4
        %v659 = vshll.u32 %v456, 16
        %v661 = vrot.slane %v659, 5
        %v662 = vor.u32 %v658, %v661
        %v663 = vrot.slane %v662, 4
        %v665 = vshll.u32 %v457, 16
        %v667 = vrot.slane %v665, 5
        %v668 = vsel %vm472, %v663, %v667
        %v670 = vshrl.u32 %v458, 16
        %v672 = vrot.slane %v670, 4
        %v673 = vshll.u32 %v458, 16
        %v675 = vrot.slane %v673, 5
        %v676 = vor.u32 %v672, %v675
        %v677 = vrot.slane %v676, 4
        %v679 = vshll.u32 %v459, 16
        %v681 = vrot.slane %v679, 5
        %v682 = vsel %vm472, %v677, %v681
        %v684 = vshrl.u32 %v460, 16
        %v686 = vrot.slane %v684, 4
        %v687 = vshll.u32 %v460, 16
        %v689 = vrot.slane %v687, 5
        %v690 = vor.u32 %v686, %v689
        %v691 = vrot.slane %v690, 4
        %v693 = vshll.u32 %v461, 16
        %v695 = vrot.slane %v693, 5
        %v696 = vsel %vm472, %v691, %v695
        %v698 = vshrl.u32 %v435, 16
        %v700 = vrot.slane %v698, 4
        %v701 = vshll.u32 %v435, 16
        %v703 = vrot.slane %v701, 5
        %v704 = vor.u32 %v700, %v703
        %v705 = vrot.slane %v704, 4
        %v707 = vshll.u32 %v436, 16
        %v709 = vrot.slane %v707, 5
        %v710 = vsel %vm472, %v705, %v709
        %v711 = vld [vmem:[%s4] sm:$0xf]
        %v712 = vld [vmem:[%s4 + $0x4] sm:$0xf]
        %v713 = vld [vmem:[%s4 + $0x8] sm:$0xf]
        %v714 = vld [vmem:[%s4 + $0xc] sm:$0xf]
        %v715 = vld [vmem:[%s4 + $0x10] sm:$0xf]
        %v716 = vld [vmem:[%s4 + $0x14] sm:$0xf]
        %v717 = vld [vmem:[%s4 + $0x18] sm:$0xf]
        %v718 = vld [vmem:[%s4 + $0x1c] sm:$0xf]
        %s719 = scalar_lea.vmem %s4, 32
        %v720 = vld [vmem:[%s719] sm:$0xf]
        %v721 = vld [vmem:[%s719 + $0x4] sm:$0xf]
        %v722 = vld [vmem:[%s719 + $0x8] sm:$0xf]
        %v723 = vld [vmem:[%s719 + $0xc] sm:$0xf]
        %v724 = vld [vmem:[%s719 + $0x10] sm:$0xf]
        %v725 = vld [vmem:[%s719 + $0x14] sm:$0xf]
        %v726 = vld [vmem:[%s719 + $0x18] sm:$0xf]
        %v727 = vld [vmem:[%s719 + $0x1c] sm:$0xf]
        %v736 = vunpack.c.l.b16 %v437
        %v737 = vunpack.c.l.b16 %v438
        %v738 = vunpack.c.l.b16 %v439
        %v739 = vunpack.c.l.b16 %v440
        %v740 = vunpack.c.l.b16 %v441
        %v741 = vunpack.c.l.b16 %v442
        %v742 = vunpack.c.l.b16 %v443
        %v743 = vunpack.c.l.b16 %v444
        %v744 = vpack.c.b16 %v737, %v736
        %v745 = vpack.c.b16 %v739, %v738
        %v746 = vpack.c.b16 %v741, %v740
        %v747 = vpack.c.b16 %v743, %v742
        %v756 = vunpack.c.l.b16 %v720
        %v757 = vunpack.c.l.b16 %v721
        %v758 = vunpack.c.l.b16 %v722
        %v759 = vunpack.c.l.b16 %v723
        %v760 = vunpack.c.l.b16 %v724
        %v761 = vunpack.c.l.b16 %v725
        %v762 = vunpack.c.l.b16 %v726
        %v763 = vunpack.c.l.b16 %v727
        %v764 = vpack.c.b16 %v757, %v756
        %v765 = vpack.c.b16 %v759, %v758
        %v766 = vpack.c.b16 %v761, %v760
        %v767 = vpack.c.b16 %v763, %v762
        %vm772 = vcmask 523264
        %v774 = vsel %vm772, %v744, 0
        %v777 = vsel %vm772, %v745, 0
        %v780 = vsel %vm772, %v746, 0
        %v783 = vsel %vm772, %v747, 0
        %785 = vmatprep.subr.bf16.mxu0 0
        %786 = vmatpush1.bf16.msra.mxu0 %v764
        %787 = vmatprep.subr.bf16.mxu0 0
        %788 = vmatpush1.bf16.msra.mxu0 %v765
        %789 = vmatprep.subr.bf16.mxu0 0
        %790 = vmatpush1.bf16.msra.mxu0 %v766
        %791 = vmatprep.subr.bf16.mxu0 0
        %792 = vmatpush1.bf16.msra.mxu0 %v767
        %793 = vmatprep.subr.bf16.mxu0 0
        %794 = vmatpush1.bf16.msra.mxu0 0
        %795 = vmatprep.subr.bf16.mxu0 0
        %796 = vmatpush1.bf16.msra.mxu0 0
        %797 = vmatprep.subr.bf16.mxu0 0
        %798 = vmatpush1.bf16.msra.mxu0 0
        %799 = vmatprep.subr.bf16.mxu0 0
        %800 = vmatpush1.bf16.msra.mxu0 0
        %801 = vmatprep.subr.bf16.mxu0 0
        %802 = vmatpush1.bf16.msra.mxu0 0
        %803 = vmatprep.subr.bf16.mxu0 0
        %804 = vmatpush1.bf16.msra.mxu0 0
        %805 = vmatprep.subr.bf16.mxu0 0
        %806 = vmatpush1.bf16.msra.mxu0 0
        %807 = vmatprep.subr.bf16.mxu0 0
        %808 = vmatpush1.bf16.msra.mxu0 0
        %809 = vmatprep.subr.bf16.mxu0 0
        %810 = vmatpush1.bf16.msra.mxu0 0
        %811 = vmatprep.subr.bf16.mxu0 0
        %812 = vmatpush1.bf16.msra.mxu0 0
        %813 = vmatprep.subr.bf16.mxu0 0
        %814 = vmatpush1.bf16.msra.mxu0 0
        %815 = vmatprep.subr.bf16.mxu0 0
        %816 = vmatpush1.bf16.msra.mxu0 0
        %817 = vmatprep.mubr.bf16.mxu0 0
        %818 = vmatmul.mubr.bf16.gmra.mrb[0].mxu0 %v774
        %v819 = vpop.f32.mrb[0].mxu0
        %v820 = vadd.f32 0.0, %v819
        %v821 = vpop.f32.mrb[0].mxu0
        %v822 = vpop.f32.mrb[0].mxu0
        %v823 = vadd.f32 0.0, %v822
        %v824 = vpop.f32.mrb[0].mxu0
        %825 = vmatprep.mubr.bf16.mxu0 0
        %826 = vmatmul.mubr.bf16.gmra.mrb[0].mxu0 %v777
        %v827 = vpop.f32.mrb[0].mxu0
        %v828 = vadd.f32 0.0, %v827
        %v829 = vpop.f32.mrb[0].mxu0
        %v830 = vpop.f32.mrb[0].mxu0
        %v831 = vadd.f32 0.0, %v830
        %v832 = vpop.f32.mrb[0].mxu0
        %833 = vmatprep.mubr.bf16.mxu0 0
        %834 = vmatmul.mubr.bf16.gmra.mrb[0].mxu0 %v780
        %v835 = vpop.f32.mrb[0].mxu0
        %v836 = vadd.f32 0.0, %v835
        %v837 = vpop.f32.mrb[0].mxu0
        %v838 = vpop.f32.mrb[0].mxu0
        %v839 = vadd.f32 0.0, %v838
        %v840 = vpop.f32.mrb[0].mxu0
        %841 = vmatprep.mubr.bf16.mxu0 0
        %842 = vmatmul.mubr.bf16.gmra.mrb[0].mxu0 %v783
        %v843 = vpop.f32.mrb[0].mxu0
        %v844 = vadd.f32 0.0, %v843
        %v845 = vpop.f32.mrb[0].mxu0
        %v846 = vpop.f32.mrb[0].mxu0
        %v847 = vadd.f32 0.0, %v846
        %v848 = vpop.f32.mrb[0].mxu0
        %849 = vdwg.mxu0
        %v858 = vunpack.c.l.b16 %v419
        %v859 = vunpack.c.l.b16 %v421
        %v860 = vunpack.c.l.b16 %v423
        %v861 = vunpack.c.l.b16 %v425
        %v862 = vunpack.c.l.b16 %v427
        %v863 = vunpack.c.l.b16 %v429
        %v864 = vunpack.c.l.b16 %v431
        %v865 = vunpack.c.l.b16 %v433
        %v866 = vpack.c.b16 %v859, %v858
        %v867 = vpack.c.b16 %v861, %v860
        %v868 = vpack.c.b16 %v863, %v862
        %v869 = vpack.c.b16 %v865, %v864
        %v878 = vunpack.c.l.b16 %v711
        %v879 = vunpack.c.l.b16 %v712
        %v880 = vunpack.c.l.b16 %v713
        %v881 = vunpack.c.l.b16 %v714
        %v882 = vunpack.c.l.b16 %v715
        %v883 = vunpack.c.l.b16 %v716
        %v884 = vunpack.c.l.b16 %v717
        %v885 = vunpack.c.l.b16 %v718
        %v886 = vpack.c.b16 %v879, %v878
        %v887 = vpack.c.b16 %v881, %v880
        %v888 = vpack.c.b16 %v883, %v882
        %v889 = vpack.c.b16 %v885, %v884
        %v895 = vsel %vm772, %v866, 0
        %v898 = vsel %vm772, %v867, 0
        %v901 = vsel %vm772, %v868, 0
        %v904 = vsel %vm772, %v869, 0
        %906 = vmatprep.subr.bf16.mxu0 0
        %907 = vmatpush1.bf16.msra.mxu0 %v886
        %908 = vmatprep.subr.bf16.mxu0 0
        %909 = vmatpush1.bf16.msra.mxu0 %v887
        %910 = vmatprep.subr.bf16.mxu0 0
        %911 = vmatpush1.bf16.msra.mxu0 %v888
        %912 = vmatprep.subr.bf16.mxu0 0
        %913 = vmatpush1.bf16.msra.mxu0 %v889
        %914 = vmatprep.subr.bf16.mxu0 0
        %915 = vmatpush1.bf16.msra.mxu0 0
        %916 = vmatprep.subr.bf16.mxu0 0
        %917 = vmatpush1.bf16.msra.mxu0 0
        %918 = vmatprep.subr.bf16.mxu0 0
        %919 = vmatpush1.bf16.msra.mxu0 0
        %920 = vmatprep.subr.bf16.mxu0 0
        %921 = vmatpush1.bf16.msra.mxu0 0
        %922 = vmatprep.subr.bf16.mxu0 0
        %923 = vmatpush1.bf16.msra.mxu0 0
        %924 = vmatprep.subr.bf16.mxu0 0
        %925 = vmatpush1.bf16.msra.mxu0 0
        %926 = vmatprep.subr.bf16.mxu0 0
        %927 = vmatpush1.bf16.msra.mxu0 0
        %928 = vmatprep.subr.bf16.mxu0 0
        %929 = vmatpush1.bf16.msra.mxu0 0
        %930 = vmatprep.subr.bf16.mxu0 0
        %931 = vmatpush1.bf16.msra.mxu0 0
        %932 = vmatprep.subr.bf16.mxu0 0
        %933 = vmatpush1.bf16.msra.mxu0 0
        %934 = vmatprep.subr.bf16.mxu0 0
        %935 = vmatpush1.bf16.msra.mxu0 0
        %936 = vmatprep.subr.bf16.mxu0 0
        %937 = vmatpush1.bf16.msra.mxu0 0
        %938 = vmatprep.mubr.bf16.mxu0 0
        %939 = vmatmul.mubr.bf16.gmra.mrb[0].mxu0 %v895
        %v940 = vpop.f32.mrb[0].mxu0
        %v941 = vadd.f32 %v820, %v940
        %v942 = vpop.f32.mrb[0].mxu0
        %v943 = vpop.f32.mrb[0].mxu0
        %v944 = vadd.f32 %v823, %v943
        %v945 = vpop.f32.mrb[0].mxu0
        %946 = vmatprep.mubr.bf16.mxu0 0
        %947 = vmatmul.mubr.bf16.gmra.mrb[0].mxu0 %v898
        %v948 = vpop.f32.mrb[0].mxu0
        %v949 = vadd.f32 %v828, %v948
        %v950 = vpop.f32.mrb[0].mxu0
        %v951 = vpop.f32.mrb[0].mxu0
        %v952 = vadd.f32 %v831, %v951
        %v953 = vpop.f32.mrb[0].mxu0
        %954 = vmatprep.mubr.bf16.mxu0 0
        %955 = vmatmul.mubr.bf16.gmra.mrb[0].mxu0 %v901
        %v956 = vpop.f32.mrb[0].mxu0
        %v957 = vadd.f32 %v836, %v956
        %v958 = vpop.f32.mrb[0].mxu0
        %v959 = vpop.f32.mrb[0].mxu0
        %v960 = vadd.f32 %v839, %v959
        %v961 = vpop.f32.mrb[0].mxu0
        %962 = vmatprep.mubr.bf16.mxu0 0
        %963 = vmatmul.mubr.bf16.gmra.mrb[0].mxu0 %v904
        %v964 = vpop.f32.mrb[0].mxu0
        %v965 = vadd.f32 %v844, %v964
        %v966 = vpop.f32.mrb[0].mxu0
        %v967 = vpop.f32.mrb[0].mxu0
        %v968 = vadd.f32 %v847, %v967
        %v969 = vpop.f32.mrb[0].mxu0
        %970 = vdwg.mxu0
        %s971 = scalar_lea.vmem %s4, 64
        %v972 = vld [vmem:[%s971] sm:$0xf]
        %v973 = vld [vmem:[%s971 + $0x4] sm:$0xf]
        %v974 = vld [vmem:[%s971 + $0x8] sm:$0xf]
        %v975 = vld [vmem:[%s971 + $0xc] sm:$0xf]
        %v976 = vld [vmem:[%s971 + $0x10] sm:$0xf]
        %v977 = vld [vmem:[%s971 + $0x14] sm:$0xf]
        %v978 = vld [vmem:[%s971 + $0x18] sm:$0xf]
        %v979 = vld [vmem:[%s971 + $0x1c] sm:$0xf]
        %v980 = vunpack.c.l.b16 %v486
        %v981 = vunpack.c.l.b16 %v500
        %v982 = vunpack.c.l.b16 %v514
        %v983 = vunpack.c.l.b16 %v528
        %v984 = vunpack.c.l.b16 %v542
        %v985 = vunpack.c.l.b16 %v556
        %v986 = vunpack.c.l.b16 %v570
        %v987 = vunpack.c.l.b16 %v584
        %v988 = vpack.c.b16 %v981, %v980
        %v989 = vpack.c.b16 %v983, %v982
        %v990 = vpack.c.b16 %v985, %v984
        %v991 = vpack.c.b16 %v987, %v986
        %v1000 = vunpack.c.l.b16 %v972
        %v1001 = vunpack.c.l.b16 %v973
        %v1002 = vunpack.c.l.b16 %v974
        %v1003 = vunpack.c.l.b16 %v975
        %v1004 = vunpack.c.l.b16 %v976
        %v1005 = vunpack.c.l.b16 %v977
        %v1006 = vunpack.c.l.b16 %v978
        %v1007 = vunpack.c.l.b16 %v979
        %v1008 = vpack.c.b16 %v1001, %v1000
        %v1009 = vpack.c.b16 %v1003, %v1002
        %v1010 = vpack.c.b16 %v1005, %v1004
        %v1011 = vpack.c.b16 %v1007, %v1006
        %v1017 = vsel %vm772, %v988, 0
        %v1020 = vsel %vm772, %v989, 0
        %v1023 = vsel %vm772, %v990, 0
        %v1026 = vsel %vm772, %v991, 0
        %1028 = vmatprep.subr.bf16.mxu0 0
        %1029 = vmatpush1.bf16.msra.mxu0 %v1008
        %1030 = vmatprep.subr.bf16.mxu0 0
        %1031 = vmatpush1.bf16.msra.mxu0 %v1009
        %1032 = vmatprep.subr.bf16.mxu0 0
        %1033 = vmatpush1.bf16.msra.mxu0 %v1010
        %1034 = vmatprep.subr.bf16.mxu0 0
        %1035 = vmatpush1.bf16.msra.mxu0 %v1011
        %1036 = vmatprep.subr.bf16.mxu0 0
        %1037 = vmatpush1.bf16.msra.mxu0 0
        %1038 = vmatprep.subr.bf16.mxu0 0
        %1039 = vmatpush1.bf16.msra.mxu0 0
        %1040 = vmatprep.subr.bf16.mxu0 0
        %1041 = vmatpush1.bf16.msra.mxu0 0
        %1042 = vmatprep.subr.bf16.mxu0 0
        %1043 = vmatpush1.bf16.msra.mxu0 0
        %1044 = vmatprep.subr.bf16.mxu0 0
        %1045 = vmatpush1.bf16.msra.mxu0 0
        %1046 = vmatprep.subr.bf16.mxu0 0
        %1047 = vmatpush1.bf16.msra.mxu0 0
        %1048 = vmatprep.subr.bf16.mxu0 0
        %1049 = vmatpush1.bf16.msra.mxu0 0
        %1050 = vmatprep.subr.bf16.mxu0 0
        %1051 = vmatpush1.bf16.msra.mxu0 0
        %1052 = vmatprep.subr.bf16.mxu0 0
        %1053 = vmatpush1.bf16.msra.mxu0 0
        %1054 = vmatprep.subr.bf16.mxu0 0
        %1055 = vmatpush1.bf16.msra.mxu0 0
        %1056 = vmatprep.subr.bf16.mxu0 0
        %1057 = vmatpush1.bf16.msra.mxu0 0
        %1058 = vmatprep.subr.bf16.mxu0 0
        %1059 = vmatpush1.bf16.msra.mxu0 0
        %1060 = vmatprep.mubr.bf16.mxu0 0
        %1061 = vmatmul.mubr.bf16.gmra.mrb[0].mxu0 %v1017
        %v1062 = vpop.f32.mrb[0].mxu0
        %v1063 = vadd.f32 0.0, %v1062
        %v1064 = vpop.f32.mrb[0].mxu0
        %v1065 = vpop.f32.mrb[0].mxu0
        %v1066 = vadd.f32 0.0, %v1065
        %v1067 = vpop.f32.mrb[0].mxu0
        %1068 = vmatprep.mubr.bf16.mxu0 0
        %1069 = vmatmul.mubr.bf16.gmra.mrb[0].mxu0 %v1020
        %v1070 = vpop.f32.mrb[0].mxu0
        %v1071 = vadd.f32 0.0, %v1070
        %v1072 = vpop.f32.mrb[0].mxu0
        %v1073 = vpop.f32.mrb[0].mxu0
        %v1074 = vadd.f32 0.0, %v1073
        %v1075 = vpop.f32.mrb[0].mxu0
        %1076 = vmatprep.mubr.bf16.mxu0 0
        %1077 = vmatmul.mubr.bf16.gmra.mrb[0].mxu0 %v1023
        %v1078 = vpop.f32.mrb[0].mxu0
        %v1079 = vadd.f32 0.0, %v1078
        %v1080 = vpop.f32.mrb[0].mxu0
        %v1081 = vpop.f32.mrb[0].mxu0
        %v1082 = vadd.f32 0.0, %v1081
        %v1083 = vpop.f32.mrb[0].mxu0
        %1084 = vmatprep.mubr.bf16.mxu0 0
        %1085 = vmatmul.mubr.bf16.gmra.mrb[0].mxu0 %v1026
        %v1086 = vpop.f32.mrb[0].mxu0
        %v1087 = vadd.f32 0.0, %v1086
        %v1088 = vpop.f32.mrb[0].mxu0
        %v1089 = vpop.f32.mrb[0].mxu0
        %v1090 = vadd.f32 0.0, %v1089
        %v1091 = vpop.f32.mrb[0].mxu0
        %1092 = vdwg.mxu0
        %v1093 = vadd.f32 %v941, %v1063
        %v1094 = vadd.f32 %v944, %v1066
        %v1095 = vadd.f32 %v949, %v1071
        %v1096 = vadd.f32 %v952, %v1074
        %v1097 = vadd.f32 %v957, %v1079
        %v1098 = vadd.f32 %v960, %v1082
        %v1099 = vadd.f32 %v965, %v1087
        %v1100 = vadd.f32 %v968, %v1090
        %s1101 = scalar_lea.vmem %s4, 96
        %v1102 = vld [vmem:[%s1101] sm:$0xf]
        %v1103 = vld [vmem:[%s1101 + $0x4] sm:$0xf]
        %v1104 = vld [vmem:[%s1101 + $0x8] sm:$0xf]
        %v1105 = vld [vmem:[%s1101 + $0xc] sm:$0xf]
        %v1106 = vld [vmem:[%s1101 + $0x10] sm:$0xf]
        %v1107 = vld [vmem:[%s1101 + $0x14] sm:$0xf]
        %v1108 = vld [vmem:[%s1101 + $0x18] sm:$0xf]
        %v1109 = vld [vmem:[%s1101 + $0x1c] sm:$0xf]
        %v1118 = vunpack.c.l.b16 %v446
        %v1119 = vunpack.c.l.b16 %v448
        %v1120 = vunpack.c.l.b16 %v450
        %v1121 = vunpack.c.l.b16 %v452
        %v1122 = vunpack.c.l.b16 %v454
        %v1123 = vunpack.c.l.b16 %v456
        %v1124 = vunpack.c.l.b16 %v458
        %v1125 = vunpack.c.l.b16 %v460
        %v1126 = vpack.c.b16 %v1119, %v1118
        %v1127 = vpack.c.b16 %v1121, %v1120
        %v1128 = vpack.c.b16 %v1123, %v1122
        %v1129 = vpack.c.b16 %v1125, %v1124
        %v1138 = vunpack.c.l.b16 %v1102
        %v1139 = vunpack.c.l.b16 %v1103
        %v1140 = vunpack.c.l.b16 %v1104
        %v1141 = vunpack.c.l.b16 %v1105
        %v1142 = vunpack.c.l.b16 %v1106
        %v1143 = vunpack.c.l.b16 %v1107
        %v1144 = vunpack.c.l.b16 %v1108
        %v1145 = vunpack.c.l.b16 %v1109
        %v1146 = vpack.c.b16 %v1139, %v1138
        %v1147 = vpack.c.b16 %v1141, %v1140
        %v1148 = vpack.c.b16 %v1143, %v1142
        %v1149 = vpack.c.b16 %v1145, %v1144
        %v1155 = vsel %vm772, %v1126, 0
        %v1158 = vsel %vm772, %v1127, 0
        %v1161 = vsel %vm772, %v1128, 0
        %v1164 = vsel %vm772, %v1129, 0
        %1166 = vmatprep.subr.bf16.mxu0 0
        %1167 = vmatpush1.bf16.msra.mxu0 %v1146
        %1168 = vmatprep.subr.bf16.mxu0 0
        %1169 = vmatpush1.bf16.msra.mxu0 %v1147
        %1170 = vmatprep.subr.bf16.mxu0 0
        %1171 = vmatpush1.bf16.msra.mxu0 %v1148
        %1172 = vmatprep.subr.bf16.mxu0 0
        %1173 = vmatpush1.bf16.msra.mxu0 %v1149
        %1174 = vmatprep.subr.bf16.mxu0 0
        %1175 = vmatpush1.bf16.msra.mxu0 0
        %1176 = vmatprep.subr.bf16.mxu0 0
        %1177 = vmatpush1.bf16.msra.mxu0 0
        %1178 = vmatprep.subr.bf16.mxu0 0
        %1179 = vmatpush1.bf16.msra.mxu0 0
        %1180 = vmatprep.subr.bf16.mxu0 0
        %1181 = vmatpush1.bf16.msra.mxu0 0
        %1182 = vmatprep.subr.bf16.mxu0 0
        %1183 = vmatpush1.bf16.msra.mxu0 0
        %1184 = vmatprep.subr.bf16.mxu0 0
        %1185 = vmatpush1.bf16.msra.mxu0 0
        %1186 = vmatprep.subr.bf16.mxu0 0
        %1187 = vmatpush1.bf16.msra.mxu0 0
        %1188 = vmatprep.subr.bf16.mxu0 0
        %1189 = vmatpush1.bf16.msra.mxu0 0
        %1190 = vmatprep.subr.bf16.mxu0 0
        %1191 = vmatpush1.bf16.msra.mxu0 0
        %1192 = vmatprep.subr.bf16.mxu0 0
        %1193 = vmatpush1.bf16.msra.mxu0 0
        %1194 = vmatprep.subr.bf16.mxu0 0
        %1195 = vmatpush1.bf16.msra.mxu0 0
        %1196 = vmatprep.subr.bf16.mxu0 0
        %1197 = vmatpush1.bf16.msra.mxu0 0
        %1198 = vmatprep.mubr.bf16.mxu0 0
        %1199 = vmatmul.mubr.bf16.gmra.mrb[0].mxu0 %v1155
        %v1200 = vpop.f32.mrb[0].mxu0
        %v1201 = vadd.f32 0.0, %v1200
        %v1202 = vpop.f32.mrb[0].mxu0
        %v1203 = vpop.f32.mrb[0].mxu0
        %v1204 = vadd.f32 0.0, %v1203
        %v1205 = vpop.f32.mrb[0].mxu0
        %1206 = vmatprep.mubr.bf16.mxu0 0
        %1207 = vmatmul.mubr.bf16.gmra.mrb[0].mxu0 %v1158
        %v1208 = vpop.f32.mrb[0].mxu0
        %v1209 = vadd.f32 0.0, %v1208
        %v1210 = vpop.f32.mrb[0].mxu0
        %v1211 = vpop.f32.mrb[0].mxu0
        %v1212 = vadd.f32 0.0, %v1211
        %v1213 = vpop.f32.mrb[0].mxu0
        %1214 = vmatprep.mubr.bf16.mxu0 0
        %1215 = vmatmul.mubr.bf16.gmra.mrb[0].mxu0 %v1161
        %v1216 = vpop.f32.mrb[0].mxu0
        %v1217 = vadd.f32 0.0, %v1216
        %v1218 = vpop.f32.mrb[0].mxu0
        %v1219 = vpop.f32.mrb[0].mxu0
        %v1220 = vadd.f32 0.0, %v1219
        %v1221 = vpop.f32.mrb[0].mxu0
        %1222 = vmatprep.mubr.bf16.mxu0 0
        %1223 = vmatmul.mubr.bf16.gmra.mrb[0].mxu0 %v1164
        %v1224 = vpop.f32.mrb[0].mxu0
        %v1225 = vadd.f32 0.0, %v1224
        %v1226 = vpop.f32.mrb[0].mxu0
        %v1227 = vpop.f32.mrb[0].mxu0
        %v1228 = vadd.f32 0.0, %v1227
        %v1229 = vpop.f32.mrb[0].mxu0
        %1230 = vdwg.mxu0
        %v1231 = vadd.f32 %v1093, %v1201
        %v1232 = vadd.f32 %v1094, %v1204
        %v1233 = vadd.f32 %v1095, %v1209
        %v1234 = vadd.f32 %v1096, %v1212
        %v1235 = vadd.f32 %v1097, %v1217
        %v1236 = vadd.f32 %v1098, %v1220
        %v1237 = vadd.f32 %v1099, %v1225
        %v1238 = vadd.f32 %v1100, %v1228
        %s1239 = scalar_lea.vmem %s4, 128
        %v1240 = vld [vmem:[%s1239] sm:$0xf]
        %v1241 = vld [vmem:[%s1239 + $0x4] sm:$0xf]
        %v1242 = vld [vmem:[%s1239 + $0x8] sm:$0xf]
        %v1243 = vld [vmem:[%s1239 + $0xc] sm:$0xf]
        %v1244 = vld [vmem:[%s1239 + $0x10] sm:$0xf]
        %v1245 = vld [vmem:[%s1239 + $0x14] sm:$0xf]
        %v1246 = vld [vmem:[%s1239 + $0x18] sm:$0xf]
        %v1247 = vld [vmem:[%s1239 + $0x1c] sm:$0xf]
        %v1256 = vunpack.c.l.b16 %v462
        %v1257 = vunpack.c.l.b16 %v463
        %v1258 = vunpack.c.l.b16 %v464
        %v1259 = vunpack.c.l.b16 %v465
        %v1260 = vunpack.c.l.b16 %v466
        %v1261 = vunpack.c.l.b16 %v467
        %v1262 = vunpack.c.l.b16 %v468
        %v1263 = vunpack.c.l.b16 %v469
        %v1264 = vpack.c.b16 %v1257, %v1256
        %v1265 = vpack.c.b16 %v1259, %v1258
        %v1266 = vpack.c.b16 %v1261, %v1260
        %v1267 = vpack.c.b16 %v1263, %v1262
        %v1276 = vunpack.c.l.b16 %v1240
        %v1277 = vunpack.c.l.b16 %v1241
        %v1278 = vunpack.c.l.b16 %v1242
        %v1279 = vunpack.c.l.b16 %v1243
        %v1280 = vunpack.c.l.b16 %v1244
        %v1281 = vunpack.c.l.b16 %v1245
        %v1282 = vunpack.c.l.b16 %v1246
        %v1283 = vunpack.c.l.b16 %v1247
        %v1284 = vpack.c.b16 %v1277, %v1276
        %v1285 = vpack.c.b16 %v1279, %v1278
        %v1286 = vpack.c.b16 %v1281, %v1280
        %v1287 = vpack.c.b16 %v1283, %v1282
        %v1293 = vsel %vm772, %v1264, 0
        %v1296 = vsel %vm772, %v1265, 0
        %v1299 = vsel %vm772, %v1266, 0
        %v1302 = vsel %vm772, %v1267, 0
        %1304 = vmatprep.subr.bf16.mxu0 0
        %1305 = vmatpush1.bf16.msra.mxu0 %v1284
        %1306 = vmatprep.subr.bf16.mxu0 0
        %1307 = vmatpush1.bf16.msra.mxu0 %v1285
        %1308 = vmatprep.subr.bf16.mxu0 0
        %1309 = vmatpush1.bf16.msra.mxu0 %v1286
        %1310 = vmatprep.subr.bf16.mxu0 0
        %1311 = vmatpush1.bf16.msra.mxu0 %v1287
        %1312 = vmatprep.subr.bf16.mxu0 0
        %1313 = vmatpush1.bf16.msra.mxu0 0
        %1314 = vmatprep.subr.bf16.mxu0 0
        %1315 = vmatpush1.bf16.msra.mxu0 0
        %1316 = vmatprep.subr.bf16.mxu0 0
        %1317 = vmatpush1.bf16.msra.mxu0 0
        %1318 = vmatprep.subr.bf16.mxu0 0
        %1319 = vmatpush1.bf16.msra.mxu0 0
        %1320 = vmatprep.subr.bf16.mxu0 0
        %1321 = vmatpush1.bf16.msra.mxu0 0
        %1322 = vmatprep.subr.bf16.mxu0 0
        %1323 = vmatpush1.bf16.msra.mxu0 0
        %1324 = vmatprep.subr.bf16.mxu0 0
        %1325 = vmatpush1.bf16.msra.mxu0 0
        %1326 = vmatprep.subr.bf16.mxu0 0
        %1327 = vmatpush1.bf16.msra.mxu0 0
        %1328 = vmatprep.subr.bf16.mxu0 0
        %1329 = vmatpush1.bf16.msra.mxu0 0
        %1330 = vmatprep.subr.bf16.mxu0 0
        %1331 = vmatpush1.bf16.msra.mxu0 0
        %1332 = vmatprep.subr.bf16.mxu0 0
        %1333 = vmatpush1.bf16.msra.mxu0 0
        %1334 = vmatprep.subr.bf16.mxu0 0
        %1335 = vmatpush1.bf16.msra.mxu0 0
        %1336 = vmatprep.mubr.bf16.mxu0 0
        %1337 = vmatmul.mubr.bf16.gmra.mrb[0].mxu0 %v1293
        %v1338 = vpop.f32.mrb[0].mxu0
        %v1339 = vadd.f32 0.0, %v1338
        %v1340 = vpop.f32.mrb[0].mxu0
        %v1341 = vpop.f32.mrb[0].mxu0
        %v1342 = vadd.f32 0.0, %v1341
        %v1343 = vpop.f32.mrb[0].mxu0
        %1344 = vmatprep.mubr.bf16.mxu0 0
        %1345 = vmatmul.mubr.bf16.gmra.mrb[0].mxu0 %v1296
        %v1346 = vpop.f32.mrb[0].mxu0
        %v1347 = vadd.f32 0.0, %v1346
        %v1348 = vpop.f32.mrb[0].mxu0
        %v1349 = vpop.f32.mrb[0].mxu0
        %v1350 = vadd.f32 0.0, %v1349
        %v1351 = vpop.f32.mrb[0].mxu0
        %1352 = vmatprep.mubr.bf16.mxu0 0
        %1353 = vmatmul.mubr.bf16.gmra.mrb[0].mxu0 %v1299
        %v1354 = vpop.f32.mrb[0].mxu0
        %v1355 = vadd.f32 0.0, %v1354
        %v1356 = vpop.f32.mrb[0].mxu0
        %v1357 = vpop.f32.mrb[0].mxu0
        %v1358 = vadd.f32 0.0, %v1357
        %v1359 = vpop.f32.mrb[0].mxu0
        %1360 = vmatprep.mubr.bf16.mxu0 0
        %1361 = vmatmul.mubr.bf16.gmra.mrb[0].mxu0 %v1302
        %v1362 = vpop.f32.mrb[0].mxu0
        %v1363 = vadd.f32 0.0, %v1362
        %v1364 = vpop.f32.mrb[0].mxu0
        %v1365 = vpop.f32.mrb[0].mxu0
        %v1366 = vadd.f32 0.0, %v1365
        %v1367 = vpop.f32.mrb[0].mxu0
        %1368 = vdwg.mxu0
        %v1369 = vadd.f32 %v1231, %v1339
        %v1370 = vadd.f32 %v1232, %v1342
        %v1371 = vadd.f32 %v1233, %v1347
        %v1372 = vadd.f32 %v1234, %v1350
        %v1373 = vadd.f32 %v1235, %v1355
        %v1374 = vadd.f32 %v1236, %v1358
        %v1375 = vadd.f32 %v1237, %v1363
        %v1376 = vadd.f32 %v1238, %v1366
        %s1377 = scalar_lea.vmem %s4, 160
        %v1378 = vld [vmem:[%s1377] sm:$0xf]
        %v1379 = vld [vmem:[%s1377 + $0x4] sm:$0xf]
        %v1380 = vld [vmem:[%s1377 + $0x8] sm:$0xf]
        %v1381 = vld [vmem:[%s1377 + $0xc] sm:$0xf]
        %v1382 = vld [vmem:[%s1377 + $0x10] sm:$0xf]
        %v1383 = vld [vmem:[%s1377 + $0x14] sm:$0xf]
        %v1384 = vld [vmem:[%s1377 + $0x18] sm:$0xf]
        %v1385 = vld [vmem:[%s1377 + $0x1c] sm:$0xf]
        %v1386 = vunpack.c.l.b16 %v598
        %v1387 = vunpack.c.l.b16 %v612
        %v1388 = vunpack.c.l.b16 %v626
        %v1389 = vunpack.c.l.b16 %v640
        %v1390 = vunpack.c.l.b16 %v654
        %v1391 = vunpack.c.l.b16 %v668
        %v1392 = vunpack.c.l.b16 %v682
        %v1393 = vunpack.c.l.b16 %v696
        %v1394 = vpack.c.b16 %v1387, %v1386
        %v1395 = vpack.c.b16 %v1389, %v1388
        %v1396 = vpack.c.b16 %v1391, %v1390
        %v1397 = vpack.c.b16 %v1393, %v1392
        %v1406 = vunpack.c.l.b16 %v1378
        %v1407 = vunpack.c.l.b16 %v1379
        %v1408 = vunpack.c.l.b16 %v1380
        %v1409 = vunpack.c.l.b16 %v1381
        %v1410 = vunpack.c.l.b16 %v1382
        %v1411 = vunpack.c.l.b16 %v1383
        %v1412 = vunpack.c.l.b16 %v1384
        %v1413 = vunpack.c.l.b16 %v1385
        %v1414 = vpack.c.b16 %v1407, %v1406
        %v1415 = vpack.c.b16 %v1409, %v1408
        %v1416 = vpack.c.b16 %v1411, %v1410
        %v1417 = vpack.c.b16 %v1413, %v1412
        %v1423 = vsel %vm772, %v1394, 0
        %v1426 = vsel %vm772, %v1395, 0
        %v1429 = vsel %vm772, %v1396, 0
        %v1432 = vsel %vm772, %v1397, 0
        %1434 = vmatprep.subr.bf16.mxu0 0
        %1435 = vmatpush1.bf16.msra.mxu0 %v1414
        %1436 = vmatprep.subr.bf16.mxu0 0
        %1437 = vmatpush1.bf16.msra.mxu0 %v1415
        %1438 = vmatprep.subr.bf16.mxu0 0
        %1439 = vmatpush1.bf16.msra.mxu0 %v1416
        %1440 = vmatprep.subr.bf16.mxu0 0
        %1441 = vmatpush1.bf16.msra.mxu0 %v1417
        %1442 = vmatprep.subr.bf16.mxu0 0
        %1443 = vmatpush1.bf16.msra.mxu0 0
        %1444 = vmatprep.subr.bf16.mxu0 0
        %1445 = vmatpush1.bf16.msra.mxu0 0
        %1446 = vmatprep.subr.bf16.mxu0 0
        %1447 = vmatpush1.bf16.msra.mxu0 0
        %1448 = vmatprep.subr.bf16.mxu0 0
        %1449 = vmatpush1.bf16.msra.mxu0 0
        %1450 = vmatprep.subr.bf16.mxu0 0
        %1451 = vmatpush1.bf16.msra.mxu0 0
        %1452 = vmatprep.subr.bf16.mxu0 0
        %1453 = vmatpush1.bf16.msra.mxu0 0
        %1454 = vmatprep.subr.bf16.mxu0 0
        %1455 = vmatpush1.bf16.msra.mxu0 0
        %1456 = vmatprep.subr.bf16.mxu0 0
        %1457 = vmatpush1.bf16.msra.mxu0 0
        %1458 = vmatprep.subr.bf16.mxu0 0
        %1459 = vmatpush1.bf16.msra.mxu0 0
        %1460 = vmatprep.subr.bf16.mxu0 0
        %1461 = vmatpush1.bf16.msra.mxu0 0
        %1462 = vmatprep.subr.bf16.mxu0 0
        %1463 = vmatpush1.bf16.msra.mxu0 0
        %1464 = vmatprep.subr.bf16.mxu0 0
        %1465 = vmatpush1.bf16.msra.mxu0 0
        %1466 = vmatprep.mubr.bf16.mxu0 0
        %1467 = vmatmul.mubr.bf16.gmra.mrb[0].mxu0 %v1423
        %v1468 = vpop.f32.mrb[0].mxu0
        %v1469 = vadd.f32 0.0, %v1468
        %v1470 = vpop.f32.mrb[0].mxu0
        %v1471 = vpop.f32.mrb[0].mxu0
        %v1472 = vadd.f32 0.0, %v1471
        %v1473 = vpop.f32.mrb[0].mxu0
        %1474 = vmatprep.mubr.bf16.mxu0 0
        %1475 = vmatmul.mubr.bf16.gmra.mrb[0].mxu0 %v1426
        %v1476 = vpop.f32.mrb[0].mxu0
        %v1477 = vadd.f32 0.0, %v1476
        %v1478 = vpop.f32.mrb[0].mxu0
        %v1479 = vpop.f32.mrb[0].mxu0
        %v1480 = vadd.f32 0.0, %v1479
        %v1481 = vpop.f32.mrb[0].mxu0
        %1482 = vmatprep.mubr.bf16.mxu0 0
        %1483 = vmatmul.mubr.bf16.gmra.mrb[0].mxu0 %v1429
        %v1484 = vpop.f32.mrb[0].mxu0
        %v1485 = vadd.f32 0.0, %v1484
        %v1486 = vpop.f32.mrb[0].mxu0
        %v1487 = vpop.f32.mrb[0].mxu0
        %v1488 = vadd.f32 0.0, %v1487
        %v1489 = vpop.f32.mrb[0].mxu0
        %1490 = vmatprep.mubr.bf16.mxu0 0
        %1491 = vmatmul.mubr.bf16.gmra.mrb[0].mxu0 %v1432
        %v1492 = vpop.f32.mrb[0].mxu0
        %v1493 = vadd.f32 0.0, %v1492
        %v1494 = vpop.f32.mrb[0].mxu0
        %v1495 = vpop.f32.mrb[0].mxu0
        %v1496 = vadd.f32 0.0, %v1495
        %v1497 = vpop.f32.mrb[0].mxu0
        %1498 = vdwg.mxu0
        %v1499 = vadd.f32 %v1369, %v1469
        %v1500 = vadd.f32 %v1370, %v1472
        %v1501 = vadd.f32 %v1371, %v1477
        %v1502 = vadd.f32 %v1372, %v1480
        %v1503 = vadd.f32 %v1373, %v1485
        %v1504 = vadd.f32 %v1374, %v1488
        %v1505 = vadd.f32 %v1375, %v1493
        %v1506 = vadd.f32 %v1376, %v1496
        %s1507 = scalar_lea.vmem %s4, 192
        %v1508 = vld [vmem:[%s1507] sm:$0xf]
        %v1509 = vld [vmem:[%s1507 + $0x4] sm:$0xf]
        %v1510 = vld [vmem:[%s1507 + $0x8] sm:$0xf]
        %v1511 = vld [vmem:[%s1507 + $0xc] sm:$0xf]
        %v1512 = vld [vmem:[%s1507 + $0x10] sm:$0xf]
        %v1513 = vld [vmem:[%s1507 + $0x14] sm:$0xf]
        %v1514 = vld [vmem:[%s1507 + $0x18] sm:$0xf]
        %v1515 = vld [vmem:[%s1507 + $0x1c] sm:$0xf]
        %v1517 = vunpack.c.l.b16 %v435
        %v1518 = vpack.c.b16 %v860, %v859
        %v1519 = vpack.c.b16 %v862, %v861
        %v1520 = vpack.c.b16 %v864, %v863
        %v1521 = vpack.c.b16 %v1517, %v865
        %v1530 = vunpack.c.l.b16 %v1508
        %v1531 = vunpack.c.l.b16 %v1509
        %v1532 = vunpack.c.l.b16 %v1510
        %v1533 = vunpack.c.l.b16 %v1511
        %v1534 = vunpack.c.l.b16 %v1512
        %v1535 = vunpack.c.l.b16 %v1513
        %v1536 = vunpack.c.l.b16 %v1514
        %v1537 = vunpack.c.l.b16 %v1515
        %v1538 = vpack.c.b16 %v1531, %v1530
        %v1539 = vpack.c.b16 %v1533, %v1532
        %v1540 = vpack.c.b16 %v1535, %v1534
        %v1541 = vpack.c.b16 %v1537, %v1536
        %v1547 = vsel %vm772, %v1518, 0
        %v1550 = vsel %vm772, %v1519, 0
        %v1553 = vsel %vm772, %v1520, 0
        %v1556 = vsel %vm772, %v1521, 0
        %1558 = vmatprep.subr.bf16.mxu0 0
        %1559 = vmatpush1.bf16.msra.mxu0 %v1538
        %1560 = vmatprep.subr.bf16.mxu0 0
        %1561 = vmatpush1.bf16.msra.mxu0 %v1539
        %1562 = vmatprep.subr.bf16.mxu0 0
        %1563 = vmatpush1.bf16.msra.mxu0 %v1540
        %1564 = vmatprep.subr.bf16.mxu0 0
        %1565 = vmatpush1.bf16.msra.mxu0 %v1541
        %1566 = vmatprep.subr.bf16.mxu0 0
        %1567 = vmatpush1.bf16.msra.mxu0 0
        %1568 = vmatprep.subr.bf16.mxu0 0
        %1569 = vmatpush1.bf16.msra.mxu0 0
        %1570 = vmatprep.subr.bf16.mxu0 0
        %1571 = vmatpush1.bf16.msra.mxu0 0
        %1572 = vmatprep.subr.bf16.mxu0 0
        %1573 = vmatpush1.bf16.msra.mxu0 0
        %1574 = vmatprep.subr.bf16.mxu0 0
        %1575 = vmatpush1.bf16.msra.mxu0 0
        %1576 = vmatprep.subr.bf16.mxu0 0
        %1577 = vmatpush1.bf16.msra.mxu0 0
        %1578 = vmatprep.subr.bf16.mxu0 0
        %1579 = vmatpush1.bf16.msra.mxu0 0
        %1580 = vmatprep.subr.bf16.mxu0 0
        %1581 = vmatpush1.bf16.msra.mxu0 0
        %1582 = vmatprep.subr.bf16.mxu0 0
        %1583 = vmatpush1.bf16.msra.mxu0 0
        %1584 = vmatprep.subr.bf16.mxu0 0
        %1585 = vmatpush1.bf16.msra.mxu0 0
        %1586 = vmatprep.subr.bf16.mxu0 0
        %1587 = vmatpush1.bf16.msra.mxu0 0
        %1588 = vmatprep.subr.bf16.mxu0 0
        %1589 = vmatpush1.bf16.msra.mxu0 0
        %1590 = vmatprep.mubr.bf16.mxu0 0
        %1591 = vmatmul.mubr.bf16.gmra.mrb[0].mxu0 %v1547
        %v1592 = vpop.f32.mrb[0].mxu0
        %v1593 = vadd.f32 0.0, %v1592
        %v1594 = vpop.f32.mrb[0].mxu0
        %v1595 = vpop.f32.mrb[0].mxu0
        %v1596 = vadd.f32 0.0, %v1595
        %v1597 = vpop.f32.mrb[0].mxu0
        %1598 = vmatprep.mubr.bf16.mxu0 0
        %1599 = vmatmul.mubr.bf16.gmra.mrb[0].mxu0 %v1550
        %v1600 = vpop.f32.mrb[0].mxu0
        %v1601 = vadd.f32 0.0, %v1600
        %v1602 = vpop.f32.mrb[0].mxu0
        %v1603 = vpop.f32.mrb[0].mxu0
        %v1604 = vadd.f32 0.0, %v1603
        %v1605 = vpop.f32.mrb[0].mxu0
        %1606 = vmatprep.mubr.bf16.mxu0 0
        %1607 = vmatmul.mubr.bf16.gmra.mrb[0].mxu0 %v1553
        %v1608 = vpop.f32.mrb[0].mxu0
        %v1609 = vadd.f32 0.0, %v1608
        %v1610 = vpop.f32.mrb[0].mxu0
        %v1611 = vpop.f32.mrb[0].mxu0
        %v1612 = vadd.f32 0.0, %v1611
        %v1613 = vpop.f32.mrb[0].mxu0
        %1614 = vmatprep.mubr.bf16.mxu0 0
        %1615 = vmatmul.mubr.bf16.gmra.mrb[0].mxu0 %v1556
        %v1616 = vpop.f32.mrb[0].mxu0
        %v1617 = vadd.f32 0.0, %v1616
        %v1618 = vpop.f32.mrb[0].mxu0
        %v1619 = vpop.f32.mrb[0].mxu0
        %v1620 = vadd.f32 0.0, %v1619
        %v1621 = vpop.f32.mrb[0].mxu0
        %1622 = vdwg.mxu0
        %v1623 = vadd.f32 %v1499, %v1593
        %v1624 = vadd.f32 %v1500, %v1596
        %v1625 = vadd.f32 %v1501, %v1601
        %v1626 = vadd.f32 %v1502, %v1604
        %v1627 = vadd.f32 %v1503, %v1609
        %v1628 = vadd.f32 %v1504, %v1612
        %v1629 = vadd.f32 %v1505, %v1617
        %v1630 = vadd.f32 %v1506, %v1620
        %s1631 = scalar_lea.vmem %s4, 224
        %v1632 = vld [vmem:[%s1631] sm:$0xf]
        %v1633 = vld [vmem:[%s1631 + $0x4] sm:$0xf]
        %v1634 = vld [vmem:[%s1631 + $0x8] sm:$0xf]
        %v1635 = vld [vmem:[%s1631 + $0xc] sm:$0xf]
        %v1636 = vld [vmem:[%s1631 + $0x10] sm:$0xf]
        %v1637 = vld [vmem:[%s1631 + $0x14] sm:$0xf]
        %v1638 = vld [vmem:[%s1631 + $0x18] sm:$0xf]
        %v1639 = vld [vmem:[%s1631 + $0x1c] sm:$0xf]
        %v1641 = vunpack.c.l.b16 %v445
        %v1642 = vpack.c.b16 %v738, %v737
        %v1643 = vpack.c.b16 %v740, %v739
        %v1644 = vpack.c.b16 %v742, %v741
        %v1645 = vpack.c.b16 %v1641, %v743
        %v1654 = vunpack.c.l.b16 %v1632
        %v1655 = vunpack.c.l.b16 %v1633
        %v1656 = vunpack.c.l.b16 %v1634
        %v1657 = vunpack.c.l.b16 %v1635
        %v1658 = vunpack.c.l.b16 %v1636
        %v1659 = vunpack.c.l.b16 %v1637
        %v1660 = vunpack.c.l.b16 %v1638
        %v1661 = vunpack.c.l.b16 %v1639
        %v1662 = vpack.c.b16 %v1655, %v1654
        %v1663 = vpack.c.b16 %v1657, %v1656
        %v1664 = vpack.c.b16 %v1659, %v1658
        %v1665 = vpack.c.b16 %v1661, %v1660
        %v1671 = vsel %vm772, %v1642, 0
        %v1674 = vsel %vm772, %v1643, 0
        %v1677 = vsel %vm772, %v1644, 0
        %v1680 = vsel %vm772, %v1645, 0
        %1682 = vmatprep.subr.bf16.mxu0 0
        %1683 = vmatpush1.bf16.msra.mxu0 %v1662
        %1684 = vmatprep.subr.bf16.mxu0 0
        %1685 = vmatpush1.bf16.msra.mxu0 %v1663
        %1686 = vmatprep.subr.bf16.mxu0 0
        %1687 = vmatpush1.bf16.msra.mxu0 %v1664
        %1688 = vmatprep.subr.bf16.mxu0 0
        %1689 = vmatpush1.bf16.msra.mxu0 %v1665
        %1690 = vmatprep.subr.bf16.mxu0 0
        %1691 = vmatpush1.bf16.msra.mxu0 0
        %1692 = vmatprep.subr.bf16.mxu0 0
        %1693 = vmatpush1.bf16.msra.mxu0 0
        %1694 = vmatprep.subr.bf16.mxu0 0
        %1695 = vmatpush1.bf16.msra.mxu0 0
        %1696 = vmatprep.subr.bf16.mxu0 0
        %1697 = vmatpush1.bf16.msra.mxu0 0
        %1698 = vmatprep.subr.bf16.mxu0 0
        %1699 = vmatpush1.bf16.msra.mxu0 0
        %1700 = vmatprep.subr.bf16.mxu0 0
        %1701 = vmatpush1.bf16.msra.mxu0 0
        %1702 = vmatprep.subr.bf16.mxu0 0
        %1703 = vmatpush1.bf16.msra.mxu0 0
        %1704 = vmatprep.subr.bf16.mxu0 0
        %1705 = vmatpush1.bf16.msra.mxu0 0
        %1706 = vmatprep.subr.bf16.mxu0 0
        %1707 = vmatpush1.bf16.msra.mxu0 0
        %1708 = vmatprep.subr.bf16.mxu0 0
        %1709 = vmatpush1.bf16.msra.mxu0 0
        %1710 = vmatprep.subr.bf16.mxu0 0
        %1711 = vmatpush1.bf16.msra.mxu0 0
        %1712 = vmatprep.subr.bf16.mxu0 0
        %1713 = vmatpush1.bf16.msra.mxu0 0
        %1714 = vmatprep.mubr.bf16.mxu0 0
        %1715 = vmatmul.mubr.bf16.gmra.mrb[0].mxu0 %v1671
        %v1716 = vpop.f32.mrb[0].mxu0
        %v1717 = vadd.f32 0.0, %v1716
        %v1718 = vpop.f32.mrb[0].mxu0
        %v1719 = vpop.f32.mrb[0].mxu0
        %v1720 = vadd.f32 0.0, %v1719
        %v1721 = vpop.f32.mrb[0].mxu0
        %1722 = vmatprep.mubr.bf16.mxu0 0
        %1723 = vmatmul.mubr.bf16.gmra.mrb[0].mxu0 %v1674
        %v1724 = vpop.f32.mrb[0].mxu0
        %v1725 = vadd.f32 0.0, %v1724
        %v1726 = vpop.f32.mrb[0].mxu0
        %v1727 = vpop.f32.mrb[0].mxu0
        %v1728 = vadd.f32 0.0, %v1727
        %v1729 = vpop.f32.mrb[0].mxu0
        %1730 = vmatprep.mubr.bf16.mxu0 0
        %1731 = vmatmul.mubr.bf16.gmra.mrb[0].mxu0 %v1677
        %v1732 = vpop.f32.mrb[0].mxu0
        %v1733 = vadd.f32 0.0, %v1732
        %v1734 = vpop.f32.mrb[0].mxu0
        %v1735 = vpop.f32.mrb[0].mxu0
        %v1736 = vadd.f32 0.0, %v1735
        %v1737 = vpop.f32.mrb[0].mxu0
        %1738 = vmatprep.mubr.bf16.mxu0 0
        %1739 = vmatmul.mubr.bf16.gmra.mrb[0].mxu0 %v1680
        %v1740 = vpop.f32.mrb[0].mxu0
        %v1741 = vadd.f32 0.0, %v1740
        %v1742 = vpop.f32.mrb[0].mxu0
        %v1743 = vpop.f32.mrb[0].mxu0
        %v1744 = vadd.f32 0.0, %v1743
        %v1745 = vpop.f32.mrb[0].mxu0
        %1746 = vdwg.mxu0
        %v1747 = vadd.f32 %v1623, %v1717
        %v1748 = vadd.f32 %v1624, %v1720
        %v1749 = vadd.f32 %v1625, %v1725
        %v1750 = vadd.f32 %v1626, %v1728
        %v1751 = vadd.f32 %v1627, %v1733
        %v1752 = vadd.f32 %v1628, %v1736
        %v1753 = vadd.f32 %v1629, %v1741
        %v1754 = vadd.f32 %v1630, %v1744
        %s1755 = scalar_lea.vmem %s4, 256
        %v1756 = vld [vmem:[%s1755] sm:$0xf]
        %v1757 = vld [vmem:[%s1755 + $0x4] sm:$0xf]
        %v1758 = vld [vmem:[%s1755 + $0x8] sm:$0xf]
        %v1759 = vld [vmem:[%s1755 + $0xc] sm:$0xf]
        %v1760 = vld [vmem:[%s1755 + $0x10] sm:$0xf]
        %v1761 = vld [vmem:[%s1755 + $0x14] sm:$0xf]
        %v1762 = vld [vmem:[%s1755 + $0x18] sm:$0xf]
        %v1763 = vld [vmem:[%s1755 + $0x1c] sm:$0xf]
        %v1764 = vunpack.c.l.b16 %v710
        %v1765 = vpack.c.b16 %v982, %v981
        %v1766 = vpack.c.b16 %v984, %v983
        %v1767 = vpack.c.b16 %v986, %v985
        %v1768 = vpack.c.b16 %v1764, %v987
        %v1777 = vunpack.c.l.b16 %v1756
        %v1778 = vunpack.c.l.b16 %v1757
        %v1779 = vunpack.c.l.b16 %v1758
        %v1780 = vunpack.c.l.b16 %v1759
        %v1781 = vunpack.c.l.b16 %v1760
        %v1782 = vunpack.c.l.b16 %v1761
        %v1783 = vunpack.c.l.b16 %v1762
        %v1784 = vunpack.c.l.b16 %v1763
        %v1785 = vpack.c.b16 %v1778, %v1777
        %v1786 = vpack.c.b16 %v1780, %v1779
        %v1787 = vpack.c.b16 %v1782, %v1781
        %v1788 = vpack.c.b16 %v1784, %v1783
        %v1794 = vsel %vm772, %v1765, 0
        %v1797 = vsel %vm772, %v1766, 0
        %v1800 = vsel %vm772, %v1767, 0
        %v1803 = vsel %vm772, %v1768, 0
        %1805 = vmatprep.subr.bf16.mxu0 0
        %1806 = vmatpush1.bf16.msra.mxu0 %v1785
        %1807 = vmatprep.subr.bf16.mxu0 0
        %1808 = vmatpush1.bf16.msra.mxu0 %v1786
        %1809 = vmatprep.subr.bf16.mxu0 0
        %1810 = vmatpush1.bf16.msra.mxu0 %v1787
        %1811 = vmatprep.subr.bf16.mxu0 0
        %1812 = vmatpush1.bf16.msra.mxu0 %v1788
        %1813 = vmatprep.subr.bf16.mxu0 0
        %1814 = vmatpush1.bf16.msra.mxu0 0
        %1815 = vmatprep.subr.bf16.mxu0 0
        %1816 = vmatpush1.bf16.msra.mxu0 0
        %1817 = vmatprep.subr.bf16.mxu0 0
        %1818 = vmatpush1.bf16.msra.mxu0 0
        %1819 = vmatprep.subr.bf16.mxu0 0
        %1820 = vmatpush1.bf16.msra.mxu0 0
        %1821 = vmatprep.subr.bf16.mxu0 0
        %1822 = vmatpush1.bf16.msra.mxu0 0
        %1823 = vmatprep.subr.bf16.mxu0 0
        %1824 = vmatpush1.bf16.msra.mxu0 0
        %1825 = vmatprep.subr.bf16.mxu0 0
        %1826 = vmatpush1.bf16.msra.mxu0 0
        %1827 = vmatprep.subr.bf16.mxu0 0
        %1828 = vmatpush1.bf16.msra.mxu0 0
        %1829 = vmatprep.subr.bf16.mxu0 0
        %1830 = vmatpush1.bf16.msra.mxu0 0
        %1831 = vmatprep.subr.bf16.mxu0 0
        %1832 = vmatpush1.bf16.msra.mxu0 0
        %1833 = vmatprep.subr.bf16.mxu0 0
        %1834 = vmatpush1.bf16.msra.mxu0 0
        %1835 = vmatprep.subr.bf16.mxu0 0
        %1836 = vmatpush1.bf16.msra.mxu0 0
        %1837 = vmatprep.mubr.bf16.mxu0 0
        %1838 = vmatmul.mubr.bf16.gmra.mrb[0].mxu0 %v1794
        %v1839 = vpop.f32.mrb[0].mxu0
        %v1840 = vadd.f32 0.0, %v1839
        %v1841 = vpop.f32.mrb[0].mxu0
        %v1842 = vpop.f32.mrb[0].mxu0
        %v1843 = vadd.f32 0.0, %v1842
        %v1844 = vpop.f32.mrb[0].mxu0
        %1845 = vmatprep.mubr.bf16.mxu0 0
        %1846 = vmatmul.mubr.bf16.gmra.mrb[0].mxu0 %v1797
        %v1847 = vpop.f32.mrb[0].mxu0
        %v1848 = vadd.f32 0.0, %v1847
        %v1849 = vpop.f32.mrb[0].mxu0
        %v1850 = vpop.f32.mrb[0].mxu0
        %v1851 = vadd.f32 0.0, %v1850
        %v1852 = vpop.f32.mrb[0].mxu0
        %1853 = vmatprep.mubr.bf16.mxu0 0
        %1854 = vmatmul.mubr.bf16.gmra.mrb[0].mxu0 %v1800
        %v1855 = vpop.f32.mrb[0].mxu0
        %v1856 = vadd.f32 0.0, %v1855
        %v1857 = vpop.f32.mrb[0].mxu0
        %v1858 = vpop.f32.mrb[0].mxu0
        %v1859 = vadd.f32 0.0, %v1858
        %v1860 = vpop.f32.mrb[0].mxu0
        %1861 = vmatprep.mubr.bf16.mxu0 0
        %1862 = vmatmul.mubr.bf16.gmra.mrb[0].mxu0 %v1803
        %v1863 = vpop.f32.mrb[0].mxu0
        %v1864 = vadd.f32 0.0, %v1863
        %v1865 = vpop.f32.mrb[0].mxu0
        %v1866 = vpop.f32.mrb[0].mxu0
        %v1867 = vadd.f32 0.0, %v1866
        %v1868 = vpop.f32.mrb[0].mxu0
        %1869 = vdwg.mxu0
        %v1870 = vadd.f32 %v1747, %v1840
        %v1871 = vadd.f32 %v1748, %v1843
        %v1872 = vadd.f32 %v1749, %v1848
        %v1873 = vadd.f32 %v1750, %v1851
        %v1874 = vadd.f32 %v1751, %v1856
        %v1875 = vadd.f32 %v1752, %v1859
        %v1876 = vadd.f32 %v1753, %v1864
        %v1877 = vadd.f32 %v1754, %v1867
        %v1878 = vld [vmem:[%s5] sm:$0x1]
        %v1880 = vlaneseq
        %v1881 = vshrl.u32 %v1880, 7
        %v1882 = vsub.s32 0, %v1881
        %v1883 = vrot.slane %v1878, %v1882
        %v1885 = vadd.f32 %v1870, %v1883
        %v1886 = vadd.f32 %v1871, %v1883
        %v1887 = vadd.f32 %v1872, %v1883
        %v1888 = vadd.f32 %v1873, %v1883
        %v1889 = vadd.f32 %v1874, %v1883
        %v1890 = vadd.f32 %v1875, %v1883
        %v1891 = vadd.f32 %v1876, %v1883
        %v1892 = vadd.f32 %v1877, %v1883
        %v1893 = vmax.f32 %v1885, 0.0
        %v1894 = vmax.f32 %v1886, 0.0
        %v1895 = vmax.f32 %v1887, 0.0
        %v1896 = vmax.f32 %v1888, 0.0
        %v1897 = vmax.f32 %v1889, 0.0
        %v1898 = vmax.f32 %v1890, 0.0
        %v1899 = vmax.f32 %v1891, 0.0
        %v1900 = vmax.f32 %v1892, 0.0
        %v1901 = vpack.c.bf16 %v1894, %v1893
        %v1902 = vpack.c.bf16 %v1896, %v1895
        %v1903 = vpack.c.bf16 %v1898, %v1897
        %v1904 = vpack.c.bf16 %v1900, %v1899
        %v1905 = vld [vmem:[%s8] sm:$0xf]
        %v1906 = vld [vmem:[%s8 + $0x4] sm:$0xf]
        %v1907 = vld [vmem:[%s8 + $0x8] sm:$0xf]
        %v1908 = vld [vmem:[%s8 + $0xc] sm:$0xf]
        %v1909 = vld [vmem:[%s8 + $0x10] sm:$0xf]
        %v1910 = vld [vmem:[%s8 + $0x14] sm:$0xf]
        %v1911 = vld [vmem:[%s8 + $0x18] sm:$0xf]
        %v1912 = vld [vmem:[%s8 + $0x1c] sm:$0xf]
        %v1913 = vld [vmem:[%s9] sm:$0x1]
        %v1915 = vlaneseq
        %v1916 = vshrl.u32 %v1915, 7
        %v1917 = vsub.s32 0, %v1916
        %v1918 = vrot.slane %v1913, %v1917
        %v1928 = vunpack.c.l.b16 %v1905
        %v1929 = vunpack.c.l.b16 %v1906
        %v1930 = vunpack.c.l.b16 %v1907
        %v1931 = vunpack.c.l.b16 %v1908
        %v1932 = vunpack.c.l.b16 %v1909
        %v1933 = vunpack.c.l.b16 %v1910
        %v1934 = vunpack.c.l.b16 %v1911
        %v1935 = vunpack.c.l.b16 %v1912
        %v1936 = vpack.c.b16 %v1929, %v1928
        %v1937 = vpack.c.b16 %v1931, %v1930
        %v1938 = vpack.c.b16 %v1933, %v1932
        %v1939 = vpack.c.b16 %v1935, %v1934
        %1944 = vmatprep.subr.bf16.mxu0 0
        %1945 = vmatpush1.bf16.msra.mxu0 %v1936
        %1946 = vmatprep.subr.bf16.mxu0 0
        %1947 = vmatpush1.bf16.msra.mxu0 %v1937
        %1948 = vmatprep.subr.bf16.mxu0 0
        %1949 = vmatpush1.bf16.msra.mxu0 %v1938
        %1950 = vmatprep.subr.bf16.mxu0 0
        %1951 = vmatpush1.bf16.msra.mxu0 %v1939
        %1952 = vmatprep.subr.bf16.mxu0 0
        %1953 = vmatpush1.bf16.msra.mxu0 0
        %1954 = vmatprep.subr.bf16.mxu0 0
        %1955 = vmatpush1.bf16.msra.mxu0 0
        %1956 = vmatprep.subr.bf16.mxu0 0
        %1957 = vmatpush1.bf16.msra.mxu0 0
        %1958 = vmatprep.subr.bf16.mxu0 0
        %1959 = vmatpush1.bf16.msra.mxu0 0
        %1960 = vmatprep.subr.bf16.mxu0 0
        %1961 = vmatpush1.bf16.msra.mxu0 0
        %1962 = vmatprep.subr.bf16.mxu0 0
        %1963 = vmatpush1.bf16.msra.mxu0 0
        %1964 = vmatprep.subr.bf16.mxu0 0
        %1965 = vmatpush1.bf16.msra.mxu0 0
        %1966 = vmatprep.subr.bf16.mxu0 0
        %1967 = vmatpush1.bf16.msra.mxu0 0
        %1968 = vmatprep.subr.bf16.mxu0 0
        %1969 = vmatpush1.bf16.msra.mxu0 0
        %1970 = vmatprep.subr.bf16.mxu0 0
        %1971 = vmatpush1.bf16.msra.mxu0 0
        %1972 = vmatprep.subr.bf16.mxu0 0
        %1973 = vmatpush1.bf16.msra.mxu0 0
        %1974 = vmatprep.subr.bf16.mxu0 0
        %1975 = vmatpush1.bf16.msra.mxu0 0
        %1976 = vmatprep.mubr.bf16.mxu0 0
        %1977 = vmatmul.mubr.bf16.gmra.mrb[0].mxu0 %v1293
        %v1978 = vpop.f32.mrb[0].mxu0
        %v1979 = vadd.f32 %v1918, %v1978
        %v1980 = vpop.f32.mrb[0].mxu0
        %v1981 = vpop.f32.mrb[0].mxu0
        %v1982 = vadd.f32 %v1918, %v1981
        %v1983 = vpop.f32.mrb[0].mxu0
        %1984 = vmatprep.mubr.bf16.mxu0 0
        %1985 = vmatmul.mubr.bf16.gmra.mrb[0].mxu0 %v1296
        %v1986 = vpop.f32.mrb[0].mxu0
        %v1987 = vadd.f32 %v1918, %v1986
        %v1988 = vpop.f32.mrb[0].mxu0
        %v1989 = vpop.f32.mrb[0].mxu0
        %v1990 = vadd.f32 %v1918, %v1989
        %v1991 = vpop.f32.mrb[0].mxu0
        %1992 = vmatprep.mubr.bf16.mxu0 0
        %1993 = vmatmul.mubr.bf16.gmra.mrb[0].mxu0 %v1299
        %v1994 = vpop.f32.mrb[0].mxu0
        %v1995 = vadd.f32 %v1918, %v1994
        %v1996 = vpop.f32.mrb[0].mxu0
        %v1997 = vpop.f32.mrb[0].mxu0
        %v1998 = vadd.f32 %v1918, %v1997
        %v1999 = vpop.f32.mrb[0].mxu0
        %2000 = vmatprep.mubr.bf16.mxu0 0
        %2001 = vmatmul.mubr.bf16.gmra.mrb[0].mxu0 %v1302
        %v2002 = vpop.f32.mrb[0].mxu0
        %v2003 = vadd.f32 %v1918, %v2002
        %v2004 = vpop.f32.mrb[0].mxu0
        %v2005 = vpop.f32.mrb[0].mxu0
        %v2006 = vadd.f32 %v1918, %v2005
        %v2007 = vpop.f32.mrb[0].mxu0
        %2008 = vdwg.mxu0
        %2009 = vst [vmem:[#allocation2] sm:$0xf] 0
        %2010 = vst [vmem:[#allocation2 + $0x4] sm:$0xf] 0
        %2011 = vst [vmem:[#allocation2 + $0x8] sm:$0xf] 0
        %2012 = vst [vmem:[#allocation2 + $0xc] sm:$0xf] 0
        %2013 = vst [vmem:[#allocation2 + $0x10] sm:$0xf] 0
        %2014 = vst [vmem:[#allocation2 + $0x14] sm:$0xf] 0
        %2015 = vst [vmem:[#allocation2 + $0x18] sm:$0xf] 0
        %2016 = vst [vmem:[#allocation2 + $0x1c] sm:$0xf] 0
        %2017 = vst [vmem:[#allocation2 + $0x20] sm:$0xf] 0
        %2018 = vst [vmem:[#allocation2 + $0x24] sm:$0xf] 0
        %2019 = vst [vmem:[#allocation2 + $0x28] sm:$0xf] 0
        %2020 = vst [vmem:[#allocation2 + $0x2c] sm:$0xf] 0
        %2021 = vst [vmem:[#allocation2 + $0x30] sm:$0xf] 0
        %2022 = vst [vmem:[#allocation2 + $0x34] sm:$0xf] 0
        %2023 = vst [vmem:[#allocation2 + $0x38] sm:$0xf] 0
        %2024 = vst [vmem:[#allocation2 + $0x3c] sm:$0xf] 0
        %2025 = vst [vmem:[#allocation2 + $0x40] sm:$0xf] 0
        %2026 = vst [vmem:[#allocation2 + $0x44] sm:$0xf] 0
        %2027 = vst [vmem:[#allocation2 + $0x48] sm:$0xf] 0
        %2028 = vst [vmem:[#allocation2 + $0x4c] sm:$0xf] 0
        %2029 = vst [vmem:[#allocation2 + $0x50] sm:$0xf] 0
        %2030 = vst [vmem:[#allocation2 + $0x54] sm:$0xf] 0
        %2031 = vst [vmem:[#allocation2 + $0x58] sm:$0xf] 0
        %2032 = vst [vmem:[#allocation2 + $0x5c] sm:$0xf] 0
        %2033 = vst [vmem:[#allocation2 + $0x60] sm:$0xf] 0
        %2034 = vst [vmem:[#allocation2 + $0x64] sm:$0xf] 0
        %2035 = vst [vmem:[#allocation2 + $0x68] sm:$0xf] 0
        %2036 = vst [vmem:[#allocation2 + $0x6c] sm:$0xf] 0
        %2037 = vst [vmem:[#allocation2 + $0x70] sm:$0xf] 0
        %2038 = vst [vmem:[#allocation2 + $0x74] sm:$0xf] 0
        %2039 = vst [vmem:[#allocation2 + $0x78] sm:$0xf] 0
        %2040 = vst [vmem:[#allocation2 + $0x7c] sm:$0xf] 0
        %2041 = vst [vmem:[#allocation2 + $0x80] sm:$0xf] 0
        %2042 = vst [vmem:[#allocation2 + $0x84] sm:$0xf] 0
        %2043 = vst [vmem:[#allocation2 + $0x88] sm:$0xf] 0
        %2044 = vst [vmem:[#allocation2 + $0x8c] sm:$0xf] 0
        %2045 = vst [vmem:[#allocation2 + $0x90] sm:$0xf] 0
        %2046 = vst [vmem:[#allocation2 + $0x94] sm:$0xf] 0
        %2047 = vst [vmem:[#allocation2 + $0x98] sm:$0xf] 0
        %2048 = vst [vmem:[#allocation2 + $0x9c] sm:$0xf] 0
        %2049 = vst [vmem:[#allocation2 + $0xa0] sm:$0xf] 0
        %2050 = vst [vmem:[#allocation2 + $0xa4] sm:$0xf] 0
        %2051 = vst [vmem:[#allocation2 + $0xa8] sm:$0xf] 0
        %2052 = vst [vmem:[#allocation2 + $0xac] sm:$0xf] 0
        %2053 = vst [vmem:[#allocation2 + $0xb0] sm:$0xf] 0
        %2054 = vst [vmem:[#allocation2 + $0xb4] sm:$0xf] 0
        %2055 = vst [vmem:[#allocation2 + $0xb8] sm:$0xf] 0
        %2056 = vst [vmem:[#allocation2 + $0xbc] sm:$0xf] 0
        %2057 = vst [vmem:[#allocation2 + $0xc0] sm:$0xf] 0
        %2058 = vst [vmem:[#allocation2 + $0xc4] sm:$0xf] 0
        %v2063 = vunpack.c.l.b16 %v1901
        %v2064 = vunpack.c.h.b16 %v1901
        %v2065 = vunpack.c.l.b16 %v1902
        %v2066 = vunpack.c.h.b16 %v1902
        %v2067 = vunpack.c.l.b16 %v1903
        %v2068 = vunpack.c.h.b16 %v1903
        %v2069 = vunpack.c.l.b16 %v1904
        %v2070 = vunpack.c.h.b16 %v1904
        %v2071 = vpack.c.b16 %v2063, %v2063
        %v2072 = vpack.c.b16 %v2064, %v2064
        %v2073 = vpack.c.b16 %v2065, %v2065
        %v2074 = vpack.c.b16 %v2066, %v2066
        %v2075 = vpack.c.b16 %v2067, %v2067
        %v2076 = vpack.c.b16 %v2068, %v2068
        %v2077 = vpack.c.b16 %v2069, %v2069
        %v2078 = vpack.c.b16 %v2070, %v2070
        %s2087 = scalar_lea.vmem [#allocation2], 20
        %2088 = vst [vmem:[%s2087 + $0x8] sm:$0xf] %v2071
        %2089 = vst [vmem:[%s2087 + $0x1c] sm:$0xf] %v2072
        %2090 = vst [vmem:[%s2087 + $0x30] sm:$0xf] %v2073
        %2091 = vst [vmem:[%s2087 + $0x44] sm:$0xf] %v2074
        %2092 = vst [vmem:[%s2087 + $0x58] sm:$0xf] %v2075
        %2093 = vst [vmem:[%s2087 + $0x6c] sm:$0xf] %v2076
        %2094 = vst [vmem:[%s2087 + $0x80] sm:$0xf] %v2077
        %2095 = vst [vmem:[%s2087 + $0x94] sm:$0xf] %v2078
        %v2096 = vld [vmem:[#allocation2 + $0x4] sm:$0xf]
        %v2097 = vld [vmem:[#allocation2 + $0x8] sm:$0xf]
        %v2098 = vld [vmem:[#allocation2 + $0xc] sm:$0xf]
        %v2099 = vld [vmem:[#allocation2 + $0x18] sm:$0xf]
        %v2100 = vld [vmem:[#allocation2 + $0x1c] sm:$0xf]
        %v2101 = vld [vmem:[#allocation2 + $0x20] sm:$0xf]
        %v2102 = vld [vmem:[#allocation2 + $0x2c] sm:$0xf]
        %v2103 = vld [vmem:[#allocation2 + $0x30] sm:$0xf]
        %v2104 = vld [vmem:[#allocation2 + $0x34] sm:$0xf]
        %v2105 = vld [vmem:[#allocation2 + $0x40] sm:$0xf]
        %v2106 = vld [vmem:[#allocation2 + $0x44] sm:$0xf]
        %v2107 = vld [vmem:[#allocation2 + $0x48] sm:$0xf]
        %v2108 = vld [vmem:[#allocation2 + $0x54] sm:$0xf]
        %v2109 = vld [vmem:[#allocation2 + $0x58] sm:$0xf]
        %v2110 = vld [vmem:[#allocation2 + $0x5c] sm:$0xf]
        %v2111 = vld [vmem:[#allocation2 + $0x68] sm:$0xf]
        %v2112 = vld [vmem:[#allocation2 + $0x6c] sm:$0xf]
        %v2113 = vld [vmem:[#allocation2 + $0x70] sm:$0xf]
        %v2114 = vld [vmem:[#allocation2 + $0x7c] sm:$0xf]
        %v2115 = vld [vmem:[#allocation2 + $0x80] sm:$0xf]
        %v2116 = vld [vmem:[#allocation2 + $0x84] sm:$0xf]
        %v2117 = vld [vmem:[#allocation2 + $0x90] sm:$0xf]
        %v2118 = vld [vmem:[#allocation2 + $0x94] sm:$0xf]
        %v2119 = vld [vmem:[#allocation2 + $0x98] sm:$0xf]
        %v2120 = vld [vmem:[#allocation2 + $0xa4] sm:$0xf]
        %v2121 = vld [vmem:[#allocation2 + $0xa8] sm:$0xf]
        %v2122 = vld [vmem:[#allocation2 + $0xac] sm:$0xf]
        %v2123 = vld [vmem:[#allocation2 + $0xb8] sm:$0xf]
        %v2124 = vld [vmem:[#allocation2 + $0xbc] sm:$0xf]
        %v2125 = vld [vmem:[#allocation2 + $0xc0] sm:$0xf]
        %vm2126 = vsmask.f32 256
        %vm2127 = vsmask.f32 4368
        %vm2128 = vmor %vm2126, %vm2127
        %v2130 = vshrl.u32 %v2096, 16
        %v2132 = vrot.slane %v2130, 7
        %v2133 = vrot.slane %v2132, 4
        %v2135 = vshrl.u32 %v2097, 16
        %v2137 = vrot.slane %v2135, 7
        %v2138 = vshll.u32 %v2097, 16
        %v2140 = vor.u32 %v2137, %v2138
        %v2141 = vsel %vm2128, %v2133, %v2140
        %v2143 = vshrl.u32 %v2099, 16
        %v2145 = vrot.slane %v2143, 7
        %v2146 = vrot.slane %v2145, 4
        %v2148 = vshrl.u32 %v2100, 16
        %v2150 = vrot.slane %v2148, 7
        %v2151 = vshll.u32 %v2100, 16
        %v2153 = vor.u32 %v2150, %v2151
        %v2154 = vsel %vm2128, %v2146, %v2153
        %v2156 = vshrl.u32 %v2102, 16
        %v2158 = vrot.slane %v2156, 7
        %v2159 = vrot.slane %v2158, 4
        %v2161 = vshrl.u32 %v2103, 16
        %v2163 = vrot.slane %v2161, 7
        %v2164 = vshll.u32 %v2103, 16
        %v2166 = vor.u32 %v2163, %v2164
        %v2167 = vsel %vm2128, %v2159, %v2166
        %v2169 = vshrl.u32 %v2105, 16
        %v2171 = vrot.slane %v2169, 7
        %v2172 = vrot.slane %v2171, 4
        %v2174 = vshrl.u32 %v2106, 16
        %v2176 = vrot.slane %v2174, 7
        %v2177 = vshll.u32 %v2106, 16
        %v2179 = vor.u32 %v2176, %v2177
        %v2180 = vsel %vm2128, %v2172, %v2179
        %v2182 = vshrl.u32 %v2108, 16
        %v2184 = vrot.slane %v2182, 7
        %v2185 = vrot.slane %v2184, 4
        %v2187 = vshrl.u32 %v2109, 16
        %v2189 = vrot.slane %v2187, 7
        %v2190 = vshll.u32 %v2109, 16
        %v2192 = vor.u32 %v2189, %v2190
        %v2193 = vsel %vm2128, %v2185, %v2192
        %v2195 = vshrl.u32 %v2111, 16
        %v2197 = vrot.slane %v2195, 7
        %v2198 = vrot.slane %v2197, 4
        %v2200 = vshrl.u32 %v2112, 16
        %v2202 = vrot.slane %v2200, 7
        %v2203 = vshll.u32 %v2112, 16
        %v2205 = vor.u32 %v2202, %v2203
        %v2206 = vsel %vm2128, %v2198, %v2205
        %v2208 = vshrl.u32 %v2114, 16
        %v2210 = vrot.slane %v2208, 7
        %v2211 = vrot.slane %v2210, 4
        %v2213 = vshrl.u32 %v2115, 16
        %v2215 = vrot.slane %v2213, 7
        %v2216 = vshll.u32 %v2115, 16
        %v2218 = vor.u32 %v2215, %v2216
        %v2219 = vsel %vm2128, %v2211, %v2218
        %v2221 = vshrl.u32 %v2117, 16
        %v2223 = vrot.slane %v2221, 7
        %v2224 = vrot.slane %v2223, 4
        %v2226 = vshrl.u32 %v2118, 16
        %v2228 = vrot.slane %v2226, 7
        %v2229 = vshll.u32 %v2118, 16
        %v2231 = vor.u32 %v2228, %v2229
        %v2232 = vsel %vm2128, %v2224, %v2231
        %v2233 = vrot.slane %v2135, 4
        %v2234 = vrot.slane %v2138, 5
        %v2235 = vor.u32 %v2233, %v2234
        %v2236 = vrot.slane %v2235, 4
        %v2238 = vshll.u32 %v2098, 16
        %v2240 = vrot.slane %v2238, 5
        %v2241 = vsel %vm472, %v2236, %v2240
        %v2242 = vrot.slane %v2148, 4
        %v2243 = vrot.slane %v2151, 5
        %v2244 = vor.u32 %v2242, %v2243
        %v2245 = vrot.slane %v2244, 4
        %v2247 = vshll.u32 %v2101, 16
        %v2249 = vrot.slane %v2247, 5
        %v2250 = vsel %vm472, %v2245, %v2249
        %v2251 = vrot.slane %v2161, 4
        %v2252 = vrot.slane %v2164, 5
        %v2253 = vor.u32 %v2251, %v2252
        %v2254 = vrot.slane %v2253, 4
        %v2256 = vshll.u32 %v2104, 16
        %v2258 = vrot.slane %v2256, 5
        %v2259 = vsel %vm472, %v2254, %v2258
        %v2260 = vrot.slane %v2174, 4
        %v2261 = vrot.slane %v2177, 5
        %v2262 = vor.u32 %v2260, %v2261
        %v2263 = vrot.slane %v2262, 4
        %v2265 = vshll.u32 %v2107, 16
        %v2267 = vrot.slane %v2265, 5
        %v2268 = vsel %vm472, %v2263, %v2267
        %v2269 = vrot.slane %v2187, 4
        %v2270 = vrot.slane %v2190, 5
        %v2271 = vor.u32 %v2269, %v2270
        %v2272 = vrot.slane %v2271, 4
        %v2274 = vshll.u32 %v2110, 16
        %v2276 = vrot.slane %v2274, 5
        %v2277 = vsel %vm472, %v2272, %v2276
        %v2278 = vrot.slane %v2200, 4
        %v2279 = vrot.slane %v2203, 5
        %v2280 = vor.u32 %v2278, %v2279
        %v2281 = vrot.slane %v2280, 4
        %v2283 = vshll.u32 %v2113, 16
        %v2285 = vrot.slane %v2283, 5
        %v2286 = vsel %vm472, %v2281, %v2285
        %v2287 = vrot.slane %v2213, 4
        %v2288 = vrot.slane %v2216, 5
        %v2289 = vor.u32 %v2287, %v2288
        %v2290 = vrot.slane %v2289, 4
        %v2292 = vshll.u32 %v2116, 16
        %v2294 = vrot.slane %v2292, 5
        %v2295 = vsel %vm472, %v2290, %v2294
        %v2296 = vrot.slane %v2226, 4
        %v2297 = vrot.slane %v2229, 5
        %v2298 = vor.u32 %v2296, %v2297
        %v2299 = vrot.slane %v2298, 4
        %v2301 = vshll.u32 %v2119, 16
        %v2303 = vrot.slane %v2301, 5
        %v2304 = vsel %vm472, %v2299, %v2303
        %v2306 = vshrl.u32 %v2120, 16
        %v2308 = vrot.slane %v2306, 7
        %v2309 = vrot.slane %v2308, 4
        %v2311 = vshrl.u32 %v2121, 16
        %v2313 = vrot.slane %v2311, 7
        %v2314 = vshll.u32 %v2121, 16
        %v2316 = vor.u32 %v2313, %v2314
        %v2317 = vsel %vm2128, %v2309, %v2316
        %v2318 = vrot.slane %v2311, 4
        %v2319 = vrot.slane %v2314, 5
        %v2320 = vor.u32 %v2318, %v2319
        %v2321 = vrot.slane %v2320, 4
        %v2323 = vshll.u32 %v2122, 16
        %v2325 = vrot.slane %v2323, 5
        %v2326 = vsel %vm472, %v2321, %v2325
        %v2328 = vshrl.u32 %v2123, 16
        %v2330 = vrot.slane %v2328, 7
        %v2331 = vrot.slane %v2330, 4
        %v2333 = vshrl.u32 %v2124, 16
        %v2335 = vrot.slane %v2333, 7
        %v2336 = vshll.u32 %v2124, 16
        %v2338 = vor.u32 %v2335, %v2336
        %v2339 = vsel %vm2128, %v2331, %v2338
        %v2340 = vrot.slane %v2333, 4
        %v2341 = vrot.slane %v2336, 5
        %v2342 = vor.u32 %v2340, %v2341
        %v2343 = vrot.slane %v2342, 4
        %v2345 = vshll.u32 %v2125, 16
        %v2347 = vrot.slane %v2345, 5
        %v2348 = vsel %vm472, %v2343, %v2347
        %v2349 = vld [vmem:[%s6] sm:$0xf]
        %v2350 = vld [vmem:[%s6 + $0x4] sm:$0xf]
        %v2351 = vld [vmem:[%s6 + $0x8] sm:$0xf]
        %v2352 = vld [vmem:[%s6 + $0xc] sm:$0xf]
        %v2353 = vld [vmem:[%s6 + $0x10] sm:$0xf]
        %v2354 = vld [vmem:[%s6 + $0x14] sm:$0xf]
        %v2355 = vld [vmem:[%s6 + $0x18] sm:$0xf]
        %v2356 = vld [vmem:[%s6 + $0x1c] sm:$0xf]
        %v2357 = vld [vmem:[%s6 + $0x20] sm:$0xf]
        %v2358 = vld [vmem:[%s6 + $0x24] sm:$0xf]
        %v2359 = vld [vmem:[%s6 + $0x28] sm:$0xf]
        %v2360 = vld [vmem:[%s6 + $0x2c] sm:$0xf]
        %v2361 = vld [vmem:[%s6 + $0x30] sm:$0xf]
        %v2362 = vld [vmem:[%s6 + $0x34] sm:$0xf]
        %v2363 = vld [vmem:[%s6 + $0x38] sm:$0xf]
        %v2364 = vld [vmem:[%s6 + $0x3c] sm:$0xf]
        %s2365 = scalar_lea.vmem %s6, 64
        %v2366 = vld [vmem:[%s2365] sm:$0xf]
        %v2367 = vld [vmem:[%s2365 + $0x4] sm:$0xf]
        %v2368 = vld [vmem:[%s2365 + $0x8] sm:$0xf]
        %v2369 = vld [vmem:[%s2365 + $0xc] sm:$0xf]
        %v2370 = vld [vmem:[%s2365 + $0x10] sm:$0xf]
        %v2371 = vld [vmem:[%s2365 + $0x14] sm:$0xf]
        %v2372 = vld [vmem:[%s2365 + $0x18] sm:$0xf]
        %v2373 = vld [vmem:[%s2365 + $0x1c] sm:$0xf]
        %v2374 = vld [vmem:[%s2365 + $0x20] sm:$0xf]
        %v2375 = vld [vmem:[%s2365 + $0x24] sm:$0xf]
        %v2376 = vld [vmem:[%s2365 + $0x28] sm:$0xf]
        %v2377 = vld [vmem:[%s2365 + $0x2c] sm:$0xf]
        %v2378 = vld [vmem:[%s2365 + $0x30] sm:$0xf]
        %v2379 = vld [vmem:[%s2365 + $0x34] sm:$0xf]
        %v2380 = vld [vmem:[%s2365 + $0x38] sm:$0xf]
        %v2381 = vld [vmem:[%s2365 + $0x3c] sm:$0xf]
        %v2390 = vunpack.c.l.b16 %v2097
        %v2391 = vunpack.c.l.b16 %v2100
        %v2392 = vunpack.c.l.b16 %v2103
        %v2393 = vunpack.c.l.b16 %v2106
        %v2394 = vunpack.c.l.b16 %v2109
        %v2395 = vunpack.c.l.b16 %v2112
        %v2396 = vunpack.c.l.b16 %v2115
        %v2397 = vunpack.c.l.b16 %v2118
        %v2398 = vpack.c.b16 %v2391, %v2390
        %v2399 = vpack.c.b16 %v2393, %v2392
        %v2400 = vpack.c.b16 %v2395, %v2394
        %v2401 = vpack.c.b16 %v2397, %v2396
        %v2422 = vunpack.c.l.b16 %v2366
        %v2423 = vunpack.c.l.b16 %v2367
        %v2424 = vunpack.c.l.b16 %v2368
        %v2425 = vunpack.c.l.b16 %v2369
        %v2426 = vunpack.c.l.b16 %v2370
        %v2427 = vunpack.c.l.b16 %v2371
        %v2428 = vunpack.c.l.b16 %v2372
        %v2429 = vunpack.c.l.b16 %v2373
        %v2430 = vunpack.c.l.b16 %v2374
        %v2431 = vunpack.c.l.b16 %v2375
        %v2432 = vunpack.c.l.b16 %v2376
        %v2433 = vunpack.c.l.b16 %v2377
        %v2434 = vunpack.c.l.b16 %v2378
        %v2435 = vunpack.c.l.b16 %v2379
        %v2436 = vunpack.c.l.b16 %v2380
        %v2437 = vunpack.c.l.b16 %v2381
        %v2438 = vpack.c.b16 %v2423, %v2422
        %v2439 = vpack.c.b16 %v2425, %v2424
        %v2440 = vpack.c.b16 %v2427, %v2426
        %v2441 = vpack.c.b16 %v2429, %v2428
        %v2442 = vpack.c.b16 %v2431, %v2430
        %v2443 = vpack.c.b16 %v2433, %v2432
        %v2444 = vpack.c.b16 %v2435, %v2434
        %v2445 = vpack.c.b16 %v2437, %v2436
        %2454 = vmatprep.subr.bf16.mxu0 0
        %2455 = vmatpush1.bf16.msra.mxu0 %v2438
        %2456 = vmatprep.subr.bf16.mxu0 0
        %2457 = vmatpush1.bf16.msra.mxu0 %v2439
        %2458 = vmatprep.subr.bf16.mxu0 0
        %2459 = vmatpush1.bf16.msra.mxu0 %v2440
        %2460 = vmatprep.subr.bf16.mxu0 0
        %2461 = vmatpush1.bf16.msra.mxu0 %v2441
        %2462 = vmatprep.subr.bf16.mxu0 0
        %2463 = vmatpush1.bf16.msra.mxu0 %v2442
        %2464 = vmatprep.subr.bf16.mxu0 0
        %2465 = vmatpush1.bf16.msra.mxu0 %v2443
        %2466 = vmatprep.subr.bf16.mxu0 0
        %2467 = vmatpush1.bf16.msra.mxu0 %v2444
        %2468 = vmatprep.subr.bf16.mxu0 0
        %2469 = vmatpush1.bf16.msra.mxu0 %v2445
        %2470 = vmatprep.subr.bf16.mxu0 0
        %2471 = vmatpush1.bf16.msra.mxu0 0
        %2472 = vmatprep.subr.bf16.mxu0 0
        %2473 = vmatpush1.bf16.msra.mxu0 0
        %2474 = vmatprep.subr.bf16.mxu0 0
        %2475 = vmatpush1.bf16.msra.mxu0 0
        %2476 = vmatprep.subr.bf16.mxu0 0
        %2477 = vmatpush1.bf16.msra.mxu0 0
        %2478 = vmatprep.subr.bf16.mxu0 0
        %2479 = vmatpush1.bf16.msra.mxu0 0
        %2480 = vmatprep.subr.bf16.mxu0 0
        %2481 = vmatpush1.bf16.msra.mxu0 0
        %2482 = vmatprep.subr.bf16.mxu0 0
        %2483 = vmatpush1.bf16.msra.mxu0 0
        %2484 = vmatprep.subr.bf16.mxu0 0
        %2485 = vmatpush1.bf16.msra.mxu0 0
        %2486 = vmatprep.mubr.bf16.mxu0 0
        %2487 = vmatmul.mubr.bf16.gmra.mrb[0].mxu0 %v2398
        %v2488 = vpop.f32.mrb[0].mxu0
        %v2489 = vadd.f32 0.0, %v2488
        %v2490 = vpop.f32.mrb[0].mxu0
        %v2491 = vpop.f32.mrb[0].mxu0
        %v2492 = vadd.f32 0.0, %v2491
        %v2493 = vpop.f32.mrb[0].mxu0
        %2494 = vmatprep.mubr.bf16.mxu0 0
        %2495 = vmatmul.mubr.bf16.gmra.mrb[0].mxu0 %v2399
        %v2496 = vpop.f32.mrb[0].mxu0
        %v2497 = vadd.f32 0.0, %v2496
        %v2498 = vpop.f32.mrb[0].mxu0
        %v2499 = vpop.f32.mrb[0].mxu0
        %v2500 = vadd.f32 0.0, %v2499
        %v2501 = vpop.f32.mrb[0].mxu0
        %2502 = vmatprep.mubr.bf16.mxu0 0
        %2503 = vmatmul.mubr.bf16.gmra.mrb[0].mxu0 %v2400
        %v2504 = vpop.f32.mrb[0].mxu0
        %v2505 = vadd.f32 0.0, %v2504
        %v2506 = vpop.f32.mrb[0].mxu0
        %v2507 = vpop.f32.mrb[0].mxu0
        %v2508 = vadd.f32 0.0, %v2507
        %v2509 = vpop.f32.mrb[0].mxu0
        %2510 = vmatprep.mubr.bf16.mxu0 0
        %2511 = vmatmul.mubr.bf16.gmra.mrb[0].mxu0 %v2401
        %v2512 = vpop.f32.mrb[0].mxu0
        %v2513 = vadd.f32 0.0, %v2512
        %v2514 = vpop.f32.mrb[0].mxu0
        %v2515 = vpop.f32.mrb[0].mxu0
        %v2516 = vadd.f32 0.0, %v2515
        %v2517 = vpop.f32.mrb[0].mxu0
        %2518 = vdwg.mxu0
        %v2519 = vunpack.c.l.b16 %v2141
        %v2520 = vunpack.c.l.b16 %v2154
        %v2521 = vunpack.c.l.b16 %v2167
        %v2522 = vunpack.c.l.b16 %v2180
        %v2523 = vunpack.c.l.b16 %v2193
        %v2524 = vunpack.c.l.b16 %v2206
        %v2525 = vunpack.c.l.b16 %v2219
        %v2526 = vunpack.c.l.b16 %v2232
        %v2527 = vpack.c.b16 %v2520, %v2519
        %v2528 = vpack.c.b16 %v2522, %v2521
        %v2529 = vpack.c.b16 %v2524, %v2523
        %v2530 = vpack.c.b16 %v2526, %v2525
        %v2551 = vunpack.c.l.b16 %v2349
        %v2552 = vunpack.c.l.b16 %v2350
        %v2553 = vunpack.c.l.b16 %v2351
        %v2554 = vunpack.c.l.b16 %v2352
        %v2555 = vunpack.c.l.b16 %v2353
        %v2556 = vunpack.c.l.b16 %v2354
        %v2557 = vunpack.c.l.b16 %v2355
        %v2558 = vunpack.c.l.b16 %v2356
        %v2559 = vunpack.c.l.b16 %v2357
        %v2560 = vunpack.c.l.b16 %v2358
        %v2561 = vunpack.c.l.b16 %v2359
        %v2562 = vunpack.c.l.b16 %v2360
        %v2563 = vunpack.c.l.b16 %v2361
        %v2564 = vunpack.c.l.b16 %v2362
        %v2565 = vunpack.c.l.b16 %v2363
        %v2566 = vunpack.c.l.b16 %v2364
        %v2567 = vpack.c.b16 %v2552, %v2551
        %v2568 = vpack.c.b16 %v2554, %v2553
        %v2569 = vpack.c.b16 %v2556, %v2555
        %v2570 = vpack.c.b16 %v2558, %v2557
        %v2571 = vpack.c.b16 %v2560, %v2559
        %v2572 = vpack.c.b16 %v2562, %v2561
        %v2573 = vpack.c.b16 %v2564, %v2563
        %v2574 = vpack.c.b16 %v2566, %v2565
        %2583 = vmatprep.subr.bf16.mxu0 0
        %2584 = vmatpush1.bf16.msra.mxu0 %v2567
        %2585 = vmatprep.subr.bf16.mxu0 0
        %2586 = vmatpush1.bf16.msra.mxu0 %v2568
        %2587 = vmatprep.subr.bf16.mxu0 0
        %2588 = vmatpush1.bf16.msra.mxu0 %v2569
        %2589 = vmatprep.subr.bf16.mxu0 0
        %2590 = vmatpush1.bf16.msra.mxu0 %v2570
        %2591 = vmatprep.subr.bf16.mxu0 0
        %2592 = vmatpush1.bf16.msra.mxu0 %v2571
        %2593 = vmatprep.subr.bf16.mxu0 0
        %2594 = vmatpush1.bf16.msra.mxu0 %v2572
        %2595 = vmatprep.subr.bf16.mxu0 0
        %2596 = vmatpush1.bf16.msra.mxu0 %v2573
        %2597 = vmatprep.subr.bf16.mxu0 0
        %2598 = vmatpush1.bf16.msra.mxu0 %v2574
        %2599 = vmatprep.subr.bf16.mxu0 0
        %2600 = vmatpush1.bf16.msra.mxu0 0
        %2601 = vmatprep.subr.bf16.mxu0 0
        %2602 = vmatpush1.bf16.msra.mxu0 0
        %2603 = vmatprep.subr.bf16.mxu0 0
        %2604 = vmatpush1.bf16.msra.mxu0 0
        %2605 = vmatprep.subr.bf16.mxu0 0
        %2606 = vmatpush1.bf16.msra.mxu0 0
        %2607 = vmatprep.subr.bf16.mxu0 0
        %2608 = vmatpush1.bf16.msra.mxu0 0
        %2609 = vmatprep.subr.bf16.mxu0 0
        %2610 = vmatpush1.bf16.msra.mxu0 0
        %2611 = vmatprep.subr.bf16.mxu0 0
        %2612 = vmatpush1.bf16.msra.mxu0 0
        %2613 = vmatprep.subr.bf16.mxu0 0
        %2614 = vmatpush1.bf16.msra.mxu0 0
        %2615 = vmatprep.mubr.bf16.mxu0 0
        %2616 = vmatmul.mubr.bf16.gmra.mrb[0].mxu0 %v2527
        %v2617 = vpop.f32.mrb[0].mxu0
        %v2618 = vadd.f32 %v2489, %v2617
        %v2619 = vpop.f32.mrb[0].mxu0
        %v2620 = vpop.f32.mrb[0].mxu0
        %v2621 = vadd.f32 %v2492, %v2620
        %v2622 = vpop.f32.mrb[0].mxu0
        %2623 = vmatprep.mubr.bf16.mxu0 0
        %2624 = vmatmul.mubr.bf16.gmra.mrb[0].mxu0 %v2528
        %v2625 = vpop.f32.mrb[0].mxu0
        %v2626 = vadd.f32 %v2497, %v2625
        %v2627 = vpop.f32.mrb[0].mxu0
        %v2628 = vpop.f32.mrb[0].mxu0
        %v2629 = vadd.f32 %v2500, %v2628
        %v2630 = vpop.f32.mrb[0].mxu0
        %2631 = vmatprep.mubr.bf16.mxu0 0
        %2632 = vmatmul.mubr.bf16.gmra.mrb[0].mxu0 %v2529
        %v2633 = vpop.f32.mrb[0].mxu0
        %v2634 = vadd.f32 %v2505, %v2633
        %v2635 = vpop.f32.mrb[0].mxu0
        %v2636 = vpop.f32.mrb[0].mxu0
        %v2637 = vadd.f32 %v2508, %v2636
        %v2638 = vpop.f32.mrb[0].mxu0
        %2639 = vmatprep.mubr.bf16.mxu0 0
        %2640 = vmatmul.mubr.bf16.gmra.mrb[0].mxu0 %v2530
        %v2641 = vpop.f32.mrb[0].mxu0
        %v2642 = vadd.f32 %v2513, %v2641
        %v2643 = vpop.f32.mrb[0].mxu0
        %v2644 = vpop.f32.mrb[0].mxu0
        %v2645 = vadd.f32 %v2516, %v2644
        %v2646 = vpop.f32.mrb[0].mxu0
        %2647 = vdwg.mxu0
        %s2648 = scalar_lea.vmem %s6, 128
        %v2649 = vld [vmem:[%s2648] sm:$0xf]
        %v2650 = vld [vmem:[%s2648 + $0x4] sm:$0xf]
        %v2651 = vld [vmem:[%s2648 + $0x8] sm:$0xf]
        %v2652 = vld [vmem:[%s2648 + $0xc] sm:$0xf]
        %v2653 = vld [vmem:[%s2648 + $0x10] sm:$0xf]
        %v2654 = vld [vmem:[%s2648 + $0x14] sm:$0xf]
        %v2655 = vld [vmem:[%s2648 + $0x18] sm:$0xf]
        %v2656 = vld [vmem:[%s2648 + $0x1c] sm:$0xf]
        %v2657 = vld [vmem:[%s2648 + $0x20] sm:$0xf]
        %v2658 = vld [vmem:[%s2648 + $0x24] sm:$0xf]
        %v2659 = vld [vmem:[%s2648 + $0x28] sm:$0xf]
        %v2660 = vld [vmem:[%s2648 + $0x2c] sm:$0xf]
        %v2661 = vld [vmem:[%s2648 + $0x30] sm:$0xf]
        %v2662 = vld [vmem:[%s2648 + $0x34] sm:$0xf]
        %v2663 = vld [vmem:[%s2648 + $0x38] sm:$0xf]
        %v2664 = vld [vmem:[%s2648 + $0x3c] sm:$0xf]
        %v2665 = vunpack.c.l.b16 %v2241
        %v2666 = vunpack.c.l.b16 %v2250
        %v2667 = vunpack.c.l.b16 %v2259
        %v2668 = vunpack.c.l.b16 %v2268
        %v2669 = vunpack.c.l.b16 %v2277
        %v2670 = vunpack.c.l.b16 %v2286
        %v2671 = vunpack.c.l.b16 %v2295
        %v2672 = vunpack.c.l.b16 %v2304
        %v2673 = vpack.c.b16 %v2666, %v2665
        %v2674 = vpack.c.b16 %v2668, %v2667
        %v2675 = vpack.c.b16 %v2670, %v2669
        %v2676 = vpack.c.b16 %v2672, %v2671
        %v2697 = vunpack.c.l.b16 %v2649
        %v2698 = vunpack.c.l.b16 %v2650
        %v2699 = vunpack.c.l.b16 %v2651
        %v2700 = vunpack.c.l.b16 %v2652
        %v2701 = vunpack.c.l.b16 %v2653
        %v2702 = vunpack.c.l.b16 %v2654
        %v2703 = vunpack.c.l.b16 %v2655
        %v2704 = vunpack.c.l.b16 %v2656
        %v2705 = vunpack.c.l.b16 %v2657
        %v2706 = vunpack.c.l.b16 %v2658
        %v2707 = vunpack.c.l.b16 %v2659
        %v2708 = vunpack.c.l.b16 %v2660
        %v2709 = vunpack.c.l.b16 %v2661
        %v2710 = vunpack.c.l.b16 %v2662
        %v2711 = vunpack.c.l.b16 %v2663
        %v2712 = vunpack.c.l.b16 %v2664
        %v2713 = vpack.c.b16 %v2698, %v2697
        %v2714 = vpack.c.b16 %v2700, %v2699
        %v2715 = vpack.c.b16 %v2702, %v2701
        %v2716 = vpack.c.b16 %v2704, %v2703
        %v2717 = vpack.c.b16 %v2706, %v2705
        %v2718 = vpack.c.b16 %v2708, %v2707
        %v2719 = vpack.c.b16 %v2710, %v2709
        %v2720 = vpack.c.b16 %v2712, %v2711
        %2729 = vmatprep.subr.bf16.mxu0 0
        %2730 = vmatpush1.bf16.msra.mxu0 %v2713
        %2731 = vmatprep.subr.bf16.mxu0 0
        %2732 = vmatpush1.bf16.msra.mxu0 %v2714
        %2733 = vmatprep.subr.bf16.mxu0 0
        %2734 = vmatpush1.bf16.msra.mxu0 %v2715
        %2735 = vmatprep.subr.bf16.mxu0 0
        %2736 = vmatpush1.bf16.msra.mxu0 %v2716
        %2737 = vmatprep.subr.bf16.mxu0 0
        %2738 = vmatpush1.bf16.msra.mxu0 %v2717
        %2739 = vmatprep.subr.bf16.mxu0 0
        %2740 = vmatpush1.bf16.msra.mxu0 %v2718
        %2741 = vmatprep.subr.bf16.mxu0 0
        %2742 = vmatpush1.bf16.msra.mxu0 %v2719
        %2743 = vmatprep.subr.bf16.mxu0 0
        %2744 = vmatpush1.bf16.msra.mxu0 %v2720
        %2745 = vmatprep.subr.bf16.mxu0 0
        %2746 = vmatpush1.bf16.msra.mxu0 0
        %2747 = vmatprep.subr.bf16.mxu0 0
        %2748 = vmatpush1.bf16.msra.mxu0 0
        %2749 = vmatprep.subr.bf16.mxu0 0
        %2750 = vmatpush1.bf16.msra.mxu0 0
        %2751 = vmatprep.subr.bf16.mxu0 0
        %2752 = vmatpush1.bf16.msra.mxu0 0
        %2753 = vmatprep.subr.bf16.mxu0 0
        %2754 = vmatpush1.bf16.msra.mxu0 0
        %2755 = vmatprep.subr.bf16.mxu0 0
        %2756 = vmatpush1.bf16.msra.mxu0 0
        %2757 = vmatprep.subr.bf16.mxu0 0
        %2758 = vmatpush1.bf16.msra.mxu0 0
        %2759 = vmatprep.subr.bf16.mxu0 0
        %2760 = vmatpush1.bf16.msra.mxu0 0
        %2761 = vmatprep.mubr.bf16.mxu0 0
        %2762 = vmatmul.mubr.bf16.gmra.mrb[0].mxu0 %v2673
        %v2763 = vpop.f32.mrb[0].mxu0
        %v2764 = vadd.f32 0.0, %v2763
        %v2765 = vpop.f32.mrb[0].mxu0
        %v2766 = vpop.f32.mrb[0].mxu0
        %v2767 = vadd.f32 0.0, %v2766
        %v2768 = vpop.f32.mrb[0].mxu0
        %2769 = vmatprep.mubr.bf16.mxu0 0
        %2770 = vmatmul.mubr.bf16.gmra.mrb[0].mxu0 %v2674
        %v2771 = vpop.f32.mrb[0].mxu0
        %v2772 = vadd.f32 0.0, %v2771
        %v2773 = vpop.f32.mrb[0].mxu0
        %v2774 = vpop.f32.mrb[0].mxu0
        %v2775 = vadd.f32 0.0, %v2774
        %v2776 = vpop.f32.mrb[0].mxu0
        %2777 = vmatprep.mubr.bf16.mxu0 0
        %2778 = vmatmul.mubr.bf16.gmra.mrb[0].mxu0 %v2675
        %v2779 = vpop.f32.mrb[0].mxu0
        %v2780 = vadd.f32 0.0, %v2779
        %v2781 = vpop.f32.mrb[0].mxu0
        %v2782 = vpop.f32.mrb[0].mxu0
        %v2783 = vadd.f32 0.0, %v2782
        %v2784 = vpop.f32.mrb[0].mxu0
        %2785 = vmatprep.mubr.bf16.mxu0 0
        %2786 = vmatmul.mubr.bf16.gmra.mrb[0].mxu0 %v2676
        %v2787 = vpop.f32.mrb[0].mxu0
        %v2788 = vadd.f32 0.0, %v2787
        %v2789 = vpop.f32.mrb[0].mxu0
        %v2790 = vpop.f32.mrb[0].mxu0
        %v2791 = vadd.f32 0.0, %v2790
        %v2792 = vpop.f32.mrb[0].mxu0
        %2793 = vdwg.mxu0
        %v2794 = vadd.f32 %v2618, %v2764
        %v2795 = vadd.f32 %v2621, %v2767
        %v2796 = vadd.f32 %v2626, %v2772
        %v2797 = vadd.f32 %v2629, %v2775
        %v2798 = vadd.f32 %v2634, %v2780
        %v2799 = vadd.f32 %v2637, %v2783
        %v2800 = vadd.f32 %v2642, %v2788
        %v2801 = vadd.f32 %v2645, %v2791
        %s2802 = scalar_lea.vmem %s6, 192
        %v2803 = vld [vmem:[%s2802] sm:$0xf]
        %v2804 = vld [vmem:[%s2802 + $0x4] sm:$0xf]
        %v2805 = vld [vmem:[%s2802 + $0x8] sm:$0xf]
        %v2806 = vld [vmem:[%s2802 + $0xc] sm:$0xf]
        %v2807 = vld [vmem:[%s2802 + $0x10] sm:$0xf]
        %v2808 = vld [vmem:[%s2802 + $0x14] sm:$0xf]
        %v2809 = vld [vmem:[%s2802 + $0x18] sm:$0xf]
        %v2810 = vld [vmem:[%s2802 + $0x1c] sm:$0xf]
        %v2811 = vld [vmem:[%s2802 + $0x20] sm:$0xf]
        %v2812 = vld [vmem:[%s2802 + $0x24] sm:$0xf]
        %v2813 = vld [vmem:[%s2802 + $0x28] sm:$0xf]
        %v2814 = vld [vmem:[%s2802 + $0x2c] sm:$0xf]
        %v2815 = vld [vmem:[%s2802 + $0x30] sm:$0xf]
        %v2816 = vld [vmem:[%s2802 + $0x34] sm:$0xf]
        %v2817 = vld [vmem:[%s2802 + $0x38] sm:$0xf]
        %v2818 = vld [vmem:[%s2802 + $0x3c] sm:$0xf]
        %v2819 = vunpack.c.l.b16 %v2317
        %v2820 = vpack.c.b16 %v2521, %v2520
        %v2821 = vpack.c.b16 %v2523, %v2522
        %v2822 = vpack.c.b16 %v2525, %v2524
        %v2823 = vpack.c.b16 %v2819, %v2526
        %v2844 = vunpack.c.l.b16 %v2803
        %v2845 = vunpack.c.l.b16 %v2804
        %v2846 = vunpack.c.l.b16 %v2805
        %v2847 = vunpack.c.l.b16 %v2806
        %v2848 = vunpack.c.l.b16 %v2807
        %v2849 = vunpack.c.l.b16 %v2808
        %v2850 = vunpack.c.l.b16 %v2809
        %v2851 = vunpack.c.l.b16 %v2810
        %v2852 = vunpack.c.l.b16 %v2811
        %v2853 = vunpack.c.l.b16 %v2812
        %v2854 = vunpack.c.l.b16 %v2813
        %v2855 = vunpack.c.l.b16 %v2814
        %v2856 = vunpack.c.l.b16 %v2815
        %v2857 = vunpack.c.l.b16 %v2816
        %v2858 = vunpack.c.l.b16 %v2817
        %v2859 = vunpack.c.l.b16 %v2818
        %v2860 = vpack.c.b16 %v2845, %v2844
        %v2861 = vpack.c.b16 %v2847, %v2846
        %v2862 = vpack.c.b16 %v2849, %v2848
        %v2863 = vpack.c.b16 %v2851, %v2850
        %v2864 = vpack.c.b16 %v2853, %v2852
        %v2865 = vpack.c.b16 %v2855, %v2854
        %v2866 = vpack.c.b16 %v2857, %v2856
        %v2867 = vpack.c.b16 %v2859, %v2858
        %2876 = vmatprep.subr.bf16.mxu0 0
        %2877 = vmatpush1.bf16.msra.mxu0 %v2860
        %2878 = vmatprep.subr.bf16.mxu0 0
        %2879 = vmatpush1.bf16.msra.mxu0 %v2861
        %2880 = vmatprep.subr.bf16.mxu0 0
        %2881 = vmatpush1.bf16.msra.mxu0 %v2862
        %2882 = vmatprep.subr.bf16.mxu0 0
        %2883 = vmatpush1.bf16.msra.mxu0 %v2863
        %2884 = vmatprep.subr.bf16.mxu0 0
        %2885 = vmatpush1.bf16.msra.mxu0 %v2864
        %2886 = vmatprep.subr.bf16.mxu0 0
        %2887 = vmatpush1.bf16.msra.mxu0 %v2865
        %2888 = vmatprep.subr.bf16.mxu0 0
        %2889 = vmatpush1.bf16.msra.mxu0 %v2866
        %2890 = vmatprep.subr.bf16.mxu0 0
        %2891 = vmatpush1.bf16.msra.mxu0 %v2867
        %2892 = vmatprep.subr.bf16.mxu0 0
        %2893 = vmatpush1.bf16.msra.mxu0 0
        %2894 = vmatprep.subr.bf16.mxu0 0
        %2895 = vmatpush1.bf16.msra.mxu0 0
        %2896 = vmatprep.subr.bf16.mxu0 0
        %2897 = vmatpush1.bf16.msra.mxu0 0
        %2898 = vmatprep.subr.bf16.mxu0 0
        %2899 = vmatpush1.bf16.msra.mxu0 0
        %2900 = vmatprep.subr.bf16.mxu0 0
        %2901 = vmatpush1.bf16.msra.mxu0 0
        %2902 = vmatprep.subr.bf16.mxu0 0
        %2903 = vmatpush1.bf16.msra.mxu0 0
        %2904 = vmatprep.subr.bf16.mxu0 0
        %2905 = vmatpush1.bf16.msra.mxu0 0
        %2906 = vmatprep.subr.bf16.mxu0 0
        %2907 = vmatpush1.bf16.msra.mxu0 0
        %2908 = vmatprep.mubr.bf16.mxu0 0
        %2909 = vmatmul.mubr.bf16.gmra.mrb[0].mxu0 %v2820
        %v2910 = vpop.f32.mrb[0].mxu0
        %v2911 = vadd.f32 0.0, %v2910
        %v2912 = vpop.f32.mrb[0].mxu0
        %v2913 = vpop.f32.mrb[0].mxu0
        %v2914 = vadd.f32 0.0, %v2913
        %v2915 = vpop.f32.mrb[0].mxu0
        %2916 = vmatprep.mubr.bf16.mxu0 0
        %2917 = vmatmul.mubr.bf16.gmra.mrb[0].mxu0 %v2821
        %v2918 = vpop.f32.mrb[0].mxu0
        %v2919 = vadd.f32 0.0, %v2918
        %v2920 = vpop.f32.mrb[0].mxu0
        %v2921 = vpop.f32.mrb[0].mxu0
        %v2922 = vadd.f32 0.0, %v2921
        %v2923 = vpop.f32.mrb[0].mxu0
        %2924 = vmatprep.mubr.bf16.mxu0 0
        %2925 = vmatmul.mubr.bf16.gmra.mrb[0].mxu0 %v2822
        %v2926 = vpop.f32.mrb[0].mxu0
        %v2927 = vadd.f32 0.0, %v2926
        %v2928 = vpop.f32.mrb[0].mxu0
        %v2929 = vpop.f32.mrb[0].mxu0
        %v2930 = vadd.f32 0.0, %v2929
        %v2931 = vpop.f32.mrb[0].mxu0
        %2932 = vmatprep.mubr.bf16.mxu0 0
        %2933 = vmatmul.mubr.bf16.gmra.mrb[0].mxu0 %v2823
        %v2934 = vpop.f32.mrb[0].mxu0
        %v2935 = vadd.f32 0.0, %v2934
        %v2936 = vpop.f32.mrb[0].mxu0
        %v2937 = vpop.f32.mrb[0].mxu0
        %v2938 = vadd.f32 0.0, %v2937
        %v2939 = vpop.f32.mrb[0].mxu0
        %2940 = vdwg.mxu0
        %v2941 = vadd.f32 %v2794, %v2911
        %v2942 = vadd.f32 %v2795, %v2914
        %v2943 = vadd.f32 %v2796, %v2919
        %v2944 = vadd.f32 %v2797, %v2922
        %v2945 = vadd.f32 %v2798, %v2927
        %v2946 = vadd.f32 %v2799, %v2930
        %v2947 = vadd.f32 %v2800, %v2935
        %v2948 = vadd.f32 %v2801, %v2938
        %s2949 = scalar_lea.vmem %s6, 256
        %v2950 = vld [vmem:[%s2949] sm:$0xf]
        %v2951 = vld [vmem:[%s2949 + $0x4] sm:$0xf]
        %v2952 = vld [vmem:[%s2949 + $0x8] sm:$0xf]
        %v2953 = vld [vmem:[%s2949 + $0xc] sm:$0xf]
        %v2954 = vld [vmem:[%s2949 + $0x10] sm:$0xf]
        %v2955 = vld [vmem:[%s2949 + $0x14] sm:$0xf]
        %v2956 = vld [vmem:[%s2949 + $0x18] sm:$0xf]
        %v2957 = vld [vmem:[%s2949 + $0x1c] sm:$0xf]
        %v2958 = vld [vmem:[%s2949 + $0x20] sm:$0xf]
        %v2959 = vld [vmem:[%s2949 + $0x24] sm:$0xf]
        %v2960 = vld [vmem:[%s2949 + $0x28] sm:$0xf]
        %v2961 = vld [vmem:[%s2949 + $0x2c] sm:$0xf]
        %v2962 = vld [vmem:[%s2949 + $0x30] sm:$0xf]
        %v2963 = vld [vmem:[%s2949 + $0x34] sm:$0xf]
        %v2964 = vld [vmem:[%s2949 + $0x38] sm:$0xf]
        %v2965 = vld [vmem:[%s2949 + $0x3c] sm:$0xf]
        %v2967 = vunpack.c.l.b16 %v2121
        %v2968 = vpack.c.b16 %v2392, %v2391
        %v2969 = vpack.c.b16 %v2394, %v2393
        %v2970 = vpack.c.b16 %v2396, %v2395
        %v2971 = vpack.c.b16 %v2967, %v2397
        %v2992 = vunpack.c.l.b16 %v2950
        %v2993 = vunpack.c.l.b16 %v2951
        %v2994 = vunpack.c.l.b16 %v2952
        %v2995 = vunpack.c.l.b16 %v2953
        %v2996 = vunpack.c.l.b16 %v2954
        %v2997 = vunpack.c.l.b16 %v2955
        %v2998 = vunpack.c.l.b16 %v2956
        %v2999 = vunpack.c.l.b16 %v2957
        %v3000 = vunpack.c.l.b16 %v2958
        %v3001 = vunpack.c.l.b16 %v2959
        %v3002 = vunpack.c.l.b16 %v2960
        %v3003 = vunpack.c.l.b16 %v2961
        %v3004 = vunpack.c.l.b16 %v2962
        %v3005 = vunpack.c.l.b16 %v2963
        %v3006 = vunpack.c.l.b16 %v2964
        %v3007 = vunpack.c.l.b16 %v2965
        %v3008 = vpack.c.b16 %v2993, %v2992
        %v3009 = vpack.c.b16 %v2995, %v2994
        %v3010 = vpack.c.b16 %v2997, %v2996
        %v3011 = vpack.c.b16 %v2999, %v2998
        %v3012 = vpack.c.b16 %v3001, %v3000
        %v3013 = vpack.c.b16 %v3003, %v3002
        %v3014 = vpack.c.b16 %v3005, %v3004
        %v3015 = vpack.c.b16 %v3007, %v3006
        %3024 = vmatprep.subr.bf16.mxu0 0
        %3025 = vmatpush1.bf16.msra.mxu0 %v3008
        %3026 = vmatprep.subr.bf16.mxu0 0
        %3027 = vmatpush1.bf16.msra.mxu0 %v3009
        %3028 = vmatprep.subr.bf16.mxu0 0
        %3029 = vmatpush1.bf16.msra.mxu0 %v3010
        %3030 = vmatprep.subr.bf16.mxu0 0
        %3031 = vmatpush1.bf16.msra.mxu0 %v3011
        %3032 = vmatprep.subr.bf16.mxu0 0
        %3033 = vmatpush1.bf16.msra.mxu0 %v3012
        %3034 = vmatprep.subr.bf16.mxu0 0
        %3035 = vmatpush1.bf16.msra.mxu0 %v3013
        %3036 = vmatprep.subr.bf16.mxu0 0
        %3037 = vmatpush1.bf16.msra.mxu0 %v3014
        %3038 = vmatprep.subr.bf16.mxu0 0
        %3039 = vmatpush1.bf16.msra.mxu0 %v3015
        %3040 = vmatprep.subr.bf16.mxu0 0
        %3041 = vmatpush1.bf16.msra.mxu0 0
        %3042 = vmatprep.subr.bf16.mxu0 0
        %3043 = vmatpush1.bf16.msra.mxu0 0
        %3044 = vmatprep.subr.bf16.mxu0 0
        %3045 = vmatpush1.bf16.msra.mxu0 0
        %3046 = vmatprep.subr.bf16.mxu0 0
        %3047 = vmatpush1.bf16.msra.mxu0 0
        %3048 = vmatprep.subr.bf16.mxu0 0
        %3049 = vmatpush1.bf16.msra.mxu0 0
        %3050 = vmatprep.subr.bf16.mxu0 0
        %3051 = vmatpush1.bf16.msra.mxu0 0
        %3052 = vmatprep.subr.bf16.mxu0 0
        %3053 = vmatpush1.bf16.msra.mxu0 0
        %3054 = vmatprep.subr.bf16.mxu0 0
        %3055 = vmatpush1.bf16.msra.mxu0 0
        %3056 = vmatprep.mubr.bf16.mxu0 0
        %3057 = vmatmul.mubr.bf16.gmra.mrb[0].mxu0 %v2968
        %v3058 = vpop.f32.mrb[0].mxu0
        %v3059 = vadd.f32 0.0, %v3058
        %v3060 = vpop.f32.mrb[0].mxu0
        %v3061 = vpop.f32.mrb[0].mxu0
        %v3062 = vadd.f32 0.0, %v3061
        %v3063 = vpop.f32.mrb[0].mxu0
        %3064 = vmatprep.mubr.bf16.mxu0 0
        %3065 = vmatmul.mubr.bf16.gmra.mrb[0].mxu0 %v2969
        %v3066 = vpop.f32.mrb[0].mxu0
        %v3067 = vadd.f32 0.0, %v3066
        %v3068 = vpop.f32.mrb[0].mxu0
        %v3069 = vpop.f32.mrb[0].mxu0
        %v3070 = vadd.f32 0.0, %v3069
        %v3071 = vpop.f32.mrb[0].mxu0
        %3072 = vmatprep.mubr.bf16.mxu0 0
        %3073 = vmatmul.mubr.bf16.gmra.mrb[0].mxu0 %v2970
        %v3074 = vpop.f32.mrb[0].mxu0
        %v3075 = vadd.f32 0.0, %v3074
        %v3076 = vpop.f32.mrb[0].mxu0
        %v3077 = vpop.f32.mrb[0].mxu0
        %v3078 = vadd.f32 0.0, %v3077
        %v3079 = vpop.f32.mrb[0].mxu0
        %3080 = vmatprep.mubr.bf16.mxu0 0
        %3081 = vmatmul.mubr.bf16.gmra.mrb[0].mxu0 %v2971
        %v3082 = vpop.f32.mrb[0].mxu0
        %v3083 = vadd.f32 0.0, %v3082
        %v3084 = vpop.f32.mrb[0].mxu0
        %v3085 = vpop.f32.mrb[0].mxu0
        %v3086 = vadd.f32 0.0, %v3085
        %v3087 = vpop.f32.mrb[0].mxu0
        %3088 = vdwg.mxu0
        %v3089 = vadd.f32 %v2941, %v3059
        %v3090 = vadd.f32 %v2942, %v3062
        %v3091 = vadd.f32 %v2943, %v3067
        %v3092 = vadd.f32 %v2944, %v3070
        %v3093 = vadd.f32 %v2945, %v3075
        %v3094 = vadd.f32 %v2946, %v3078
        %v3095 = vadd.f32 %v2947, %v3083
        %v3096 = vadd.f32 %v2948, %v3086
        %s3097 = scalar_lea.vmem %s6, 320
        %v3098 = vld [vmem:[%s3097] sm:$0xf]
        %v3099 = vld [vmem:[%s3097 + $0x4] sm:$0xf]
        %v3100 = vld [vmem:[%s3097 + $0x8] sm:$0xf]
        %v3101 = vld [vmem:[%s3097 + $0xc] sm:$0xf]
        %v3102 = vld [vmem:[%s3097 + $0x10] sm:$0xf]
        %v3103 = vld [vmem:[%s3097 + $0x14] sm:$0xf]
        %v3104 = vld [vmem:[%s3097 + $0x18] sm:$0xf]
        %v3105 = vld [vmem:[%s3097 + $0x1c] sm:$0xf]
        %v3106 = vld [vmem:[%s3097 + $0x20] sm:$0xf]
        %v3107 = vld [vmem:[%s3097 + $0x24] sm:$0xf]
        %v3108 = vld [vmem:[%s3097 + $0x28] sm:$0xf]
        %v3109 = vld [vmem:[%s3097 + $0x2c] sm:$0xf]
        %v3110 = vld [vmem:[%s3097 + $0x30] sm:$0xf]
        %v3111 = vld [vmem:[%s3097 + $0x34] sm:$0xf]
        %v3112 = vld [vmem:[%s3097 + $0x38] sm:$0xf]
        %v3113 = vld [vmem:[%s3097 + $0x3c] sm:$0xf]
        %v3114 = vunpack.c.l.b16 %v2326
        %v3115 = vpack.c.b16 %v2667, %v2666
        %v3116 = vpack.c.b16 %v2669, %v2668
        %v3117 = vpack.c.b16 %v2671, %v2670
        %v3118 = vpack.c.b16 %v3114, %v2672
        %v3139 = vunpack.c.l.b16 %v3098
        %v3140 = vunpack.c.l.b16 %v3099
        %v3141 = vunpack.c.l.b16 %v3100
        %v3142 = vunpack.c.l.b16 %v3101
        %v3143 = vunpack.c.l.b16 %v3102
        %v3144 = vunpack.c.l.b16 %v3103
        %v3145 = vunpack.c.l.b16 %v3104
        %v3146 = vunpack.c.l.b16 %v3105
        %v3147 = vunpack.c.l.b16 %v3106
        %v3148 = vunpack.c.l.b16 %v3107
        %v3149 = vunpack.c.l.b16 %v3108
        %v3150 = vunpack.c.l.b16 %v3109
        %v3151 = vunpack.c.l.b16 %v3110
        %v3152 = vunpack.c.l.b16 %v3111
        %v3153 = vunpack.c.l.b16 %v3112
        %v3154 = vunpack.c.l.b16 %v3113
        %v3155 = vpack.c.b16 %v3140, %v3139
        %v3156 = vpack.c.b16 %v3142, %v3141
        %v3157 = vpack.c.b16 %v3144, %v3143
        %v3158 = vpack.c.b16 %v3146, %v3145
        %v3159 = vpack.c.b16 %v3148, %v3147
        %v3160 = vpack.c.b16 %v3150, %v3149
        %v3161 = vpack.c.b16 %v3152, %v3151
        %v3162 = vpack.c.b16 %v3154, %v3153
        %3171 = vmatprep.subr.bf16.mxu0 0
        %3172 = vmatpush1.bf16.msra.mxu0 %v3155
        %3173 = vmatprep.subr.bf16.mxu0 0
        %3174 = vmatpush1.bf16.msra.mxu0 %v3156
        %3175 = vmatprep.subr.bf16.mxu0 0
        %3176 = vmatpush1.bf16.msra.mxu0 %v3157
        %3177 = vmatprep.subr.bf16.mxu0 0
        %3178 = vmatpush1.bf16.msra.mxu0 %v3158
        %3179 = vmatprep.subr.bf16.mxu0 0
        %3180 = vmatpush1.bf16.msra.mxu0 %v3159
        %3181 = vmatprep.subr.bf16.mxu0 0
        %3182 = vmatpush1.bf16.msra.mxu0 %v3160
        %3183 = vmatprep.subr.bf16.mxu0 0
        %3184 = vmatpush1.bf16.msra.mxu0 %v3161
        %3185 = vmatprep.subr.bf16.mxu0 0
        %3186 = vmatpush1.bf16.msra.mxu0 %v3162
        %3187 = vmatprep.subr.bf16.mxu0 0
        %3188 = vmatpush1.bf16.msra.mxu0 0
        %3189 = vmatprep.subr.bf16.mxu0 0
        %3190 = vmatpush1.bf16.msra.mxu0 0
        %3191 = vmatprep.subr.bf16.mxu0 0
        %3192 = vmatpush1.bf16.msra.mxu0 0
        %3193 = vmatprep.subr.bf16.mxu0 0
        %3194 = vmatpush1.bf16.msra.mxu0 0
        %3195 = vmatprep.subr.bf16.mxu0 0
        %3196 = vmatpush1.bf16.msra.mxu0 0
        %3197 = vmatprep.subr.bf16.mxu0 0
        %3198 = vmatpush1.bf16.msra.mxu0 0
        %3199 = vmatprep.subr.bf16.mxu0 0
        %3200 = vmatpush1.bf16.msra.mxu0 0
        %3201 = vmatprep.subr.bf16.mxu0 0
        %3202 = vmatpush1.bf16.msra.mxu0 0
        %3203 = vmatprep.mubr.bf16.mxu0 0
        %3204 = vmatmul.mubr.bf16.gmra.mrb[0].mxu0 %v3115
        %v3205 = vpop.f32.mrb[0].mxu0
        %v3206 = vadd.f32 0.0, %v3205
        %v3207 = vpop.f32.mrb[0].mxu0
        %v3208 = vpop.f32.mrb[0].mxu0
        %v3209 = vadd.f32 0.0, %v3208
        %v3210 = vpop.f32.mrb[0].mxu0
        %3211 = vmatprep.mubr.bf16.mxu0 0
        %3212 = vmatmul.mubr.bf16.gmra.mrb[0].mxu0 %v3116
        %v3213 = vpop.f32.mrb[0].mxu0
        %v3214 = vadd.f32 0.0, %v3213
        %v3215 = vpop.f32.mrb[0].mxu0
        %v3216 = vpop.f32.mrb[0].mxu0
        %v3217 = vadd.f32 0.0, %v3216
        %v3218 = vpop.f32.mrb[0].mxu0
        %3219 = vmatprep.mubr.bf16.mxu0 0
        %3220 = vmatmul.mubr.bf16.gmra.mrb[0].mxu0 %v3117
        %v3221 = vpop.f32.mrb[0].mxu0
        %v3222 = vadd.f32 0.0, %v3221
        %v3223 = vpop.f32.mrb[0].mxu0
        %v3224 = vpop.f32.mrb[0].mxu0
        %v3225 = vadd.f32 0.0, %v3224
        %v3226 = vpop.f32.mrb[0].mxu0
        %3227 = vmatprep.mubr.bf16.mxu0 0
        %3228 = vmatmul.mubr.bf16.gmra.mrb[0].mxu0 %v3118
        %v3229 = vpop.f32.mrb[0].mxu0
        %v3230 = vadd.f32 0.0, %v3229
        %v3231 = vpop.f32.mrb[0].mxu0
        %v3232 = vpop.f32.mrb[0].mxu0
        %v3233 = vadd.f32 0.0, %v3232
        %v3234 = vpop.f32.mrb[0].mxu0
        %3235 = vdwg.mxu0
        %v3236 = vadd.f32 %v3089, %v3206
        %v3237 = vadd.f32 %v3090, %v3209
        %v3238 = vadd.f32 %v3091, %v3214
        %v3239 = vadd.f32 %v3092, %v3217
        %v3240 = vadd.f32 %v3093, %v3222
        %v3241 = vadd.f32 %v3094, %v3225
        %v3242 = vadd.f32 %v3095, %v3230
        %v3243 = vadd.f32 %v3096, %v3233
        %s3244 = scalar_lea.vmem %s6, 384
        %v3245 = vld [vmem:[%s3244] sm:$0xf]
        %v3246 = vld [vmem:[%s3244 + $0x4] sm:$0xf]
        %v3247 = vld [vmem:[%s3244 + $0x8] sm:$0xf]
        %v3248 = vld [vmem:[%s3244 + $0xc] sm:$0xf]
        %v3249 = vld [vmem:[%s3244 + $0x10] sm:$0xf]
        %v3250 = vld [vmem:[%s3244 + $0x14] sm:$0xf]
        %v3251 = vld [vmem:[%s3244 + $0x18] sm:$0xf]
        %v3252 = vld [vmem:[%s3244 + $0x1c] sm:$0xf]
        %v3253 = vld [vmem:[%s3244 + $0x20] sm:$0xf]
        %v3254 = vld [vmem:[%s3244 + $0x24] sm:$0xf]
        %v3255 = vld [vmem:[%s3244 + $0x28] sm:$0xf]
        %v3256 = vld [vmem:[%s3244 + $0x2c] sm:$0xf]
        %v3257 = vld [vmem:[%s3244 + $0x30] sm:$0xf]
        %v3258 = vld [vmem:[%s3244 + $0x34] sm:$0xf]
        %v3259 = vld [vmem:[%s3244 + $0x38] sm:$0xf]
        %v3260 = vld [vmem:[%s3244 + $0x3c] sm:$0xf]
        %v3261 = vunpack.c.l.b16 %v2339
        %v3262 = vpack.c.b16 %v3261, %v2819
        %v3280 = vunpack.c.l.b16 %v3245
        %v3281 = vunpack.c.l.b16 %v3246
        %v3282 = vunpack.c.l.b16 %v3247
        %v3283 = vunpack.c.l.b16 %v3248
        %v3284 = vunpack.c.l.b16 %v3249
        %v3285 = vunpack.c.l.b16 %v3250
        %v3286 = vunpack.c.l.b16 %v3251
        %v3287 = vunpack.c.l.b16 %v3252
        %v3288 = vunpack.c.l.b16 %v3253
        %v3289 = vunpack.c.l.b16 %v3254
        %v3290 = vunpack.c.l.b16 %v3255
        %v3291 = vunpack.c.l.b16 %v3256
        %v3292 = vunpack.c.l.b16 %v3257
        %v3293 = vunpack.c.l.b16 %v3258
        %v3294 = vunpack.c.l.b16 %v3259
        %v3295 = vunpack.c.l.b16 %v3260
        %v3296 = vpack.c.b16 %v3281, %v3280
        %v3297 = vpack.c.b16 %v3283, %v3282
        %v3298 = vpack.c.b16 %v3285, %v3284
        %v3299 = vpack.c.b16 %v3287, %v3286
        %v3300 = vpack.c.b16 %v3289, %v3288
        %v3301 = vpack.c.b16 %v3291, %v3290
        %v3302 = vpack.c.b16 %v3293, %v3292
        %v3303 = vpack.c.b16 %v3295, %v3294
        %3312 = vmatprep.subr.bf16.mxu0 0
        %3313 = vmatpush1.bf16.msra.mxu0 %v3296
        %3314 = vmatprep.subr.bf16.mxu0 0
        %3315 = vmatpush1.bf16.msra.mxu0 %v3297
        %3316 = vmatprep.subr.bf16.mxu0 0
        %3317 = vmatpush1.bf16.msra.mxu0 %v3298
        %3318 = vmatprep.subr.bf16.mxu0 0
        %3319 = vmatpush1.bf16.msra.mxu0 %v3299
        %3320 = vmatprep.subr.bf16.mxu0 0
        %3321 = vmatpush1.bf16.msra.mxu0 %v3300
        %3322 = vmatprep.subr.bf16.mxu0 0
        %3323 = vmatpush1.bf16.msra.mxu0 %v3301
        %3324 = vmatprep.subr.bf16.mxu0 0
        %3325 = vmatpush1.bf16.msra.mxu0 %v3302
        %3326 = vmatprep.subr.bf16.mxu0 0
        %3327 = vmatpush1.bf16.msra.mxu0 %v3303
        %3328 = vmatprep.subr.bf16.mxu0 0
        %3329 = vmatpush1.bf16.msra.mxu0 0
        %3330 = vmatprep.subr.bf16.mxu0 0
        %3331 = vmatpush1.bf16.msra.mxu0 0
        %3332 = vmatprep.subr.bf16.mxu0 0
        %3333 = vmatpush1.bf16.msra.mxu0 0
        %3334 = vmatprep.subr.bf16.mxu0 0
        %3335 = vmatpush1.bf16.msra.mxu0 0
        %3336 = vmatprep.subr.bf16.mxu0 0
        %3337 = vmatpush1.bf16.msra.mxu0 0
        %3338 = vmatprep.subr.bf16.mxu0 0
        %3339 = vmatpush1.bf16.msra.mxu0 0
        %3340 = vmatprep.subr.bf16.mxu0 0
        %3341 = vmatpush1.bf16.msra.mxu0 0
        %3342 = vmatprep.subr.bf16.mxu0 0
        %3343 = vmatpush1.bf16.msra.mxu0 0
        %3344 = vmatprep.mubr.bf16.mxu0 0
        %3345 = vmatmul.mubr.bf16.gmra.mrb[0].mxu0 %v2528
        %v3346 = vpop.f32.mrb[0].mxu0
        %v3347 = vadd.f32 0.0, %v3346
        %v3348 = vpop.f32.mrb[0].mxu0
        %v3349 = vpop.f32.mrb[0].mxu0
        %v3350 = vadd.f32 0.0, %v3349
        %v3351 = vpop.f32.mrb[0].mxu0
        %3352 = vmatprep.mubr.bf16.mxu0 0
        %3353 = vmatmul.mubr.bf16.gmra.mrb[0].mxu0 %v2529
        %v3354 = vpop.f32.mrb[0].mxu0
        %v3355 = vadd.f32 0.0, %v3354
        %v3356 = vpop.f32.mrb[0].mxu0
        %v3357 = vpop.f32.mrb[0].mxu0
        %v3358 = vadd.f32 0.0, %v3357
        %v3359 = vpop.f32.mrb[0].mxu0
        %3360 = vmatprep.mubr.bf16.mxu0 0
        %3361 = vmatmul.mubr.bf16.gmra.mrb[0].mxu0 %v2530
        %v3362 = vpop.f32.mrb[0].mxu0
        %v3363 = vadd.f32 0.0, %v3362
        %v3364 = vpop.f32.mrb[0].mxu0
        %v3365 = vpop.f32.mrb[0].mxu0
        %v3366 = vadd.f32 0.0, %v3365
        %v3367 = vpop.f32.mrb[0].mxu0
        %3368 = vmatprep.mubr.bf16.mxu0 0
        %3369 = vmatmul.mubr.bf16.gmra.mrb[0].mxu0 %v3262
        %v3370 = vpop.f32.mrb[0].mxu0
        %v3371 = vadd.f32 0.0, %v3370
        %v3372 = vpop.f32.mrb[0].mxu0
        %v3373 = vpop.f32.mrb[0].mxu0
        %v3374 = vadd.f32 0.0, %v3373
        %v3375 = vpop.f32.mrb[0].mxu0
        %3376 = vdwg.mxu0
        %v3377 = vadd.f32 %v3236, %v3347
        %v3378 = vadd.f32 %v3237, %v3350
        %v3379 = vadd.f32 %v3238, %v3355
        %v3380 = vadd.f32 %v3239, %v3358
        %v3381 = vadd.f32 %v3240, %v3363
        %v3382 = vadd.f32 %v3241, %v3366
        %v3383 = vadd.f32 %v3242, %v3371
        %v3384 = vadd.f32 %v3243, %v3374
        %s3385 = scalar_lea.vmem %s6, 448
        %v3386 = vld [vmem:[%s3385] sm:$0xf]
        %v3387 = vld [vmem:[%s3385 + $0x4] sm:$0xf]
        %v3388 = vld [vmem:[%s3385 + $0x8] sm:$0xf]
        %v3389 = vld [vmem:[%s3385 + $0xc] sm:$0xf]
        %v3390 = vld [vmem:[%s3385 + $0x10] sm:$0xf]
        %v3391 = vld [vmem:[%s3385 + $0x14] sm:$0xf]
        %v3392 = vld [vmem:[%s3385 + $0x18] sm:$0xf]
        %v3393 = vld [vmem:[%s3385 + $0x1c] sm:$0xf]
        %v3394 = vld [vmem:[%s3385 + $0x20] sm:$0xf]
        %v3395 = vld [vmem:[%s3385 + $0x24] sm:$0xf]
        %v3396 = vld [vmem:[%s3385 + $0x28] sm:$0xf]
        %v3397 = vld [vmem:[%s3385 + $0x2c] sm:$0xf]
        %v3398 = vld [vmem:[%s3385 + $0x30] sm:$0xf]
        %v3399 = vld [vmem:[%s3385 + $0x34] sm:$0xf]
        %v3400 = vld [vmem:[%s3385 + $0x38] sm:$0xf]
        %v3401 = vld [vmem:[%s3385 + $0x3c] sm:$0xf]
        %v3403 = vunpack.c.l.b16 %v2124
        %v3404 = vpack.c.b16 %v3403, %v2967
        %v3422 = vunpack.c.l.b16 %v3386
        %v3423 = vunpack.c.l.b16 %v3387
        %v3424 = vunpack.c.l.b16 %v3388
        %v3425 = vunpack.c.l.b16 %v3389
        %v3426 = vunpack.c.l.b16 %v3390
        %v3427 = vunpack.c.l.b16 %v3391
        %v3428 = vunpack.c.l.b16 %v3392
        %v3429 = vunpack.c.l.b16 %v3393
        %v3430 = vunpack.c.l.b16 %v3394
        %v3431 = vunpack.c.l.b16 %v3395
        %v3432 = vunpack.c.l.b16 %v3396
        %v3433 = vunpack.c.l.b16 %v3397
        %v3434 = vunpack.c.l.b16 %v3398
        %v3435 = vunpack.c.l.b16 %v3399
        %v3436 = vunpack.c.l.b16 %v3400
        %v3437 = vunpack.c.l.b16 %v3401
        %v3438 = vpack.c.b16 %v3423, %v3422
        %v3439 = vpack.c.b16 %v3425, %v3424
        %v3440 = vpack.c.b16 %v3427, %v3426
        %v3441 = vpack.c.b16 %v3429, %v3428
        %v3442 = vpack.c.b16 %v3431, %v3430
        %v3443 = vpack.c.b16 %v3433, %v3432
        %v3444 = vpack.c.b16 %v3435, %v3434
        %v3445 = vpack.c.b16 %v3437, %v3436
        %3454 = vmatprep.subr.bf16.mxu0 0
        %3455 = vmatpush1.bf16.msra.mxu0 %v3438
        %3456 = vmatprep.subr.bf16.mxu0 0
        %3457 = vmatpush1.bf16.msra.mxu0 %v3439
        %3458 = vmatprep.subr.bf16.mxu0 0
        %3459 = vmatpush1.bf16.msra.mxu0 %v3440
        %3460 = vmatprep.subr.bf16.mxu0 0
        %3461 = vmatpush1.bf16.msra.mxu0 %v3441
        %3462 = vmatprep.subr.bf16.mxu0 0
        %3463 = vmatpush1.bf16.msra.mxu0 %v3442
        %3464 = vmatprep.subr.bf16.mxu0 0
        %3465 = vmatpush1.bf16.msra.mxu0 %v3443
        %3466 = vmatprep.subr.bf16.mxu0 0
        %3467 = vmatpush1.bf16.msra.mxu0 %v3444
        %3468 = vmatprep.subr.bf16.mxu0 0
        %3469 = vmatpush1.bf16.msra.mxu0 %v3445
        %3470 = vmatprep.subr.bf16.mxu0 0
        %3471 = vmatpush1.bf16.msra.mxu0 0
        %3472 = vmatprep.subr.bf16.mxu0 0
        %3473 = vmatpush1.bf16.msra.mxu0 0
        %3474 = vmatprep.subr.bf16.mxu0 0
        %3475 = vmatpush1.bf16.msra.mxu0 0
        %3476 = vmatprep.subr.bf16.mxu0 0
        %3477 = vmatpush1.bf16.msra.mxu0 0
        %3478 = vmatprep.subr.bf16.mxu0 0
        %3479 = vmatpush1.bf16.msra.mxu0 0
        %3480 = vmatprep.subr.bf16.mxu0 0
        %3481 = vmatpush1.bf16.msra.mxu0 0
        %3482 = vmatprep.subr.bf16.mxu0 0
        %3483 = vmatpush1.bf16.msra.mxu0 0
        %3484 = vmatprep.subr.bf16.mxu0 0
        %3485 = vmatpush1.bf16.msra.mxu0 0
        %3486 = vmatprep.mubr.bf16.mxu0 0
        %3487 = vmatmul.mubr.bf16.gmra.mrb[0].mxu0 %v2399
        %v3488 = vpop.f32.mrb[0].mxu0
        %v3489 = vadd.f32 0.0, %v3488
        %v3490 = vpop.f32.mrb[0].mxu0
        %v3491 = vpop.f32.mrb[0].mxu0
        %v3492 = vadd.f32 0.0, %v3491
        %v3493 = vpop.f32.mrb[0].mxu0
        %3494 = vmatprep.mubr.bf16.mxu0 0
        %3495 = vmatmul.mubr.bf16.gmra.mrb[0].mxu0 %v2400
        %v3496 = vpop.f32.mrb[0].mxu0
        %v3497 = vadd.f32 0.0, %v3496
        %v3498 = vpop.f32.mrb[0].mxu0
        %v3499 = vpop.f32.mrb[0].mxu0
        %v3500 = vadd.f32 0.0, %v3499
        %v3501 = vpop.f32.mrb[0].mxu0
        %3502 = vmatprep.mubr.bf16.mxu0 0
        %3503 = vmatmul.mubr.bf16.gmra.mrb[0].mxu0 %v2401
        %v3504 = vpop.f32.mrb[0].mxu0
        %v3505 = vadd.f32 0.0, %v3504
        %v3506 = vpop.f32.mrb[0].mxu0
        %v3507 = vpop.f32.mrb[0].mxu0
        %v3508 = vadd.f32 0.0, %v3507
        %v3509 = vpop.f32.mrb[0].mxu0
        %3510 = vmatprep.mubr.bf16.mxu0 0
        %3511 = vmatmul.mubr.bf16.gmra.mrb[0].mxu0 %v3404
        %v3512 = vpop.f32.mrb[0].mxu0
        %v3513 = vadd.f32 0.0, %v3512
        %v3514 = vpop.f32.mrb[0].mxu0
        %v3515 = vpop.f32.mrb[0].mxu0
        %v3516 = vadd.f32 0.0, %v3515
        %v3517 = vpop.f32.mrb[0].mxu0
        %3518 = vdwg.mxu0
        %v3519 = vadd.f32 %v3377, %v3489
        %v3520 = vadd.f32 %v3378, %v3492
        %v3521 = vadd.f32 %v3379, %v3497
        %v3522 = vadd.f32 %v3380, %v3500
        %v3523 = vadd.f32 %v3381, %v3505
        %v3524 = vadd.f32 %v3382, %v3508
        %v3525 = vadd.f32 %v3383, %v3513
        %v3526 = vadd.f32 %v3384, %v3516
        %s3527 = scalar_lea.vmem %s6, 512
        %v3528 = vld [vmem:[%s3527] sm:$0xf]
        %v3529 = vld [vmem:[%s3527 + $0x4] sm:$0xf]
        %v3530 = vld [vmem:[%s3527 + $0x8] sm:$0xf]
        %v3531 = vld [vmem:[%s3527 + $0xc] sm:$0xf]
        %v3532 = vld [vmem:[%s3527 + $0x10] sm:$0xf]
        %v3533 = vld [vmem:[%s3527 + $0x14] sm:$0xf]
        %v3534 = vld [vmem:[%s3527 + $0x18] sm:$0xf]
        %v3535 = vld [vmem:[%s3527 + $0x1c] sm:$0xf]
        %v3536 = vld [vmem:[%s3527 + $0x20] sm:$0xf]
        %v3537 = vld [vmem:[%s3527 + $0x24] sm:$0xf]
        %v3538 = vld [vmem:[%s3527 + $0x28] sm:$0xf]
        %v3539 = vld [vmem:[%s3527 + $0x2c] sm:$0xf]
        %v3540 = vld [vmem:[%s3527 + $0x30] sm:$0xf]
        %v3541 = vld [vmem:[%s3527 + $0x34] sm:$0xf]
        %v3542 = vld [vmem:[%s3527 + $0x38] sm:$0xf]
        %v3543 = vld [vmem:[%s3527 + $0x3c] sm:$0xf]
        %v3544 = vunpack.c.l.b16 %v2348
        %v3545 = vpack.c.b16 %v3544, %v3114
        %v3563 = vunpack.c.l.b16 %v3528
        %v3564 = vunpack.c.l.b16 %v3529
        %v3565 = vunpack.c.l.b16 %v3530
        %v3566 = vunpack.c.l.b16 %v3531
        %v3567 = vunpack.c.l.b16 %v3532
        %v3568 = vunpack.c.l.b16 %v3533
        %v3569 = vunpack.c.l.b16 %v3534
        %v3570 = vunpack.c.l.b16 %v3535
        %v3571 = vunpack.c.l.b16 %v3536
        %v3572 = vunpack.c.l.b16 %v3537
        %v3573 = vunpack.c.l.b16 %v3538
        %v3574 = vunpack.c.l.b16 %v3539
        %v3575 = vunpack.c.l.b16 %v3540
        %v3576 = vunpack.c.l.b16 %v3541
        %v3577 = vunpack.c.l.b16 %v3542
        %v3578 = vunpack.c.l.b16 %v3543
        %v3579 = vpack.c.b16 %v3564, %v3563
        %v3580 = vpack.c.b16 %v3566, %v3565
        %v3581 = vpack.c.b16 %v3568, %v3567
        %v3582 = vpack.c.b16 %v3570, %v3569
        %v3583 = vpack.c.b16 %v3572, %v3571
        %v3584 = vpack.c.b16 %v3574, %v3573
        %v3585 = vpack.c.b16 %v3576, %v3575
        %v3586 = vpack.c.b16 %v3578, %v3577
        %3595 = vmatprep.subr.bf16.mxu0 0
        %3596 = vmatpush1.bf16.msra.mxu0 %v3579
        %3597 = vmatprep.subr.bf16.mxu0 0
        %3598 = vmatpush1.bf16.msra.mxu0 %v3580
        %3599 = vmatprep.subr.bf16.mxu0 0
        %3600 = vmatpush1.bf16.msra.mxu0 %v3581
        %3601 = vmatprep.subr.bf16.mxu0 0
        %3602 = vmatpush1.bf16.msra.mxu0 %v3582
        %3603 = vmatprep.subr.bf16.mxu0 0
        %3604 = vmatpush1.bf16.msra.mxu0 %v3583
        %3605 = vmatprep.subr.bf16.mxu0 0
        %3606 = vmatpush1.bf16.msra.mxu0 %v3584
        %3607 = vmatprep.subr.bf16.mxu0 0
        %3608 = vmatpush1.bf16.msra.mxu0 %v3585
        %3609 = vmatprep.subr.bf16.mxu0 0
        %3610 = vmatpush1.bf16.msra.mxu0 %v3586
        %3611 = vmatprep.subr.bf16.mxu0 0
        %3612 = vmatpush1.bf16.msra.mxu0 0
        %3613 = vmatprep.subr.bf16.mxu0 0
        %3614 = vmatpush1.bf16.msra.mxu0 0
        %3615 = vmatprep.subr.bf16.mxu0 0
        %3616 = vmatpush1.bf16.msra.mxu0 0
        %3617 = vmatprep.subr.bf16.mxu0 0
        %3618 = vmatpush1.bf16.msra.mxu0 0
        %3619 = vmatprep.subr.bf16.mxu0 0
        %3620 = vmatpush1.bf16.msra.mxu0 0
        %3621 = vmatprep.subr.bf16.mxu0 0
        %3622 = vmatpush1.bf16.msra.mxu0 0
        %3623 = vmatprep.subr.bf16.mxu0 0
        %3624 = vmatpush1.bf16.msra.mxu0 0
        %3625 = vmatprep.subr.bf16.mxu0 0
        %3626 = vmatpush1.bf16.msra.mxu0 0
        %3627 = vmatprep.mubr.bf16.mxu0 0
        %3628 = vmatmul.mubr.bf16.gmra.mrb[0].mxu0 %v2674
        %v3629 = vpop.f32.mrb[0].mxu0
        %v3630 = vadd.f32 0.0, %v3629
        %v3631 = vpop.f32.mrb[0].mxu0
        %v3632 = vpop.f32.mrb[0].mxu0
        %v3633 = vadd.f32 0.0, %v3632
        %v3634 = vpop.f32.mrb[0].mxu0
        %3635 = vmatprep.mubr.bf16.mxu0 0
        %3636 = vmatmul.mubr.bf16.gmra.mrb[0].mxu0 %v2675
        %v3637 = vpop.f32.mrb[0].mxu0
        %v3638 = vadd.f32 0.0, %v3637
        %v3639 = vpop.f32.mrb[0].mxu0
        %v3640 = vpop.f32.mrb[0].mxu0
        %v3641 = vadd.f32 0.0, %v3640
        %v3642 = vpop.f32.mrb[0].mxu0
        %3643 = vmatprep.mubr.bf16.mxu0 0
        %3644 = vmatmul.mubr.bf16.gmra.mrb[0].mxu0 %v2676
        %v3645 = vpop.f32.mrb[0].mxu0
        %v3646 = vadd.f32 0.0, %v3645
        %v3647 = vpop.f32.mrb[0].mxu0
        %v3648 = vpop.f32.mrb[0].mxu0
        %v3649 = vadd.f32 0.0, %v3648
        %v3650 = vpop.f32.mrb[0].mxu0
        %3651 = vmatprep.mubr.bf16.mxu0 0
        %3652 = vmatmul.mubr.bf16.gmra.mrb[0].mxu0 %v3545
        %v3653 = vpop.f32.mrb[0].mxu0
        %v3654 = vadd.f32 0.0, %v3653
        %v3655 = vpop.f32.mrb[0].mxu0
        %v3656 = vpop.f32.mrb[0].mxu0
        %v3657 = vadd.f32 0.0, %v3656
        %v3658 = vpop.f32.mrb[0].mxu0
        %3659 = vdwg.mxu0
        %v3660 = vadd.f32 %v3519, %v3630
        %v3661 = vadd.f32 %v3520, %v3633
        %v3662 = vadd.f32 %v3521, %v3638
        %v3663 = vadd.f32 %v3522, %v3641
        %v3664 = vadd.f32 %v3523, %v3646
        %v3665 = vadd.f32 %v3524, %v3649
        %v3666 = vadd.f32 %v3525, %v3654
        %v3667 = vadd.f32 %v3526, %v3657
        %v3668 = vld [vmem:[%s7] sm:$0x1]
        %v3670 = vlaneseq
        %v3671 = vshrl.u32 %v3670, 7
        %v3672 = vsub.s32 0, %v3671
        %v3673 = vrot.slane %v3668, %v3672
        %v3675 = vadd.f32 %v3660, %v3673
        %v3676 = vadd.f32 %v3661, %v3673
        %v3677 = vadd.f32 %v3662, %v3673
        %v3678 = vadd.f32 %v3663, %v3673
        %v3679 = vadd.f32 %v3664, %v3673
        %v3680 = vadd.f32 %v3665, %v3673
        %v3681 = vadd.f32 %v3666, %v3673
        %v3682 = vadd.f32 %v3667, %v3673
        %v3683 = vadd.f32 %v3675, %v1979
        %v3684 = vadd.f32 %v3676, %v1982
        %v3685 = vadd.f32 %v3677, %v1987
        %v3686 = vadd.f32 %v3678, %v1990
        %v3687 = vadd.f32 %v3679, %v1995
        %v3688 = vadd.f32 %v3680, %v1998
        %v3689 = vadd.f32 %v3681, %v2003
        %v3690 = vadd.f32 %v3682, %v2006
        %v3691 = vmax.f32 %v3683, 0.0
        %v3692 = vmax.f32 %v3684, 0.0
        %v3693 = vmax.f32 %v3685, 0.0
        %v3694 = vmax.f32 %v3686, 0.0
        %v3695 = vmax.f32 %v3687, 0.0
        %v3696 = vmax.f32 %v3688, 0.0
        %v3697 = vmax.f32 %v3689, 0.0
        %v3698 = vmax.f32 %v3690, 0.0
        %v3699 = vpack.c.bf16 %v3692, %v3691
        %v3700 = vpack.c.bf16 %v3694, %v3693
        %v3701 = vpack.c.bf16 %v3696, %v3695
        %v3702 = vpack.c.bf16 %v3698, %v3697
        %v3707 = vunpack.c.l.b16 %v3699
        %v3708 = vunpack.c.h.b16 %v3699
        %v3709 = vunpack.c.l.b16 %v3700
        %v3710 = vunpack.c.h.b16 %v3700
        %v3711 = vunpack.c.l.b16 %v3701
        %v3712 = vunpack.c.h.b16 %v3701
        %v3713 = vunpack.c.l.b16 %v3702
        %v3714 = vunpack.c.h.b16 %v3702
        %v3715 = vpack.c.b16 %v3707, %v3707
        %v3716 = vpack.c.b16 %v3708, %v3708
        %v3717 = vpack.c.b16 %v3709, %v3709
        %v3718 = vpack.c.b16 %v3710, %v3710
        %v3719 = vpack.c.b16 %v3711, %v3711
        %v3720 = vpack.c.b16 %v3712, %v3712
        %v3721 = vpack.c.b16 %v3713, %v3713
        %v3722 = vpack.c.b16 %v3714, %v3714
        %3731 = vst [vmem:[%s397] sm:$0xf] %v3715
        %3732 = vst [vmem:[%s397 + $0x4] sm:$0xf] %v3716
        %3733 = vst [vmem:[%s397 + $0x8] sm:$0xf] %v3717
        %3734 = vst [vmem:[%s397 + $0xc] sm:$0xf] %v3718
        %3735 = vst [vmem:[%s397 + $0x10] sm:$0xf] %v3719
        %3736 = vst [vmem:[%s397 + $0x14] sm:$0xf] %v3720
        %3737 = vst [vmem:[%s397 + $0x18] sm:$0xf] %v3721
        %3738 = vst [vmem:[%s397 + $0x1c] sm:$0xf] %v3722
        %s3739 = sand.u32 %s262, 1
        %s3740 = scalar_lea.sflag [#allocation4], %s3739
        %s3741 = sand.u32 %s262, 1
        %s3742 = smul.addr %s3741, 32
        %s3743 = scalar_lea.vmem [#allocation3], %s3742
        // Predicated region
        $region61: #{basic_block_pallas.1} parent=59 // pred_check
          %p3744 = pneg %p272
        $region62: #{basic_block_pallas.1} parent=59 // pred_check_branch
          %3746 = sbr.rel (%p3744) target = $region64
        $region63: #{basic_block_pallas.1} parent=59 // pred_region
          %s3748 = ssub.s32 512, 512
          %3749 = vsyncadd %s3740, %s3748
          %s3750 = smul.addr %s24, 8
          %s3751 = smul.addr %s3750, 64
          %s3752 = scalar_lea.hbm %s10, %s3751
          %s3753 = sshll.u32 %s3743, 4
          %s3754 = int_to_ptr.vmem [resolvable:$true] %s3753
          %3759 = dma.vmem_to_hbm [thread:$0]  %s3754, 512, %s3752, %s3740, 64, 64, 4
        $region64: #{basic_block_pallas.1} parent=59 // pred_fallthru
          _
      $region60: #{basic_block_pallas.1} parent=5 // pred_fallthru
        _
      %p3760 = scmp.le.s32.totalorder 2, %s19
      // Predicated region
      $region65: #{basic_block_pallas.1} parent=5 // pred_check
        %p3761 = pneg %p3760
      $region66: #{basic_block_pallas.1} parent=5 // pred_check_branch
        %3763 = sbr.rel (%p3761) target = $region68
      $region67: #{basic_block_pallas.1} parent=5 // pred_region
        %s3764 = ssub.s32 %s19, 2
        // Predicated region
        $region69: #{basic_block_pallas.1} parent=67 // pred_check
          %p3765 = pneg %p278
        $region70: #{basic_block_pallas.1} parent=67 // pred_check_branch
          %3767 = sbr.rel (%p3765) target = $region72
        $region71: #{basic_block_pallas.1} parent=67 // pred_region
          %s3768 = sand.u32 %s263, 1
          %s3769 = scalar_lea.sflag [#allocation4], %s3768
          %s3770 = sand.u32 %s263, 1
          %s3771 = smul.addr %s3770, 32
          %s3772 = scalar_lea.vmem [#allocation3], %s3771
          %3773 = dma.done %s3769, 512
        $region72: #{basic_block_pallas.1} parent=67 // pred_fallthru
          _
      $region68: #{basic_block_pallas.1} parent=5 // pred_fallthru
        _
    $region6: #{basic_block_pallas.1} parent=1 // loop_footer
      %s23 = sadd.s32 1, %s19
    $region7: #{basic_block_pallas.1} parent=1 // loop_footer_branch
      %18 = sbr.rel target = $region3
    $region8: #{basic_block_pallas.1} parent=1 // loop_exit
      _
    %3774 = vsyncpa [#allocation4], 1
    %s3775 = scalar_lea.sflag [#allocation4], 1
    %3776 = vsyncpa %s3775, 1

</llo_original>
